<compile_context>
chip_gen: v7x
topology: tpu7x:2x2x1
jax: 0.10.0
libtpu: 0.0.40
codegen_flags: <defaults>
</compile_context>

<pallas_src>
import functools

import jax
import jax.numpy as jnp
from jax.experimental import pallas as pl
from jax.experimental.pallas import tpu as pltpu


# ---------------------------------------------------------------------------
# Fused kernel: xyz MLP  ->  per-fine-point folding conv head  ->  packed slab
# ---------------------------------------------------------------------------
def _foldingnet_kernel(x_ref,
                       w0_ref, b0_ref, w1_ref, b1_ref, w2_ref, b2_ref,
                       cw1x_ref, cw1p_ref, cb1s_ref,
                       cw2_ref, cb2_ref, cw3_ref, cb3_ref,
                       out_ref, *, num_coarse, grid_sq):
    num_fine = num_coarse * grid_sq

    x = x_ref[...]                                           # (tile, d_model)

    # Load weights once (reused across the unrolled fine-point loop).
    w0, b0 = w0_ref[...], b0_ref[...]
    w1, b1 = w1_ref[...], b1_ref[...]
    w2, b2 = w2_ref[...], b2_ref[...]
    cw1x, cw1p = cw1x_ref[...], cw1p_ref[...]
    cb1s = cb1s_ref[...]                                     # (num_fine, d_ff)
    cw2, cb2 = cw2_ref[...], cb2_ref[...]
    cw3, cb3 = cw3_ref[...], cb3_ref[...]

    # ---- xyz MLP: Linear -> ReLU -> Linear -> ReLU -> Linear ----------------
    h = jnp.dot(x, w0, preferred_element_type=jnp.float32) + b0
    h = jnp.maximum(h, 0.0)
    h = jnp.dot(h, w1, preferred_element_type=jnp.float32) + b1
    h = jnp.maximum(h, 0.0)
    coarse = jnp.dot(h, w2, preferred_element_type=jnp.float32) + b2
    # coarse: (tile, 3*num_coarse), layout [x0 y0 z0 x1 y1 z1 ...]

    # ---- conv head: layer-1 x-contribution hoisted out of the fine loop -----
    xproj = jnp.dot(x, cw1x, preferred_element_type=jnp.float32)   # (tile, d_ff)

    pieces = [coarse]
    for f in range(num_fine):            # static unroll (num_fine is small)
        c = f // grid_sq
        pts = coarse[:, 3 * c:3 * c + 3]                     # (tile, 3)
        g = xproj + jnp.dot(pts, cw1p, preferred_element_type=jnp.float32) \
            + cb1s[f:f + 1, :]                               # seed + BN folded bias
        g = jnp.maximum(g, 0.0)
        g = jnp.dot(g, cw2, preferred_element_type=jnp.float32) + cb2
        g = jnp.maximum(g, 0.0)
        fine_f = jnp.dot(g, cw3, preferred_element_type=jnp.float32) + cb3 + pts
        pieces.append(fine_f)                                # (tile, 3)

    # One lane-dense slab: [coarse | fine_0 | ... | fine_{nf-1}]  -> single wide store.
    out_ref[...] = jnp.concatenate(pieces, axis=-1)


# ---------------------------------------------------------------------------
# Wrapper
# ---------------------------------------------------------------------------
def folding_net_forward(patch_feat, params, *, grid_size, num_fine, tile_rows=8):
    (w0, b0, w1, b1, w2, b2, cw1, cb1, cw2, cb2, cw3, cb3) = params
    B, n_patches, d_model = patch_feat.shape
    g2 = grid_size ** 2
    num_coarse = num_fine // g2
    d_ff = w0.shape[1]

    # Folding seed, matching the torch construction: fine point f uses column f % g2.
    lin = jnp.linspace(-0.05, 0.05, grid_size, dtype=jnp.float32)
    a = jnp.broadcast_to(lin[None, :], (grid_size, grid_size)).reshape(-1)
    bb = jnp.broadcast_to(lin[:, None], (grid_size, grid_size)).reshape(-1)
    seed = jnp.stack([a, bb], axis=-1)                  # (g2, 2)
    seed_fine = jnp.tile(seed, (num_coarse, 1))         # (num_fine, 2)

    # Split conv-layer-1 weight; fold the constant seed channels into a per-fine bias.
    cw1_x = cw1[:d_model]                               # (d_model, d_ff)
    cw1_s = cw1[d_model:d_model + 2]                    # (2, d_ff)
    cw1_p = cw1[d_model + 2:]                           # (3, d_ff)
    cb1_seed = cb1 + seed_fine @ cw1_s                  # (num_fine, d_ff)

    x = patch_feat.reshape(B * n_patches, d_model).astype(jnp.float32)
    n_rows = x.shape[0]
    n_tiles = pl.cdiv(n_rows, tile_rows)
    n_pad = n_tiles * tile_rows
    if n_pad != n_rows:                                 # tail handling: pad, run, slice
        x = jnp.pad(x, ((0, n_pad - n_rows), (0, 0)))

    out_w = 3 * num_coarse + 3 * num_fine
    weights = (w0, b0, w1, b1, w2, b2, cw1_x, cw1_p, cb1_seed, cw2, cb2, cw3, cb3)

    def full(arr):
        nd = arr.ndim
        return pl.BlockSpec(arr.shape, lambda i: (0,) * nd)

    flops = 2 * n_pad * (d_model * d_ff + d_ff * d_ff + d_ff * 3 * num_coarse
                         + d_model * d_ff
                         + num_fine * (3 * d_ff + d_ff * d_ff + d_ff * 3))
    bytes_accessed = 4 * (x.size + n_pad * out_w + sum(w.size for w in weights))

    kernel = functools.partial(_foldingnet_kernel,
                               num_coarse=num_coarse, grid_sq=g2)

    out = pl.pallas_call(
        kernel,
        out_shape=jax.ShapeDtypeStruct((n_pad, out_w), jnp.float32),
        grid=(n_tiles,),
        in_specs=[pl.BlockSpec((tile_rows, d_model), lambda i: (i, 0))]
                 + [full(w) for w in weights],
        out_specs=pl.BlockSpec((tile_rows, out_w), lambda i: (i, 0)),
        compiler_params=pltpu.CompilerParams(dimension_semantics=("parallel",)),
        cost_estimate=pl.CostEstimate(flops=int(flops), transcendentals=0,
                                      bytes_accessed=int(bytes_accessed)),
    )(x, *weights)

    out = out[:n_rows]
    coarse = out[:, :3 * num_coarse].reshape(B, n_patches, num_coarse, 3)
    fine = out[:, 3 * num_coarse:].reshape(B, n_patches, num_fine, 3)
    return coarse, fine


# ---------------------------------------------------------------------------
# Demo / self-test
# ---------------------------------------------------------------------------
if __name__ == "__main__":
    B, n_patches = 2, 8
    d_model, d_ff = 32, 32
    grid_size = 2
    num_fine = 16
    g2 = grid_size ** 2
    num_coarse = num_fine // g2                        # 4
    N = B * n_patches                                  # 16

    key = jax.random.PRNGKey(0)
    ks = jax.random.split(key, 12)

    def lin_params(k, din, dout, scale=0.1):
        kw, kb = jax.random.split(k)
        return (scale * jax.random.normal(kw, (din, dout), jnp.float32),
                scale * jax.random.normal(kb, (1, dout), jnp.float32))

    # xyz_mlp parameters (weights stored as (in, out))
    w0, b0 = lin_params(ks[0], d_model, d_ff)
    w1, b1 = lin_params(ks[1], d_ff, d_ff)
    w2, b2 = lin_params(ks[2], d_ff, 3 * num_coarse)

    # final_conv parameters (Conv1d kernel-size 1 == channel matmul, stored (in, out))
    cw1, cb1 = lin_params(ks[3], d_model + 5, d_ff)
    cw2, cb2 = lin_params(ks[4], d_ff, d_ff)
    cw3, cb3 = lin_params(ks[5], d_ff, 3)

    # deterministic BatchNorm1d params (eval mode), folded into the preceding conv
    def bn_params(k, c):
        k1, k2, k3, k4 = jax.random.split(k, 4)
        gamma = 1.0 + 0.1 * jax.random.normal(k1, (c,), jnp.float32)
        beta = 0.1 * jax.random.normal(k2, (c,), jnp.float32)
        mean = 0.1 * jax.random.normal(k3, (c,), jnp.float32)
        var = jnp.abs(jax.random.normal(k4, (c,), jnp.float32)) + 0.5
        return gamma, beta, mean, var

    def fold_bn(w, bias, bn, eps=1e-5):
        gamma, beta, mean, var = bn
        s = gamma / jnp.sqrt(var + eps)
        return w * s[None, :], (bias - mean[None, :]) * s[None, :] + beta[None, :]

    cw1, cb1 = fold_bn(cw1, cb1, bn_params(ks[6], d_ff))
    cw2, cb2 = fold_bn(cw2, cb2, bn_params(ks[7], d_ff))

    params = (w0, b0, w1, b1, w2, b2, cw1, cb1, cw2, cb2, cw3, cb3)
    patch_feat = jax.random.normal(ks[8], (B, n_patches, d_model), jnp.float32)

    # tile_rows=8 -> 2 "parallel" grid steps for the toy shapes (fills both v7x TCs);
    # at production row counts sweep tile_rows in 512..2048.
    fwd = jax.jit(functools.partial(folding_net_forward, grid_size=grid_size,
                                    num_fine=num_fine, tile_rows=8))
    coarse_p, fine_p = fwd(patch_feat, params)
    jax.block_until_ready((coarse_p, fine_p))

    # ---- pure-JAX reference (unfused, unsplit math, mirrors the torch module) ----
    def ref_forward(patch_feat):
        x = patch_feat.reshape(N, d_model)
        h = jax.nn.relu(x @ w0 + b0)
        h = jax.nn.relu(h @ w1 + b1)
        coarse = (h @ w2 + b2).reshape(N, num_coarse, 3)
        lin_sp = jnp.linspace(-0.05, 0.05, grid_size)
        a = jnp.broadcast_to(lin_sp[None, :], (grid_size, grid_size)).reshape(-1)
        bb = jnp.broadcast_to(lin_sp[:, None], (grid_size, grid_size)).reshape(-1)
        seed_fine = jnp.tile(jnp.stack([a, bb], -1), (num_coarse, 1))
        pts = jnp.repeat(coarse, g2, axis=1)                              # (N, num_fine, 3)
        xf = jnp.broadcast_to(x[:, None, :], (N, num_fine, d_model))
        sf = jnp.broadcast_to(seed_fine[None], (N, num_fine, 2))
        feat = jnp.concatenate([xf, sf, pts], axis=-1).reshape(N * num_fine, d_model + 5)
        g = jax.nn.relu(feat @ cw1 + cb1)
        g = jax.nn.relu(g @ cw2 + cb2)
        fine = (g @ cw3 + cb3) + pts.reshape(N * num_fine, 3)
        return (coarse.reshape(B, n_patches, num_coarse, 3),
                fine.reshape(B, n_patches, num_fine, 3))

    coarse_r, fine_r = ref_forward(patch_feat)
    assert coarse_p.shape == (B, n_patches, num_coarse, 3)
    assert fine_p.shape == (B, n_patches, num_fine, 3)
    assert jnp.allclose(coarse_p, coarse_r, rtol=5e-3, atol=5e-3), \
        float(jnp.max(jnp.abs(coarse_p - coarse_r)))
    assert jnp.allclose(fine_p, fine_r, rtol=5e-3, atol=5e-3), \
        float(jnp.max(jnp.abs(fine_p - fine_r)))

    print("KERNEL_OK")
</pallas_src>

<mosaic_0001>
module attributes {stable_mosaic.version = 11 : i64} {
  func.func @_foldingnet_kernel(%arg0: i32, %arg1: memref<8x32xf32, #tpu.memory_space<vmem>>, %arg2: memref<32x32xf32, #tpu.memory_space<vmem>>, %arg3: memref<1x32xf32, #tpu.memory_space<vmem>>, %arg4: memref<32x32xf32, #tpu.memory_space<vmem>>, %arg5: memref<1x32xf32, #tpu.memory_space<vmem>>, %arg6: memref<32x12xf32, #tpu.memory_space<vmem>>, %arg7: memref<1x12xf32, #tpu.memory_space<vmem>>, %arg8: memref<32x32xf32, #tpu.memory_space<vmem>>, %arg9: memref<3x32xf32, #tpu.memory_space<vmem>>, %arg10: memref<16x32xf32, #tpu.memory_space<vmem>>, %arg11: memref<32x32xf32, #tpu.memory_space<vmem>>, %arg12: memref<1x32xf32, #tpu.memory_space<vmem>>, %arg13: memref<32x3xf32, #tpu.memory_space<vmem>>, %arg14: memref<1x3xf32, #tpu.memory_space<vmem>>, %arg15: memref<8x60xf32, #tpu.memory_space<vmem>>) attributes {dimension_semantics = [#tpu.dimension_semantics<parallel>], iteration_bounds = array<i64: 2>, scalar_prefetch = 0 : i64, scratch_operands = 0 : i64, tpu.core_type = #tpu.core_type<tc>, window_params = [{transform_indices = @transform_0, window_bounds = array<i64: 8, 32>}, {pipeline_mode = #tpu.pipeline_mode<synchronous>, transform_indices = @transform_1, window_bounds = array<i64: 32, 32>}, {pipeline_mode = #tpu.pipeline_mode<synchronous>, transform_indices = @transform_2, window_bounds = array<i64: 1, 32>}, {pipeline_mode = #tpu.pipeline_mode<synchronous>, transform_indices = @transform_3, window_bounds = array<i64: 32, 32>}, {pipeline_mode = #tpu.pipeline_mode<synchronous>, transform_indices = @transform_4, window_bounds = array<i64: 1, 32>}, {pipeline_mode = #tpu.pipeline_mode<synchronous>, transform_indices = @transform_5, window_bounds = array<i64: 32, 12>}, {pipeline_mode = #tpu.pipeline_mode<synchronous>, transform_indices = @transform_6, window_bounds = array<i64: 1, 12>}, {pipeline_mode = #tpu.pipeline_mode<synchronous>, transform_indices = @transform_7, window_bounds = array<i64: 32, 32>}, {pipeline_mode = #tpu.pipeline_mode<synchronous>, transform_indices = @transform_8, window_bounds = array<i64: 3, 32>}, {pipeline_mode = #tpu.pipeline_mode<synchronous>, transform_indices = @transform_9, window_bounds = array<i64: 16, 32>}, {pipeline_mode = #tpu.pipeline_mode<synchronous>, transform_indices = @transform_10, window_bounds = array<i64: 32, 32>}, {pipeline_mode = #tpu.pipeline_mode<synchronous>, transform_indices = @transform_11, window_bounds = array<i64: 1, 32>}, {pipeline_mode = #tpu.pipeline_mode<synchronous>, transform_indices = @transform_12, window_bounds = array<i64: 32, 3>}, {pipeline_mode = #tpu.pipeline_mode<synchronous>, transform_indices = @transform_13, window_bounds = array<i64: 1, 3>}, {transform_indices = @transform_14, window_bounds = array<i64: 8, 60>}]} {
    %c0 = arith.constant 0 : index
    %c0_0 = arith.constant 0 : index
    %0 = vector.load %arg1[%c0, %c0_0] : memref<8x32xf32, #tpu.memory_space<vmem>>, vector<8x32xf32>
    %c0_1 = arith.constant 0 : index
    %c0_2 = arith.constant 0 : index
    %1 = vector.load %arg2[%c0_1, %c0_2] : memref<32x32xf32, #tpu.memory_space<vmem>>, vector<32x32xf32>
    %c0_3 = arith.constant 0 : index
    %c0_4 = arith.constant 0 : index
    %2 = vector.load %arg3[%c0_3, %c0_4] : memref<1x32xf32, #tpu.memory_space<vmem>>, vector<1x32xf32>
    %c0_5 = arith.constant 0 : index
    %c0_6 = arith.constant 0 : index
    %3 = vector.load %arg4[%c0_5, %c0_6] : memref<32x32xf32, #tpu.memory_space<vmem>>, vector<32x32xf32>
    %c0_7 = arith.constant 0 : index
    %c0_8 = arith.constant 0 : index
    %4 = vector.load %arg5[%c0_7, %c0_8] : memref<1x32xf32, #tpu.memory_space<vmem>>, vector<1x32xf32>
    %c0_9 = arith.constant 0 : index
    %c0_10 = arith.constant 0 : index
    %5 = vector.load %arg6[%c0_9, %c0_10] : memref<32x12xf32, #tpu.memory_space<vmem>>, vector<32x12xf32>
    %c0_11 = arith.constant 0 : index
    %c0_12 = arith.constant 0 : index
    %6 = vector.load %arg7[%c0_11, %c0_12] : memref<1x12xf32, #tpu.memory_space<vmem>>, vector<1x12xf32>
    %c0_13 = arith.constant 0 : index
    %c0_14 = arith.constant 0 : index
    %7 = vector.load %arg8[%c0_13, %c0_14] : memref<32x32xf32, #tpu.memory_space<vmem>>, vector<32x32xf32>
    %c0_15 = arith.constant 0 : index
    %c0_16 = arith.constant 0 : index
    %8 = vector.load %arg9[%c0_15, %c0_16] : memref<3x32xf32, #tpu.memory_space<vmem>>, vector<3x32xf32>
    %c0_17 = arith.constant 0 : index
    %c0_18 = arith.constant 0 : index
    %9 = vector.load %arg10[%c0_17, %c0_18] : memref<16x32xf32, #tpu.memory_space<vmem>>, vector<16x32xf32>
    %c0_19 = arith.constant 0 : index
    %c0_20 = arith.constant 0 : index
    %10 = vector.load %arg11[%c0_19, %c0_20] : memref<32x32xf32, #tpu.memory_space<vmem>>, vector<32x32xf32>
    %c0_21 = arith.constant 0 : index
    %c0_22 = arith.constant 0 : index
    %11 = vector.load %arg12[%c0_21, %c0_22] : memref<1x32xf32, #tpu.memory_space<vmem>>, vector<1x32xf32>
    %c0_23 = arith.constant 0 : index
    %c0_24 = arith.constant 0 : index
    %12 = vector.load %arg13[%c0_23, %c0_24] : memref<32x3xf32, #tpu.memory_space<vmem>>, vector<32x3xf32>
    %c0_25 = arith.constant 0 : index
    %c0_26 = arith.constant 0 : index
    %13 = vector.load %arg14[%c0_25, %c0_26] : memref<1x3xf32, #tpu.memory_space<vmem>>, vector<1x3xf32>
    %cst = arith.constant dense<0.000000e+00> : vector<8x32xf32>
    %14 = tpu.matmul %0, %1, %cst {dimension_numbers = #tpu.dot_dimension_numbers<[1], [0], [0], [1], [0, 0, 1, 1], [], []>} : vector<8x32xf32>, vector<32x32xf32>, vector<8x32xf32> -> vector<8x32xf32>
    %15 = vector.broadcast %2 : vector<1x32xf32> to vector<8x32xf32>
    %16 = arith.addf %14, %15 : vector<8x32xf32>
    %cst_27 = arith.constant 0.000000e+00 : f32
    %17 = vector.broadcast %cst_27 : f32 to vector<8x32xf32>
    %18 = arith.maximumf %16, %17 : vector<8x32xf32>
    %cst_28 = arith.constant dense<0.000000e+00> : vector<8x32xf32>
    %19 = tpu.matmul %18, %3, %cst_28 {dimension_numbers = #tpu.dot_dimension_numbers<[1], [0], [0], [1], [0, 0, 1, 1], [], []>} : vector<8x32xf32>, vector<32x32xf32>, vector<8x32xf32> -> vector<8x32xf32>
    %20 = vector.broadcast %4 : vector<1x32xf32> to vector<8x32xf32>
    %21 = arith.addf %19, %20 : vector<8x32xf32>
    %cst_29 = arith.constant 0.000000e+00 : f32
    %22 = vector.broadcast %cst_29 : f32 to vector<8x32xf32>
    %23 = arith.maximumf %21, %22 : vector<8x32xf32>
    %cst_30 = arith.constant dense<0.000000e+00> : vector<8x12xf32>
    %24 = tpu.matmul %23, %5, %cst_30 {dimension_numbers = #tpu.dot_dimension_numbers<[1], [0], [0], [1], [0, 0, 1, 1], [], []>} : vector<8x32xf32>, vector<32x12xf32>, vector<8x12xf32> -> vector<8x12xf32>
    %25 = vector.broadcast %6 : vector<1x12xf32> to vector<8x12xf32>
    %26 = arith.addf %24, %25 : vector<8x12xf32>
    %cst_31 = arith.constant dense<0.000000e+00> : vector<8x32xf32>
    %27 = tpu.matmul %0, %7, %cst_31 {dimension_numbers = #tpu.dot_dimension_numbers<[1], [0], [0], [1], [0, 0, 1, 1], [], []>} : vector<8x32xf32>, vector<32x32xf32>, vector<8x32xf32> -> vector<8x32xf32>
    %28 = vector.extract_strided_slice %26 {offsets = [0, 0], sizes = [8, 3], strides = [1, 1]} : vector<8x12xf32> to vector<8x3xf32>
    %cst_32 = arith.constant dense<0.000000e+00> : vector<8x32xf32>
    %29 = tpu.matmul %28, %8, %cst_32 {dimension_numbers = #tpu.dot_dimension_numbers<[1], [0], [0], [1], [0, 0, 1, 1], [], []>} : vector<8x3xf32>, vector<3x32xf32>, vector<8x32xf32> -> vector<8x32xf32>
    %30 = arith.addf %27, %29 : vector<8x32xf32>
    %31 = vector.extract_strided_slice %9 {offsets = [0, 0], sizes = [1, 32], strides = [1, 1]} : vector<16x32xf32> to vector<1x32xf32>
    %32 = vector.broadcast %31 : vector<1x32xf32> to vector<8x32xf32>
    %33 = arith.addf %30, %32 : vector<8x32xf32>
    %cst_33 = arith.constant 0.000000e+00 : f32
    %34 = vector.broadcast %cst_33 : f32 to vector<8x32xf32>
    %35 = arith.maximumf %33, %34 : vector<8x32xf32>
    %cst_34 = arith.constant dense<0.000000e+00> : vector<8x32xf32>
    %36 = tpu.matmul %35, %10, %cst_34 {dimension_numbers = #tpu.dot_dimension_numbers<[1], [0], [0], [1], [0, 0, 1, 1], [], []>} : vector<8x32xf32>, vector<32x32xf32>, vector<8x32xf32> -> vector<8x32xf32>
    %37 = vector.broadcast %11 : vector<1x32xf32> to vector<8x32xf32>
    %38 = arith.addf %36, %37 : vector<8x32xf32>
    %cst_35 = arith.constant 0.000000e+00 : f32
    %39 = vector.broadcast %cst_35 : f32 to vector<8x32xf32>
    %40 = arith.maximumf %38, %39 : vector<8x32xf32>
    %cst_36 = arith.constant dense<0.000000e+00> : vector<8x3xf32>
    %41 = tpu.matmul %40, %12, %cst_36 {dimension_numbers = #tpu.dot_dimension_numbers<[1], [0], [0], [1], [0, 0, 1, 1], [], []>} : vector<8x32xf32>, vector<32x3xf32>, vector<8x3xf32> -> vector<8x3xf32>
    %42 = vector.broadcast %13 : vector<1x3xf32> to vector<8x3xf32>
    %43 = arith.addf %41, %42 : vector<8x3xf32>
    %44 = arith.addf %43, %28 : vector<8x3xf32>
    %45 = vector.extract_strided_slice %26 {offsets = [0, 0], sizes = [8, 3], strides = [1, 1]} : vector<8x12xf32> to vector<8x3xf32>
    %cst_37 = arith.constant dense<0.000000e+00> : vector<8x32xf32>
    %46 = tpu.matmul %45, %8, %cst_37 {dimension_numbers = #tpu.dot_dimension_numbers<[1], [0], [0], [1], [0, 0, 1, 1], [], []>} : vector<8x3xf32>, vector<3x32xf32>, vector<8x32xf32> -> vector<8x32xf32>
    %47 = arith.addf %27, %46 : vector<8x32xf32>
    %48 = vector.extract_strided_slice %9 {offsets = [1, 0], sizes = [1, 32], strides = [1, 1]} : vector<16x32xf32> to vector<1x32xf32>
    %49 = vector.broadcast %48 : vector<1x32xf32> to vector<8x32xf32>
    %50 = arith.addf %47, %49 : vector<8x32xf32>
    %cst_38 = arith.constant 0.000000e+00 : f32
    %51 = vector.broadcast %cst_38 : f32 to vector<8x32xf32>
    %52 = arith.maximumf %50, %51 : vector<8x32xf32>
    %cst_39 = arith.constant dense<0.000000e+00> : vector<8x32xf32>
    %53 = tpu.matmul %52, %10, %cst_39 {dimension_numbers = #tpu.dot_dimension_numbers<[1], [0], [0], [1], [0, 0, 1, 1], [], []>} : vector<8x32xf32>, vector<32x32xf32>, vector<8x32xf32> -> vector<8x32xf32>
    %54 = vector.broadcast %11 : vector<1x32xf32> to vector<8x32xf32>
    %55 = arith.addf %53, %54 : vector<8x32xf32>
    %cst_40 = arith.constant 0.000000e+00 : f32
    %56 = vector.broadcast %cst_40 : f32 to vector<8x32xf32>
    %57 = arith.maximumf %55, %56 : vector<8x32xf32>
    %cst_41 = arith.constant dense<0.000000e+00> : vector<8x3xf32>
    %58 = tpu.matmul %57, %12, %cst_41 {dimension_numbers = #tpu.dot_dimension_numbers<[1], [0], [0], [1], [0, 0, 1, 1], [], []>} : vector<8x32xf32>, vector<32x3xf32>, vector<8x3xf32> -> vector<8x3xf32>
    %59 = vector.broadcast %13 : vector<1x3xf32> to vector<8x3xf32>
    %60 = arith.addf %58, %59 : vector<8x3xf32>
    %61 = arith.addf %60, %45 : vector<8x3xf32>
    %62 = vector.extract_strided_slice %26 {offsets = [0, 0], sizes = [8, 3], strides = [1, 1]} : vector<8x12xf32> to vector<8x3xf32>
    %cst_42 = arith.constant dense<0.000000e+00> : vector<8x32xf32>
    %63 = tpu.matmul %62, %8, %cst_42 {dimension_numbers = #tpu.dot_dimension_numbers<[1], [0], [0], [1], [0, 0, 1, 1], [], []>} : vector<8x3xf32>, vector<3x32xf32>, vector<8x32xf32> -> vector<8x32xf32>
    %64 = arith.addf %27, %63 : vector<8x32xf32>
    %65 = vector.extract_strided_slice %9 {offsets = [2, 0], sizes = [1, 32], strides = [1, 1]} : vector<16x32xf32> to vector<1x32xf32>
    %66 = vector.broadcast %65 : vector<1x32xf32> to vector<8x32xf32>
    %67 = arith.addf %64, %66 : vector<8x32xf32>
    %cst_43 = arith.constant 0.000000e+00 : f32
    %68 = vector.broadcast %cst_43 : f32 to vector<8x32xf32>
    %69 = arith.maximumf %67, %68 : vector<8x32xf32>
    %cst_44 = arith.constant dense<0.000000e+00> : vector<8x32xf32>
    %70 = tpu.matmul %69, %10, %cst_44 {dimension_numbers = #tpu.dot_dimension_numbers<[1], [0], [0], [1], [0, 0, 1, 1], [], []>} : vector<8x32xf32>, vector<32x32xf32>, vector<8x32xf32> -> vector<8x32xf32>
    %71 = vector.broadcast %11 : vector<1x32xf32> to vector<8x32xf32>
    %72 = arith.addf %70, %71 : vector<8x32xf32>
    %cst_45 = arith.constant 0.000000e+00 : f32
    %73 = vector.broadcast %cst_45 : f32 to vector<8x32xf32>
    %74 = arith.maximumf %72, %73 : vector<8x32xf32>
    %cst_46 = arith.constant dense<0.000000e+00> : vector<8x3xf32>
    %75 = tpu.matmul %74, %12, %cst_46 {dimension_numbers = #tpu.dot_dimension_numbers<[1], [0], [0], [1], [0, 0, 1, 1], [], []>} : vector<8x32xf32>, vector<32x3xf32>, vector<8x3xf32> -> vector<8x3xf32>
    %76 = vector.broadcast %13 : vector<1x3xf32> to vector<8x3xf32>
    %77 = arith.addf %75, %76 : vector<8x3xf32>
    %78 = arith.addf %77, %62 : vector<8x3xf32>
    %79 = vector.extract_strided_slice %26 {offsets = [0, 0], sizes = [8, 3], strides = [1, 1]} : vector<8x12xf32> to vector<8x3xf32>
    %cst_47 = arith.constant dense<0.000000e+00> : vector<8x32xf32>
    %80 = tpu.matmul %79, %8, %cst_47 {dimension_numbers = #tpu.dot_dimension_numbers<[1], [0], [0], [1], [0, 0, 1, 1], [], []>} : vector<8x3xf32>, vector<3x32xf32>, vector<8x32xf32> -> vector<8x32xf32>
    %81 = arith.addf %27, %80 : vector<8x32xf32>
    %82 = vector.extract_strided_slice %9 {offsets = [3, 0], sizes = [1, 32], strides = [1, 1]} : vector<16x32xf32> to vector<1x32xf32>
    %83 = vector.broadcast %82 : vector<1x32xf32> to vector<8x32xf32>
    %84 = arith.addf %81, %83 : vector<8x32xf32>
    %cst_48 = arith.constant 0.000000e+00 : f32
    %85 = vector.broadcast %cst_48 : f32 to vector<8x32xf32>
    %86 = arith.maximumf %84, %85 : vector<8x32xf32>
    %cst_49 = arith.constant dense<0.000000e+00> : vector<8x32xf32>
    %87 = tpu.matmul %86, %10, %cst_49 {dimension_numbers = #tpu.dot_dimension_numbers<[1], [0], [0], [1], [0, 0, 1, 1], [], []>} : vector<8x32xf32>, vector<32x32xf32>, vector<8x32xf32> -> vector<8x32xf32>
    %88 = vector.broadcast %11 : vector<1x32xf32> to vector<8x32xf32>
    %89 = arith.addf %87, %88 : vector<8x32xf32>
    %cst_50 = arith.constant 0.000000e+00 : f32
    %90 = vector.broadcast %cst_50 : f32 to vector<8x32xf32>
    %91 = arith.maximumf %89, %90 : vector<8x32xf32>
    %cst_51 = arith.constant dense<0.000000e+00> : vector<8x3xf32>
    %92 = tpu.matmul %91, %12, %cst_51 {dimension_numbers = #tpu.dot_dimension_numbers<[1], [0], [0], [1], [0, 0, 1, 1], [], []>} : vector<8x32xf32>, vector<32x3xf32>, vector<8x3xf32> -> vector<8x3xf32>
    %93 = vector.broadcast %13 : vector<1x3xf32> to vector<8x3xf32>
    %94 = arith.addf %92, %93 : vector<8x3xf32>
    %95 = arith.addf %94, %79 : vector<8x3xf32>
    %96 = vector.extract_strided_slice %26 {offsets = [0, 3], sizes = [8, 3], strides = [1, 1]} : vector<8x12xf32> to vector<8x3xf32>
    %cst_52 = arith.constant dense<0.000000e+00> : vector<8x32xf32>
    %97 = tpu.matmul %96, %8, %cst_52 {dimension_numbers = #tpu.dot_dimension_numbers<[1], [0], [0], [1], [0, 0, 1, 1], [], []>} : vector<8x3xf32>, vector<3x32xf32>, vector<8x32xf32> -> vector<8x32xf32>
    %98 = arith.addf %27, %97 : vector<8x32xf32>
    %99 = vector.extract_strided_slice %9 {offsets = [4, 0], sizes = [1, 32], strides = [1, 1]} : vector<16x32xf32> to vector<1x32xf32>
    %100 = vector.broadcast %99 : vector<1x32xf32> to vector<8x32xf32>
    %101 = arith.addf %98, %100 : vector<8x32xf32>
    %cst_53 = arith.constant 0.000000e+00 : f32
    %102 = vector.broadcast %cst_53 : f32 to vector<8x32xf32>
    %103 = arith.maximumf %101, %102 : vector<8x32xf32>
    %cst_54 = arith.constant dense<0.000000e+00> : vector<8x32xf32>
    %104 = tpu.matmul %103, %10, %cst_54 {dimension_numbers = #tpu.dot_dimension_numbers<[1], [0], [0], [1], [0, 0, 1, 1], [], []>} : vector<8x32xf32>, vector<32x32xf32>, vector<8x32xf32> -> vector<8x32xf32>
    %105 = vector.broadcast %11 : vector<1x32xf32> to vector<8x32xf32>
    %106 = arith.addf %104, %105 : vector<8x32xf32>
    %cst_55 = arith.constant 0.000000e+00 : f32
    %107 = vector.broadcast %cst_55 : f32 to vector<8x32xf32>
    %108 = arith.maximumf %106, %107 : vector<8x32xf32>
    %cst_56 = arith.constant dense<0.000000e+00> : vector<8x3xf32>
    %109 = tpu.matmul %108, %12, %cst_56 {dimension_numbers = #tpu.dot_dimension_numbers<[1], [0], [0], [1], [0, 0, 1, 1], [], []>} : vector<8x32xf32>, vector<32x3xf32>, vector<8x3xf32> -> vector<8x3xf32>
    %110 = vector.broadcast %13 : vector<1x3xf32> to vector<8x3xf32>
    %111 = arith.addf %109, %110 : vector<8x3xf32>
    %112 = arith.addf %111, %96 : vector<8x3xf32>
    %113 = vector.extract_strided_slice %26 {offsets = [0, 3], sizes = [8, 3], strides = [1, 1]} : vector<8x12xf32> to vector<8x3xf32>
    %cst_57 = arith.constant dense<0.000000e+00> : vector<8x32xf32>
    %114 = tpu.matmul %113, %8, %cst_57 {dimension_numbers = #tpu.dot_dimension_numbers<[1], [0], [0], [1], [0, 0, 1, 1], [], []>} : vector<8x3xf32>, vector<3x32xf32>, vector<8x32xf32> -> vector<8x32xf32>
    %115 = arith.addf %27, %114 : vector<8x32xf32>
    %116 = vector.extract_strided_slice %9 {offsets = [5, 0], sizes = [1, 32], strides = [1, 1]} : vector<16x32xf32> to vector<1x32xf32>
    %117 = vector.broadcast %116 : vector<1x32xf32> to vector<8x32xf32>
    %118 = arith.addf %115, %117 : vector<8x32xf32>
    %cst_58 = arith.constant 0.000000e+00 : f32
    %119 = vector.broadcast %cst_58 : f32 to vector<8x32xf32>
    %120 = arith.maximumf %118, %119 : vector<8x32xf32>
    %cst_59 = arith.constant dense<0.000000e+00> : vector<8x32xf32>
    %121 = tpu.matmul %120, %10, %cst_59 {dimension_numbers = #tpu.dot_dimension_numbers<[1], [0], [0], [1], [0, 0, 1, 1], [], []>} : vector<8x32xf32>, vector<32x32xf32>, vector<8x32xf32> -> vector<8x32xf32>
    %122 = vector.broadcast %11 : vector<1x32xf32> to vector<8x32xf32>
    %123 = arith.addf %121, %122 : vector<8x32xf32>
    %cst_60 = arith.constant 0.000000e+00 : f32
    %124 = vector.broadcast %cst_60 : f32 to vector<8x32xf32>
    %125 = arith.maximumf %123, %124 : vector<8x32xf32>
    %cst_61 = arith.constant dense<0.000000e+00> : vector<8x3xf32>
    %126 = tpu.matmul %125, %12, %cst_61 {dimension_numbers = #tpu.dot_dimension_numbers<[1], [0], [0], [1], [0, 0, 1, 1], [], []>} : vector<8x32xf32>, vector<32x3xf32>, vector<8x3xf32> -> vector<8x3xf32>
    %127 = vector.broadcast %13 : vector<1x3xf32> to vector<8x3xf32>
    %128 = arith.addf %126, %127 : vector<8x3xf32>
    %129 = arith.addf %128, %113 : vector<8x3xf32>
    %130 = vector.extract_strided_slice %26 {offsets = [0, 3], sizes = [8, 3], strides = [1, 1]} : vector<8x12xf32> to vector<8x3xf32>
    %cst_62 = arith.constant dense<0.000000e+00> : vector<8x32xf32>
    %131 = tpu.matmul %130, %8, %cst_62 {dimension_numbers = #tpu.dot_dimension_numbers<[1], [0], [0], [1], [0, 0, 1, 1], [], []>} : vector<8x3xf32>, vector<3x32xf32>, vector<8x32xf32> -> vector<8x32xf32>
    %132 = arith.addf %27, %131 : vector<8x32xf32>
    %133 = vector.extract_strided_slice %9 {offsets = [6, 0], sizes = [1, 32], strides = [1, 1]} : vector<16x32xf32> to vector<1x32xf32>
    %134 = vector.broadcast %133 : vector<1x32xf32> to vector<8x32xf32>
    %135 = arith.addf %132, %134 : vector<8x32xf32>
    %cst_63 = arith.constant 0.000000e+00 : f32
    %136 = vector.broadcast %cst_63 : f32 to vector<8x32xf32>
    %137 = arith.maximumf %135, %136 : vector<8x32xf32>
    %cst_64 = arith.constant dense<0.000000e+00> : vector<8x32xf32>
    %138 = tpu.matmul %137, %10, %cst_64 {dimension_numbers = #tpu.dot_dimension_numbers<[1], [0], [0], [1], [0, 0, 1, 1], [], []>} : vector<8x32xf32>, vector<32x32xf32>, vector<8x32xf32> -> vector<8x32xf32>
    %139 = vector.broadcast %11 : vector<1x32xf32> to vector<8x32xf32>
    %140 = arith.addf %138, %139 : vector<8x32xf32>
    %cst_65 = arith.constant 0.000000e+00 : f32
    %141 = vector.broadcast %cst_65 : f32 to vector<8x32xf32>
    %142 = arith.maximumf %140, %141 : vector<8x32xf32>
    %cst_66 = arith.constant dense<0.000000e+00> : vector<8x3xf32>
    %143 = tpu.matmul %142, %12, %cst_66 {dimension_numbers = #tpu.dot_dimension_numbers<[1], [0], [0], [1], [0, 0, 1, 1], [], []>} : vector<8x32xf32>, vector<32x3xf32>, vector<8x3xf32> -> vector<8x3xf32>
    %144 = vector.broadcast %13 : vector<1x3xf32> to vector<8x3xf32>
    %145 = arith.addf %143, %144 : vector<8x3xf32>
    %146 = arith.addf %145, %130 : vector<8x3xf32>
    %147 = vector.extract_strided_slice %26 {offsets = [0, 3], sizes = [8, 3], strides = [1, 1]} : vector<8x12xf32> to vector<8x3xf32>
    %cst_67 = arith.constant dense<0.000000e+00> : vector<8x32xf32>
    %148 = tpu.matmul %147, %8, %cst_67 {dimension_numbers = #tpu.dot_dimension_numbers<[1], [0], [0], [1], [0, 0, 1, 1], [], []>} : vector<8x3xf32>, vector<3x32xf32>, vector<8x32xf32> -> vector<8x32xf32>
    %149 = arith.addf %27, %148 : vector<8x32xf32>
    %150 = vector.extract_strided_slice %9 {offsets = [7, 0], sizes = [1, 32], strides = [1, 1]} : vector<16x32xf32> to vector<1x32xf32>
    %151 = vector.broadcast %150 : vector<1x32xf32> to vector<8x32xf32>
    %152 = arith.addf %149, %151 : vector<8x32xf32>
    %cst_68 = arith.constant 0.000000e+00 : f32
    %153 = vector.broadcast %cst_68 : f32 to vector<8x32xf32>
    %154 = arith.maximumf %152, %153 : vector<8x32xf32>
    %cst_69 = arith.constant dense<0.000000e+00> : vector<8x32xf32>
    %155 = tpu.matmul %154, %10, %cst_69 {dimension_numbers = #tpu.dot_dimension_numbers<[1], [0], [0], [1], [0, 0, 1, 1], [], []>} : vector<8x32xf32>, vector<32x32xf32>, vector<8x32xf32> -> vector<8x32xf32>
    %156 = vector.broadcast %11 : vector<1x32xf32> to vector<8x32xf32>
    %157 = arith.addf %155, %156 : vector<8x32xf32>
    %cst_70 = arith.constant 0.000000e+00 : f32
    %158 = vector.broadcast %cst_70 : f32 to vector<8x32xf32>
    %159 = arith.maximumf %157, %158 : vector<8x32xf32>
    %cst_71 = arith.constant dense<0.000000e+00> : vector<8x3xf32>
    %160 = tpu.matmul %159, %12, %cst_71 {dimension_numbers = #tpu.dot_dimension_numbers<[1], [0], [0], [1], [0, 0, 1, 1], [], []>} : vector<8x32xf32>, vector<32x3xf32>, vector<8x3xf32> -> vector<8x3xf32>
    %161 = vector.broadcast %13 : vector<1x3xf32> to vector<8x3xf32>
    %162 = arith.addf %160, %161 : vector<8x3xf32>
    %163 = arith.addf %162, %147 : vector<8x3xf32>
    %164 = vector.extract_strided_slice %26 {offsets = [0, 6], sizes = [8, 3], strides = [1, 1]} : vector<8x12xf32> to vector<8x3xf32>
    %cst_72 = arith.constant dense<0.000000e+00> : vector<8x32xf32>
    %165 = tpu.matmul %164, %8, %cst_72 {dimension_numbers = #tpu.dot_dimension_numbers<[1], [0], [0], [1], [0, 0, 1, 1], [], []>} : vector<8x3xf32>, vector<3x32xf32>, vector<8x32xf32> -> vector<8x32xf32>
    %166 = arith.addf %27, %165 : vector<8x32xf32>
    %167 = vector.extract_strided_slice %9 {offsets = [8, 0], sizes = [1, 32], strides = [1, 1]} : vector<16x32xf32> to vector<1x32xf32>
    %168 = vector.broadcast %167 : vector<1x32xf32> to vector<8x32xf32>
    %169 = arith.addf %166, %168 : vector<8x32xf32>
    %cst_73 = arith.constant 0.000000e+00 : f32
    %170 = vector.broadcast %cst_73 : f32 to vector<8x32xf32>
    %171 = arith.maximumf %169, %170 : vector<8x32xf32>
    %cst_74 = arith.constant dense<0.000000e+00> : vector<8x32xf32>
    %172 = tpu.matmul %171, %10, %cst_74 {dimension_numbers = #tpu.dot_dimension_numbers<[1], [0], [0], [1], [0, 0, 1, 1], [], []>} : vector<8x32xf32>, vector<32x32xf32>, vector<8x32xf32> -> vector<8x32xf32>
    %173 = vector.broadcast %11 : vector<1x32xf32> to vector<8x32xf32>
    %174 = arith.addf %172, %173 : vector<8x32xf32>
    %cst_75 = arith.constant 0.000000e+00 : f32
    %175 = vector.broadcast %cst_75 : f32 to vector<8x32xf32>
    %176 = arith.maximumf %174, %175 : vector<8x32xf32>
    %cst_76 = arith.constant dense<0.000000e+00> : vector<8x3xf32>
    %177 = tpu.matmul %176, %12, %cst_76 {dimension_numbers = #tpu.dot_dimension_numbers<[1], [0], [0], [1], [0, 0, 1, 1], [], []>} : vector<8x32xf32>, vector<32x3xf32>, vector<8x3xf32> -> vector<8x3xf32>
    %178 = vector.broadcast %13 : vector<1x3xf32> to vector<8x3xf32>
    %179 = arith.addf %177, %178 : vector<8x3xf32>
    %180 = arith.addf %179, %164 : vector<8x3xf32>
    %181 = vector.extract_strided_slice %26 {offsets = [0, 6], sizes = [8, 3], strides = [1, 1]} : vector<8x12xf32> to vector<8x3xf32>
    %cst_77 = arith.constant dense<0.000000e+00> : vector<8x32xf32>
    %182 = tpu.matmul %181, %8, %cst_77 {dimension_numbers = #tpu.dot_dimension_numbers<[1], [0], [0], [1], [0, 0, 1, 1], [], []>} : vector<8x3xf32>, vector<3x32xf32>, vector<8x32xf32> -> vector<8x32xf32>
    %183 = arith.addf %27, %182 : vector<8x32xf32>
    %184 = vector.extract_strided_slice %9 {offsets = [9, 0], sizes = [1, 32], strides = [1, 1]} : vector<16x32xf32> to vector<1x32xf32>
    %185 = vector.broadcast %184 : vector<1x32xf32> to vector<8x32xf32>
    %186 = arith.addf %183, %185 : vector<8x32xf32>
    %cst_78 = arith.constant 0.000000e+00 : f32
    %187 = vector.broadcast %cst_78 : f32 to vector<8x32xf32>
    %188 = arith.maximumf %186, %187 : vector<8x32xf32>
    %cst_79 = arith.constant dense<0.000000e+00> : vector<8x32xf32>
    %189 = tpu.matmul %188, %10, %cst_79 {dimension_numbers = #tpu.dot_dimension_numbers<[1], [0], [0], [1], [0, 0, 1, 1], [], []>} : vector<8x32xf32>, vector<32x32xf32>, vector<8x32xf32> -> vector<8x32xf32>
    %190 = vector.broadcast %11 : vector<1x32xf32> to vector<8x32xf32>
    %191 = arith.addf %189, %190 : vector<8x32xf32>
    %cst_80 = arith.constant 0.000000e+00 : f32
    %192 = vector.broadcast %cst_80 : f32 to vector<8x32xf32>
    %193 = arith.maximumf %191, %192 : vector<8x32xf32>
    %cst_81 = arith.constant dense<0.000000e+00> : vector<8x3xf32>
    %194 = tpu.matmul %193, %12, %cst_81 {dimension_numbers = #tpu.dot_dimension_numbers<[1], [0], [0], [1], [0, 0, 1, 1], [], []>} : vector<8x32xf32>, vector<32x3xf32>, vector<8x3xf32> -> vector<8x3xf32>
    %195 = vector.broadcast %13 : vector<1x3xf32> to vector<8x3xf32>
    %196 = arith.addf %194, %195 : vector<8x3xf32>
    %197 = arith.addf %196, %181 : vector<8x3xf32>
    %198 = vector.extract_strided_slice %26 {offsets = [0, 6], sizes = [8, 3], strides = [1, 1]} : vector<8x12xf32> to vector<8x3xf32>
    %cst_82 = arith.constant dense<0.000000e+00> : vector<8x32xf32>
    %199 = tpu.matmul %198, %8, %cst_82 {dimension_numbers = #tpu.dot_dimension_numbers<[1], [0], [0], [1], [0, 0, 1, 1], [], []>} : vector<8x3xf32>, vector<3x32xf32>, vector<8x32xf32> -> vector<8x32xf32>
    %200 = arith.addf %27, %199 : vector<8x32xf32>
    %201 = vector.extract_strided_slice %9 {offsets = [10, 0], sizes = [1, 32], strides = [1, 1]} : vector<16x32xf32> to vector<1x32xf32>
    %202 = vector.broadcast %201 : vector<1x32xf32> to vector<8x32xf32>
    %203 = arith.addf %200, %202 : vector<8x32xf32>
    %cst_83 = arith.constant 0.000000e+00 : f32
    %204 = vector.broadcast %cst_83 : f32 to vector<8x32xf32>
    %205 = arith.maximumf %203, %204 : vector<8x32xf32>
    %cst_84 = arith.constant dense<0.000000e+00> : vector<8x32xf32>
    %206 = tpu.matmul %205, %10, %cst_84 {dimension_numbers = #tpu.dot_dimension_numbers<[1], [0], [0], [1], [0, 0, 1, 1], [], []>} : vector<8x32xf32>, vector<32x32xf32>, vector<8x32xf32> -> vector<8x32xf32>
    %207 = vector.broadcast %11 : vector<1x32xf32> to vector<8x32xf32>
    %208 = arith.addf %206, %207 : vector<8x32xf32>
    %cst_85 = arith.constant 0.000000e+00 : f32
    %209 = vector.broadcast %cst_85 : f32 to vector<8x32xf32>
    %210 = arith.maximumf %208, %209 : vector<8x32xf32>
    %cst_86 = arith.constant dense<0.000000e+00> : vector<8x3xf32>
    %211 = tpu.matmul %210, %12, %cst_86 {dimension_numbers = #tpu.dot_dimension_numbers<[1], [0], [0], [1], [0, 0, 1, 1], [], []>} : vector<8x32xf32>, vector<32x3xf32>, vector<8x3xf32> -> vector<8x3xf32>
    %212 = vector.broadcast %13 : vector<1x3xf32> to vector<8x3xf32>
    %213 = arith.addf %211, %212 : vector<8x3xf32>
    %214 = arith.addf %213, %198 : vector<8x3xf32>
    %215 = vector.extract_strided_slice %26 {offsets = [0, 6], sizes = [8, 3], strides = [1, 1]} : vector<8x12xf32> to vector<8x3xf32>
    %cst_87 = arith.constant dense<0.000000e+00> : vector<8x32xf32>
    %216 = tpu.matmul %215, %8, %cst_87 {dimension_numbers = #tpu.dot_dimension_numbers<[1], [0], [0], [1], [0, 0, 1, 1], [], []>} : vector<8x3xf32>, vector<3x32xf32>, vector<8x32xf32> -> vector<8x32xf32>
    %217 = arith.addf %27, %216 : vector<8x32xf32>
    %218 = vector.extract_strided_slice %9 {offsets = [11, 0], sizes = [1, 32], strides = [1, 1]} : vector<16x32xf32> to vector<1x32xf32>
    %219 = vector.broadcast %218 : vector<1x32xf32> to vector<8x32xf32>
    %220 = arith.addf %217, %219 : vector<8x32xf32>
    %cst_88 = arith.constant 0.000000e+00 : f32
    %221 = vector.broadcast %cst_88 : f32 to vector<8x32xf32>
    %222 = arith.maximumf %220, %221 : vector<8x32xf32>
    %cst_89 = arith.constant dense<0.000000e+00> : vector<8x32xf32>
    %223 = tpu.matmul %222, %10, %cst_89 {dimension_numbers = #tpu.dot_dimension_numbers<[1], [0], [0], [1], [0, 0, 1, 1], [], []>} : vector<8x32xf32>, vector<32x32xf32>, vector<8x32xf32> -> vector<8x32xf32>
    %224 = vector.broadcast %11 : vector<1x32xf32> to vector<8x32xf32>
    %225 = arith.addf %223, %224 : vector<8x32xf32>
    %cst_90 = arith.constant 0.000000e+00 : f32
    %226 = vector.broadcast %cst_90 : f32 to vector<8x32xf32>
    %227 = arith.maximumf %225, %226 : vector<8x32xf32>
    %cst_91 = arith.constant dense<0.000000e+00> : vector<8x3xf32>
    %228 = tpu.matmul %227, %12, %cst_91 {dimension_numbers = #tpu.dot_dimension_numbers<[1], [0], [0], [1], [0, 0, 1, 1], [], []>} : vector<8x32xf32>, vector<32x3xf32>, vector<8x3xf32> -> vector<8x3xf32>
    %229 = vector.broadcast %13 : vector<1x3xf32> to vector<8x3xf32>
    %230 = arith.addf %228, %229 : vector<8x3xf32>
    %231 = arith.addf %230, %215 : vector<8x3xf32>
    %232 = vector.extract_strided_slice %26 {offsets = [0, 9], sizes = [8, 3], strides = [1, 1]} : vector<8x12xf32> to vector<8x3xf32>
    %cst_92 = arith.constant dense<0.000000e+00> : vector<8x32xf32>
    %233 = tpu.matmul %232, %8, %cst_92 {dimension_numbers = #tpu.dot_dimension_numbers<[1], [0], [0], [1], [0, 0, 1, 1], [], []>} : vector<8x3xf32>, vector<3x32xf32>, vector<8x32xf32> -> vector<8x32xf32>
    %234 = arith.addf %27, %233 : vector<8x32xf32>
    %235 = vector.extract_strided_slice %9 {offsets = [12, 0], sizes = [1, 32], strides = [1, 1]} : vector<16x32xf32> to vector<1x32xf32>
    %236 = vector.broadcast %235 : vector<1x32xf32> to vector<8x32xf32>
    %237 = arith.addf %234, %236 : vector<8x32xf32>
    %cst_93 = arith.constant 0.000000e+00 : f32
    %238 = vector.broadcast %cst_93 : f32 to vector<8x32xf32>
    %239 = arith.maximumf %237, %238 : vector<8x32xf32>
    %cst_94 = arith.constant dense<0.000000e+00> : vector<8x32xf32>
    %240 = tpu.matmul %239, %10, %cst_94 {dimension_numbers = #tpu.dot_dimension_numbers<[1], [0], [0], [1], [0, 0, 1, 1], [], []>} : vector<8x32xf32>, vector<32x32xf32>, vector<8x32xf32> -> vector<8x32xf32>
    %241 = vector.broadcast %11 : vector<1x32xf32> to vector<8x32xf32>
    %242 = arith.addf %240, %241 : vector<8x32xf32>
    %cst_95 = arith.constant 0.000000e+00 : f32
    %243 = vector.broadcast %cst_95 : f32 to vector<8x32xf32>
    %244 = arith.maximumf %242, %243 : vector<8x32xf32>
    %cst_96 = arith.constant dense<0.000000e+00> : vector<8x3xf32>
    %245 = tpu.matmul %244, %12, %cst_96 {dimension_numbers = #tpu.dot_dimension_numbers<[1], [0], [0], [1], [0, 0, 1, 1], [], []>} : vector<8x32xf32>, vector<32x3xf32>, vector<8x3xf32> -> vector<8x3xf32>
    %246 = vector.broadcast %13 : vector<1x3xf32> to vector<8x3xf32>
    %247 = arith.addf %245, %246 : vector<8x3xf32>
    %248 = arith.addf %247, %232 : vector<8x3xf32>
    %249 = vector.extract_strided_slice %26 {offsets = [0, 9], sizes = [8, 3], strides = [1, 1]} : vector<8x12xf32> to vector<8x3xf32>
    %cst_97 = arith.constant dense<0.000000e+00> : vector<8x32xf32>
    %250 = tpu.matmul %249, %8, %cst_97 {dimension_numbers = #tpu.dot_dimension_numbers<[1], [0], [0], [1], [0, 0, 1, 1], [], []>} : vector<8x3xf32>, vector<3x32xf32>, vector<8x32xf32> -> vector<8x32xf32>
    %251 = arith.addf %27, %250 : vector<8x32xf32>
    %252 = vector.extract_strided_slice %9 {offsets = [13, 0], sizes = [1, 32], strides = [1, 1]} : vector<16x32xf32> to vector<1x32xf32>
    %253 = vector.broadcast %252 : vector<1x32xf32> to vector<8x32xf32>
    %254 = arith.addf %251, %253 : vector<8x32xf32>
    %cst_98 = arith.constant 0.000000e+00 : f32
    %255 = vector.broadcast %cst_98 : f32 to vector<8x32xf32>
    %256 = arith.maximumf %254, %255 : vector<8x32xf32>
    %cst_99 = arith.constant dense<0.000000e+00> : vector<8x32xf32>
    %257 = tpu.matmul %256, %10, %cst_99 {dimension_numbers = #tpu.dot_dimension_numbers<[1], [0], [0], [1], [0, 0, 1, 1], [], []>} : vector<8x32xf32>, vector<32x32xf32>, vector<8x32xf32> -> vector<8x32xf32>
    %258 = vector.broadcast %11 : vector<1x32xf32> to vector<8x32xf32>
    %259 = arith.addf %257, %258 : vector<8x32xf32>
    %cst_100 = arith.constant 0.000000e+00 : f32
    %260 = vector.broadcast %cst_100 : f32 to vector<8x32xf32>
    %261 = arith.maximumf %259, %260 : vector<8x32xf32>
    %cst_101 = arith.constant dense<0.000000e+00> : vector<8x3xf32>
    %262 = tpu.matmul %261, %12, %cst_101 {dimension_numbers = #tpu.dot_dimension_numbers<[1], [0], [0], [1], [0, 0, 1, 1], [], []>} : vector<8x32xf32>, vector<32x3xf32>, vector<8x3xf32> -> vector<8x3xf32>
    %263 = vector.broadcast %13 : vector<1x3xf32> to vector<8x3xf32>
    %264 = arith.addf %262, %263 : vector<8x3xf32>
    %265 = arith.addf %264, %249 : vector<8x3xf32>
    %266 = vector.extract_strided_slice %26 {offsets = [0, 9], sizes = [8, 3], strides = [1, 1]} : vector<8x12xf32> to vector<8x3xf32>
    %cst_102 = arith.constant dense<0.000000e+00> : vector<8x32xf32>
    %267 = tpu.matmul %266, %8, %cst_102 {dimension_numbers = #tpu.dot_dimension_numbers<[1], [0], [0], [1], [0, 0, 1, 1], [], []>} : vector<8x3xf32>, vector<3x32xf32>, vector<8x32xf32> -> vector<8x32xf32>
    %268 = arith.addf %27, %267 : vector<8x32xf32>
    %269 = vector.extract_strided_slice %9 {offsets = [14, 0], sizes = [1, 32], strides = [1, 1]} : vector<16x32xf32> to vector<1x32xf32>
    %270 = vector.broadcast %269 : vector<1x32xf32> to vector<8x32xf32>
    %271 = arith.addf %268, %270 : vector<8x32xf32>
    %cst_103 = arith.constant 0.000000e+00 : f32
    %272 = vector.broadcast %cst_103 : f32 to vector<8x32xf32>
    %273 = arith.maximumf %271, %272 : vector<8x32xf32>
    %cst_104 = arith.constant dense<0.000000e+00> : vector<8x32xf32>
    %274 = tpu.matmul %273, %10, %cst_104 {dimension_numbers = #tpu.dot_dimension_numbers<[1], [0], [0], [1], [0, 0, 1, 1], [], []>} : vector<8x32xf32>, vector<32x32xf32>, vector<8x32xf32> -> vector<8x32xf32>
    %275 = vector.broadcast %11 : vector<1x32xf32> to vector<8x32xf32>
    %276 = arith.addf %274, %275 : vector<8x32xf32>
    %cst_105 = arith.constant 0.000000e+00 : f32
    %277 = vector.broadcast %cst_105 : f32 to vector<8x32xf32>
    %278 = arith.maximumf %276, %277 : vector<8x32xf32>
    %cst_106 = arith.constant dense<0.000000e+00> : vector<8x3xf32>
    %279 = tpu.matmul %278, %12, %cst_106 {dimension_numbers = #tpu.dot_dimension_numbers<[1], [0], [0], [1], [0, 0, 1, 1], [], []>} : vector<8x32xf32>, vector<32x3xf32>, vector<8x3xf32> -> vector<8x3xf32>
    %280 = vector.broadcast %13 : vector<1x3xf32> to vector<8x3xf32>
    %281 = arith.addf %279, %280 : vector<8x3xf32>
    %282 = arith.addf %281, %266 : vector<8x3xf32>
    %283 = vector.extract_strided_slice %26 {offsets = [0, 9], sizes = [8, 3], strides = [1, 1]} : vector<8x12xf32> to vector<8x3xf32>
    %cst_107 = arith.constant dense<0.000000e+00> : vector<8x32xf32>
    %284 = tpu.matmul %283, %8, %cst_107 {dimension_numbers = #tpu.dot_dimension_numbers<[1], [0], [0], [1], [0, 0, 1, 1], [], []>} : vector<8x3xf32>, vector<3x32xf32>, vector<8x32xf32> -> vector<8x32xf32>
    %285 = arith.addf %27, %284 : vector<8x32xf32>
    %286 = vector.extract_strided_slice %9 {offsets = [15, 0], sizes = [1, 32], strides = [1, 1]} : vector<16x32xf32> to vector<1x32xf32>
    %287 = vector.broadcast %286 : vector<1x32xf32> to vector<8x32xf32>
    %288 = arith.addf %285, %287 : vector<8x32xf32>
    %cst_108 = arith.constant 0.000000e+00 : f32
    %289 = vector.broadcast %cst_108 : f32 to vector<8x32xf32>
    %290 = arith.maximumf %288, %289 : vector<8x32xf32>
    %cst_109 = arith.constant dense<0.000000e+00> : vector<8x32xf32>
    %291 = tpu.matmul %290, %10, %cst_109 {dimension_numbers = #tpu.dot_dimension_numbers<[1], [0], [0], [1], [0, 0, 1, 1], [], []>} : vector<8x32xf32>, vector<32x32xf32>, vector<8x32xf32> -> vector<8x32xf32>
    %292 = vector.broadcast %11 : vector<1x32xf32> to vector<8x32xf32>
    %293 = arith.addf %291, %292 : vector<8x32xf32>
    %cst_110 = arith.constant 0.000000e+00 : f32
    %294 = vector.broadcast %cst_110 : f32 to vector<8x32xf32>
    %295 = arith.maximumf %293, %294 : vector<8x32xf32>
    %cst_111 = arith.constant dense<0.000000e+00> : vector<8x3xf32>
    %296 = tpu.matmul %295, %12, %cst_111 {dimension_numbers = #tpu.dot_dimension_numbers<[1], [0], [0], [1], [0, 0, 1, 1], [], []>} : vector<8x32xf32>, vector<32x3xf32>, vector<8x3xf32> -> vector<8x3xf32>
    %297 = vector.broadcast %13 : vector<1x3xf32> to vector<8x3xf32>
    %298 = arith.addf %296, %297 : vector<8x3xf32>
    %299 = arith.addf %298, %283 : vector<8x3xf32>
    %300 = tpu.concatenate %26, %44, %61, %78, %95, %112, %129, %146, %163, %180, %197, %214, %231, %248, %265, %282 in 1 : vector<8x12xf32>, vector<8x3xf32>, vector<8x3xf32>, vector<8x3xf32>, vector<8x3xf32>, vector<8x3xf32>, vector<8x3xf32>, vector<8x3xf32>, vector<8x3xf32>, vector<8x3xf32>, vector<8x3xf32>, vector<8x3xf32>, vector<8x3xf32>, vector<8x3xf32>, vector<8x3xf32>, vector<8x3xf32> -> vector<8x57xf32>
    %301 = tpu.concatenate %300, %299 in 1 : vector<8x57xf32>, vector<8x3xf32> -> vector<8x60xf32>
    %c0_112 = arith.constant 0 : index
    %c0_113 = arith.constant 0 : index
    %302 = vector.load %arg15[%c0_112, %c0_113] : memref<8x60xf32, #tpu.memory_space<vmem>>, vector<8x60xf32>
    tpu.vector_store %arg15[%c0_112, %c0_113], %301 {strides = array<i32>} : memref<8x60xf32, #tpu.memory_space<vmem>>, vector<8x60xf32>,
    return
  }
  func.func @transform_0(%arg0: i32) -> (i32, i32) {
    %c0_i32 = arith.constant 0 : i32
    %c0_i32_0 = arith.constant 0 : i32
    return %arg0, %c0_i32 : i32, i32
  }
  func.func @transform_1(%arg0: i32) -> (i32, i32) {
    %c0_i32 = arith.constant 0 : i32
    %c0_i32_0 = arith.constant 0 : i32
    %c0_i32_1 = arith.constant 0 : i32
    return %c0_i32, %c0_i32_0 : i32, i32
  }
  func.func @transform_2(%arg0: i32) -> (i32, i32) {
    %c0_i32 = arith.constant 0 : i32
    %c0_i32_0 = arith.constant 0 : i32
    %c0_i32_1 = arith.constant 0 : i32
    return %c0_i32, %c0_i32_0 : i32, i32
  }
  func.func @transform_3(%arg0: i32) -> (i32, i32) {
    %c0_i32 = arith.constant 0 : i32
    %c0_i32_0 = arith.constant 0 : i32
    %c0_i32_1 = arith.constant 0 : i32
    return %c0_i32, %c0_i32_0 : i32, i32
  }
  func.func @transform_4(%arg0: i32) -> (i32, i32) {
    %c0_i32 = arith.constant 0 : i32
    %c0_i32_0 = arith.constant 0 : i32
    %c0_i32_1 = arith.constant 0 : i32
    return %c0_i32, %c0_i32_0 : i32, i32
  }
  func.func @transform_5(%arg0: i32) -> (i32, i32) {
    %c0_i32 = arith.constant 0 : i32
    %c0_i32_0 = arith.constant 0 : i32
    %c0_i32_1 = arith.constant 0 : i32
    return %c0_i32, %c0_i32_0 : i32, i32
  }
  func.func @transform_6(%arg0: i32) -> (i32, i32) {
    %c0_i32 = arith.constant 0 : i32
    %c0_i32_0 = arith.constant 0 : i32
    %c0_i32_1 = arith.constant 0 : i32
    return %c0_i32, %c0_i32_0 : i32, i32
  }
  func.func @transform_7(%arg0: i32) -> (i32, i32) {
    %c0_i32 = arith.constant 0 : i32
    %c0_i32_0 = arith.constant 0 : i32
    %c0_i32_1 = arith.constant 0 : i32
    return %c0_i32, %c0_i32_0 : i32, i32
  }
  func.func @transform_8(%arg0: i32) -> (i32, i32) {
    %c0_i32 = arith.constant 0 : i32
    %c0_i32_0 = arith.constant 0 : i32
    %c0_i32_1 = arith.constant 0 : i32
    return %c0_i32, %c0_i32_0 : i32, i32
  }
  func.func @transform_9(%arg0: i32) -> (i32, i32) {
    %c0_i32 = arith.constant 0 : i32
    %c0_i32_0 = arith.constant 0 : i32
    %c0_i32_1 = arith.constant 0 : i32
    return %c0_i32, %c0_i32_0 : i32, i32
  }
  func.func @transform_10(%arg0: i32) -> (i32, i32) {
    %c0_i32 = arith.constant 0 : i32
    %c0_i32_0 = arith.constant 0 : i32
    %c0_i32_1 = arith.constant 0 : i32
    return %c0_i32, %c0_i32_0 : i32, i32
  }
  func.func @transform_11(%arg0: i32) -> (i32, i32) {
    %c0_i32 = arith.constant 0 : i32
    %c0_i32_0 = arith.constant 0 : i32
    %c0_i32_1 = arith.constant 0 : i32
    return %c0_i32, %c0_i32_0 : i32, i32
  }
  func.func @transform_12(%arg0: i32) -> (i32, i32) {
    %c0_i32 = arith.constant 0 : i32
    %c0_i32_0 = arith.constant 0 : i32
    %c0_i32_1 = arith.constant 0 : i32
    return %c0_i32, %c0_i32_0 : i32, i32
  }
  func.func @transform_13(%arg0: i32) -> (i32, i32) {
    %c0_i32 = arith.constant 0 : i32
    %c0_i32_0 = arith.constant 0 : i32
    %c0_i32_1 = arith.constant 0 : i32
    return %c0_i32, %c0_i32_0 : i32, i32
  }
  func.func @transform_14(%arg0: i32) -> (i32, i32) {
    %c0_i32 = arith.constant 0 : i32
    %c0_i32_0 = arith.constant 0 : i32
    return %arg0, %c0_i32 : i32, i32
  }
}

</mosaic_0001>

<llo_original>
// kernel: tile.9
$region0: #{tile.9}
  %s0 = inlined_call_operand.vmem [shape: bf16[4,4,2], index: 0, kind: input, shape index: {}]
  %s1 = inlined_call_operand.vmem [shape: bf16[16,2], index: 1, kind: output, shape index: {}]
  $region1: #{tile.9} parent=0
    #allocation0 [shape = 'u8[4096]{0}', space=vmem, size = 0x1000, scoped, tag = 'scoped mem for output reshape']
    #allocation1 [shape = 'u8[8192]{0}', space=vmem, size = 0x2000, scoped, tag = 'scoped mem for input reshape']
    %s3 = smul.u32 2, 2
    %s4 = sshllo.u32 0, %s3
    %s5 = scalar_lea.vmem %s0, 2
    %s6 = sshrl.u32 %s4, 1
    %s7 = sor.u32 %s4, %s6
    %s8 = sand.u32 %s7, 85
    %s9 = sshrl.u32 %s8, 1
    %s10 = sor.u32 %s8, %s9
    %s11 = sand.u32 51, %s10
    %s12 = sshrl.u32 %s11, 2
    %s13 = sor.u32 %s11, %s12
    %s14 = sand.u32 15, %s13
    %v15 = vld [vmem:[%s5] sm:%s14]
    %v16 = vunpack.c.l.bf16 %v15
    %v17 = vunpack.c.h.bf16 %v15
    %s18 = scalar_lea.vmem [#allocation1], 8
    %19 = vst [vmem:[%s18] sm:%s4] %v16
    %s20 = sshrl.u32 %s4, 1
    %s21 = sor.u32 %s4, %s20
    %s22 = sand.u32 %s21, 85
    %s23 = sshrl.u32 %s22, 1
    %s24 = sor.u32 %s22, %s23
    %s25 = sand.u32 51, %s24
    %s26 = sshrl.u32 %s25, 2
    %s27 = sor.u32 %s25, %s26
    %s28 = sand.u32 15, %s27
    %v29 = vld [vmem:[%s0] sm:%s28]
    %v30 = vunpack.c.l.bf16 %v29
    %v31 = vunpack.c.h.bf16 %v29
    %32 = vst [vmem:[#allocation1] sm:%s4] %v30
    %s33 = smov 3
    %v34 = vld [vmem:[#allocation1] ss:$8 sm:%s33]
    %vm35 = vcmask 31744
    %36 = vst.msk [vmem:[#allocation0] sm:$0x3] %vm35, %v34
    %s37 = scalar_lea.vmem [#allocation1], 3
    %s38 = smov 3
    %v39 = vld [vmem:[%s37] ss:$8 sm:%s38]
    %40 = vrot.lane.b32.xlu0 %v39, 12
    %v41 = vpop.permute.xlu0 %40
    %vm42 = vcmask 130144
    %43 = vst.msk [vmem:[#allocation0] sm:$0x3] %vm42, %v41
    %s44 = scalar_lea.vmem [#allocation1], 2
    %s45 = smov 3
    %v46 = vld [vmem:[%s44] ss:$8 sm:%s45]
    %47 = vrot.lane.b32.xlu0 %v46, 8
    %v48 = vpop.permute.xlu0 %47
    %vm49 = vcmask 97344
    %50 = vst.msk [vmem:[#allocation0] sm:$0x3] %vm49, %v48
    %s51 = scalar_lea.vmem [#allocation1], 1
    %s52 = smov 3
    %v53 = vld [vmem:[%s51] ss:$8 sm:%s52]
    %54 = vrot.lane.b32.xlu0 %v53, 4
    %v55 = vpop.permute.xlu0 %54
    %vm56 = vcmask 64544
    %57 = vst.msk [vmem:[#allocation0] sm:$0x3] %vm56, %v55
    %s59 = smul.u32 1, 2
    %s60 = sshllo.u32 0, %s59
    %s61 = sshrl.u32 %s59, 1
    %v62 = vld [vmem:[#allocation0] sm:%s60]
    %v63 = vpack.c.bf16 0.0, %v62
    %s64 = sshllo.u32 0, %s61
    %65 = vst [vmem:[%s1] sm:%s64] %v63

// kernel: folding_net_forward.1
$region0: #{folding_net_forward.1}
  #allocation0 [shape = 'u32[]', space=smem, size = 0x4, offset = 0x4, fixed_abs, tag = 'smem constant byte address 0x4 - core index']
  #allocation1 [shape = 'u32[144,128]{1,0:T(1,128)}', space=vmem, size = 0x12000, scoped, tag = 'internal scratch']
  %s0 = inlined_call_operand.vmem [shape: f32[16,32], index: 0, kind: input, shape index: {}]
  %s1 = inlined_call_operand.vmem [shape: f32[32,32], index: 1, kind: input, shape index: {}]
  %s2 = inlined_call_operand.vmem [shape: f32[1,32], index: 2, kind: input, shape index: {}]
  %s3 = inlined_call_operand.vmem [shape: f32[32,32], index: 3, kind: input, shape index: {}]
  %s4 = inlined_call_operand.vmem [shape: f32[1,32], index: 4, kind: input, shape index: {}]
  %s5 = inlined_call_operand.vmem [shape: f32[32,12], index: 5, kind: input, shape index: {}]
  %s6 = inlined_call_operand.vmem [shape: f32[1,12], index: 6, kind: input, shape index: {}]
  %s7 = inlined_call_operand.vmem [shape: f32[32,32], index: 7, kind: input, shape index: {}]
  %s8 = inlined_call_operand.vmem [shape: f32[3,32], index: 8, kind: input, shape index: {}]
  %s9 = inlined_call_operand.vmem [shape: f32[16,32], index: 9, kind: input, shape index: {}]
  %s10 = inlined_call_operand.vmem [shape: f32[32,32], index: 10, kind: input, shape index: {}]
  %s11 = inlined_call_operand.vmem [shape: f32[1,32], index: 11, kind: input, shape index: {}]
  %s12 = inlined_call_operand.vmem [shape: f32[32,3], index: 12, kind: input, shape index: {}]
  %s13 = inlined_call_operand.vmem [shape: f32[1,3], index: 13, kind: input, shape index: {}]
  %s14 = inlined_call_operand.vmem [shape: f32[16,60], index: 14, kind: output, shape index: {}]
  %s15 = sld [smem:[#allocation0]]
  $region89: #{folding_net_forward.1} parent=0
    _
  %s17 = ssub.s32 1, %s15
  %s18 = scalar_select 0, %s17, %s15
  loop: start=0, step=1, limit=4
  $region2: #{folding_net_forward.1} parent=0 // loop_pre_header
    _
  $region3: #{folding_net_forward.1} parent=0 // loop_header
    %s20 = sphi 0, %s24
    %p21 = scmp.ge.s32.totalorder %s20, 4
    %s30 = sphi 0, %s32
    %s33 = sphi 0, %s30
    %s34 = sphi 0, %s33
    %s50 = sphi 0, %s34
    %s54 = sphi 0, %s54
    %s56 = sphi 0, %s54
    %s57 = sphi 0, %s56
    %s71 = sphi 0, %s57
    %s75 = sphi 0, %s75
    %s77 = sphi 0, %s75
    %s78 = sphi 0, %s77
    %s92 = sphi 0, %s78
    %s96 = sphi 0, %s96
    %s98 = sphi 0, %s96
    %s99 = sphi 0, %s98
    %s113 = sphi 0, %s99
    %s117 = sphi 0, %s117
    %s119 = sphi 0, %s117
    %s120 = sphi 0, %s119
    %s134 = sphi 0, %s120
    %s138 = sphi 0, %s138
    %s140 = sphi 0, %s138
    %s141 = sphi 0, %s140
    %s155 = sphi 0, %s141
    %s159 = sphi 0, %s159
    %s161 = sphi 0, %s159
    %s162 = sphi 0, %s161
    %s176 = sphi 0, %s162
    %s180 = sphi 0, %s180
    %s182 = sphi 0, %s180
    %s183 = sphi 0, %s182
    %s197 = sphi 0, %s183
    %s201 = sphi 0, %s201
    %s203 = sphi 0, %s201
    %s204 = sphi 0, %s203
    %s218 = sphi 0, %s204
    %s222 = sphi 0, %s222
    %s224 = sphi 0, %s222
    %s225 = sphi 0, %s224
    %s239 = sphi 0, %s225
    %s243 = sphi 0, %s243
    %s245 = sphi 0, %s243
    %s246 = sphi 0, %s245
    %s260 = sphi 0, %s246
    %s264 = sphi 0, %s264
    %s266 = sphi 0, %s264
    %s267 = sphi 0, %s266
    %s281 = sphi 0, %s267
    %s285 = sphi 0, %s285
    %s287 = sphi 0, %s285
    %s288 = sphi 0, %s287
    %s302 = sphi 0, %s288
    %s306 = sphi 0, %s306
    %s308 = sphi 0, %s306
    %s309 = sphi 0, %s308
    %s323 = sphi 0, %s309
    %s329 = sphi 0, %s331
    %s332 = sphi 0, %s329
    %s333 = sphi 0, %s332
    %s349 = sphi 0, %s333
  $region4: #{folding_net_forward.1} parent=0 // loop_header_branch
    %23 = sbr.rel (%p21) target = $region8
  $region5: #{folding_net_forward.1} parent=0 // loop_body
    %s25 = ssub.s32 %s20, 1
    %s26 = ssub.s32 %s20, 2
    %s27 = sadd.s32 %s20, 1
    %s28 = ssub.s32 %s20, %s27
    %p29 = scmp.eq.s32.totalorder %s28, 0
    %s31 = sadd.s32 %s30, 1
    %s32 = scalar_select %p29, %s30, %s31
    %p35 = pneg %p29
    %p36 = scmp.eq.s32.totalorder %s20, 1
    %p37 = por %p35, %p36
    %p38 = scmp.ne.s32.totalorder %s30, %s33
    %p39 = scmp.eq.s32.totalorder %s20, 0
    %p40 = por %p38, %p39
    %p41 = scmp.ne.s32.totalorder %s30, %s33
    %p42 = scmp.eq.s32.totalorder %s25, 1
    %p43 = por %p41, %p42
    %p44 = scmp.ne.s32.totalorder %s33, %s34
    %p45 = scmp.eq.s32.totalorder %s25, 0
    %p46 = por %p44, %p45
    %p47 = scmp.ne.s32.totalorder %s33, %s34
    %p48 = scmp.eq.s32.totalorder %s26, 1
    %p49 = por %p47, %p48
    %p51 = scmp.ne.s32.totalorder %s34, %s50
    %p52 = scmp.eq.s32.totalorder %s26, 0
    %p53 = por %p51, %p52
    %s55 = sadd.s32 %s54, 1
    %p58 = scmp.eq.s32.totalorder %s20, 1
    %p59 = scmp.ne.s32.totalorder %s54, %s56
    %p60 = scmp.eq.s32.totalorder %s20, 0
    %p61 = por %p59, %p60
    %p62 = scmp.ne.s32.totalorder %s54, %s56
    %p63 = scmp.eq.s32.totalorder %s25, 1
    %p64 = por %p62, %p63
    %p65 = scmp.ne.s32.totalorder %s56, %s57
    %p66 = scmp.eq.s32.totalorder %s25, 0
    %p67 = por %p65, %p66
    %p68 = scmp.ne.s32.totalorder %s56, %s57
    %p69 = scmp.eq.s32.totalorder %s26, 1
    %p70 = por %p68, %p69
    %p72 = scmp.ne.s32.totalorder %s57, %s71
    %p73 = scmp.eq.s32.totalorder %s26, 0
    %p74 = por %p72, %p73
    %s76 = sadd.s32 %s75, 1
    %p79 = scmp.eq.s32.totalorder %s20, 1
    %p80 = scmp.ne.s32.totalorder %s75, %s77
    %p81 = scmp.eq.s32.totalorder %s20, 0
    %p82 = por %p80, %p81
    %p83 = scmp.ne.s32.totalorder %s75, %s77
    %p84 = scmp.eq.s32.totalorder %s25, 1
    %p85 = por %p83, %p84
    %p86 = scmp.ne.s32.totalorder %s77, %s78
    %p87 = scmp.eq.s32.totalorder %s25, 0
    %p88 = por %p86, %p87
    %p89 = scmp.ne.s32.totalorder %s77, %s78
    %p90 = scmp.eq.s32.totalorder %s26, 1
    %p91 = por %p89, %p90
    %p93 = scmp.ne.s32.totalorder %s78, %s92
    %p94 = scmp.eq.s32.totalorder %s26, 0
    %p95 = por %p93, %p94
    %s97 = sadd.s32 %s96, 1
    %p100 = scmp.eq.s32.totalorder %s20, 1
    %p101 = scmp.ne.s32.totalorder %s96, %s98
    %p102 = scmp.eq.s32.totalorder %s20, 0
    %p103 = por %p101, %p102
    %p104 = scmp.ne.s32.totalorder %s96, %s98
    %p105 = scmp.eq.s32.totalorder %s25, 1
    %p106 = por %p104, %p105
    %p107 = scmp.ne.s32.totalorder %s98, %s99
    %p108 = scmp.eq.s32.totalorder %s25, 0
    %p109 = por %p107, %p108
    %p110 = scmp.ne.s32.totalorder %s98, %s99
    %p111 = scmp.eq.s32.totalorder %s26, 1
    %p112 = por %p110, %p111
    %p114 = scmp.ne.s32.totalorder %s99, %s113
    %p115 = scmp.eq.s32.totalorder %s26, 0
    %p116 = por %p114, %p115
    %s118 = sadd.s32 %s117, 1
    %p121 = scmp.eq.s32.totalorder %s20, 1
    %p122 = scmp.ne.s32.totalorder %s117, %s119
    %p123 = scmp.eq.s32.totalorder %s20, 0
    %p124 = por %p122, %p123
    %p125 = scmp.ne.s32.totalorder %s117, %s119
    %p126 = scmp.eq.s32.totalorder %s25, 1
    %p127 = por %p125, %p126
    %p128 = scmp.ne.s32.totalorder %s119, %s120
    %p129 = scmp.eq.s32.totalorder %s25, 0
    %p130 = por %p128, %p129
    %p131 = scmp.ne.s32.totalorder %s119, %s120
    %p132 = scmp.eq.s32.totalorder %s26, 1
    %p133 = por %p131, %p132
    %p135 = scmp.ne.s32.totalorder %s120, %s134
    %p136 = scmp.eq.s32.totalorder %s26, 0
    %p137 = por %p135, %p136
    %s139 = sadd.s32 %s138, 1
    %p142 = scmp.eq.s32.totalorder %s20, 1
    %p143 = scmp.ne.s32.totalorder %s138, %s140
    %p144 = scmp.eq.s32.totalorder %s20, 0
    %p145 = por %p143, %p144
    %p146 = scmp.ne.s32.totalorder %s138, %s140
    %p147 = scmp.eq.s32.totalorder %s25, 1
    %p148 = por %p146, %p147
    %p149 = scmp.ne.s32.totalorder %s140, %s141
    %p150 = scmp.eq.s32.totalorder %s25, 0
    %p151 = por %p149, %p150
    %p152 = scmp.ne.s32.totalorder %s140, %s141
    %p153 = scmp.eq.s32.totalorder %s26, 1
    %p154 = por %p152, %p153
    %p156 = scmp.ne.s32.totalorder %s141, %s155
    %p157 = scmp.eq.s32.totalorder %s26, 0
    %p158 = por %p156, %p157
    %s160 = sadd.s32 %s159, 1
    %p163 = scmp.eq.s32.totalorder %s20, 1
    %p164 = scmp.ne.s32.totalorder %s159, %s161
    %p165 = scmp.eq.s32.totalorder %s20, 0
    %p166 = por %p164, %p165
    %p167 = scmp.ne.s32.totalorder %s159, %s161
    %p168 = scmp.eq.s32.totalorder %s25, 1
    %p169 = por %p167, %p168
    %p170 = scmp.ne.s32.totalorder %s161, %s162
    %p171 = scmp.eq.s32.totalorder %s25, 0
    %p172 = por %p170, %p171
    %p173 = scmp.ne.s32.totalorder %s161, %s162
    %p174 = scmp.eq.s32.totalorder %s26, 1
    %p175 = por %p173, %p174
    %p177 = scmp.ne.s32.totalorder %s162, %s176
    %p178 = scmp.eq.s32.totalorder %s26, 0
    %p179 = por %p177, %p178
    %s181 = sadd.s32 %s180, 1
    %p184 = scmp.eq.s32.totalorder %s20, 1
    %p185 = scmp.ne.s32.totalorder %s180, %s182
    %p186 = scmp.eq.s32.totalorder %s20, 0
    %p187 = por %p185, %p186
    %p188 = scmp.ne.s32.totalorder %s180, %s182
    %p189 = scmp.eq.s32.totalorder %s25, 1
    %p190 = por %p188, %p189
    %p191 = scmp.ne.s32.totalorder %s182, %s183
    %p192 = scmp.eq.s32.totalorder %s25, 0
    %p193 = por %p191, %p192
    %p194 = scmp.ne.s32.totalorder %s182, %s183
    %p195 = scmp.eq.s32.totalorder %s26, 1
    %p196 = por %p194, %p195
    %p198 = scmp.ne.s32.totalorder %s183, %s197
    %p199 = scmp.eq.s32.totalorder %s26, 0
    %p200 = por %p198, %p199
    %s202 = sadd.s32 %s201, 1
    %p205 = scmp.eq.s32.totalorder %s20, 1
    %p206 = scmp.ne.s32.totalorder %s201, %s203
    %p207 = scmp.eq.s32.totalorder %s20, 0
    %p208 = por %p206, %p207
    %p209 = scmp.ne.s32.totalorder %s201, %s203
    %p210 = scmp.eq.s32.totalorder %s25, 1
    %p211 = por %p209, %p210
    %p212 = scmp.ne.s32.totalorder %s203, %s204
    %p213 = scmp.eq.s32.totalorder %s25, 0
    %p214 = por %p212, %p213
    %p215 = scmp.ne.s32.totalorder %s203, %s204
    %p216 = scmp.eq.s32.totalorder %s26, 1
    %p217 = por %p215, %p216
    %p219 = scmp.ne.s32.totalorder %s204, %s218
    %p220 = scmp.eq.s32.totalorder %s26, 0
    %p221 = por %p219, %p220
    %s223 = sadd.s32 %s222, 1
    %p226 = scmp.eq.s32.totalorder %s20, 1
    %p227 = scmp.ne.s32.totalorder %s222, %s224
    %p228 = scmp.eq.s32.totalorder %s20, 0
    %p229 = por %p227, %p228
    %p230 = scmp.ne.s32.totalorder %s222, %s224
    %p231 = scmp.eq.s32.totalorder %s25, 1
    %p232 = por %p230, %p231
    %p233 = scmp.ne.s32.totalorder %s224, %s225
    %p234 = scmp.eq.s32.totalorder %s25, 0
    %p235 = por %p233, %p234
    %p236 = scmp.ne.s32.totalorder %s224, %s225
    %p237 = scmp.eq.s32.totalorder %s26, 1
    %p238 = por %p236, %p237
    %p240 = scmp.ne.s32.totalorder %s225, %s239
    %p241 = scmp.eq.s32.totalorder %s26, 0
    %p242 = por %p240, %p241
    %s244 = sadd.s32 %s243, 1
    %p247 = scmp.eq.s32.totalorder %s20, 1
    %p248 = scmp.ne.s32.totalorder %s243, %s245
    %p249 = scmp.eq.s32.totalorder %s20, 0
    %p250 = por %p248, %p249
    %p251 = scmp.ne.s32.totalorder %s243, %s245
    %p252 = scmp.eq.s32.totalorder %s25, 1
    %p253 = por %p251, %p252
    %p254 = scmp.ne.s32.totalorder %s245, %s246
    %p255 = scmp.eq.s32.totalorder %s25, 0
    %p256 = por %p254, %p255
    %p257 = scmp.ne.s32.totalorder %s245, %s246
    %p258 = scmp.eq.s32.totalorder %s26, 1
    %p259 = por %p257, %p258
    %p261 = scmp.ne.s32.totalorder %s246, %s260
    %p262 = scmp.eq.s32.totalorder %s26, 0
    %p263 = por %p261, %p262
    %s265 = sadd.s32 %s264, 1
    %p268 = scmp.eq.s32.totalorder %s20, 1
    %p269 = scmp.ne.s32.totalorder %s264, %s266
    %p270 = scmp.eq.s32.totalorder %s20, 0
    %p271 = por %p269, %p270
    %p272 = scmp.ne.s32.totalorder %s264, %s266
    %p273 = scmp.eq.s32.totalorder %s25, 1
    %p274 = por %p272, %p273
    %p275 = scmp.ne.s32.totalorder %s266, %s267
    %p276 = scmp.eq.s32.totalorder %s25, 0
    %p277 = por %p275, %p276
    %p278 = scmp.ne.s32.totalorder %s266, %s267
    %p279 = scmp.eq.s32.totalorder %s26, 1
    %p280 = por %p278, %p279
    %p282 = scmp.ne.s32.totalorder %s267, %s281
    %p283 = scmp.eq.s32.totalorder %s26, 0
    %p284 = por %p282, %p283
    %s286 = sadd.s32 %s285, 1
    %p289 = scmp.eq.s32.totalorder %s20, 1
    %p290 = scmp.ne.s32.totalorder %s285, %s287
    %p291 = scmp.eq.s32.totalorder %s20, 0
    %p292 = por %p290, %p291
    %p293 = scmp.ne.s32.totalorder %s285, %s287
    %p294 = scmp.eq.s32.totalorder %s25, 1
    %p295 = por %p293, %p294
    %p296 = scmp.ne.s32.totalorder %s287, %s288
    %p297 = scmp.eq.s32.totalorder %s25, 0
    %p298 = por %p296, %p297
    %p299 = scmp.ne.s32.totalorder %s287, %s288
    %p300 = scmp.eq.s32.totalorder %s26, 1
    %p301 = por %p299, %p300
    %p303 = scmp.ne.s32.totalorder %s288, %s302
    %p304 = scmp.eq.s32.totalorder %s26, 0
    %p305 = por %p303, %p304
    %s307 = sadd.s32 %s306, 1
    %p310 = scmp.eq.s32.totalorder %s20, 1
    %p311 = scmp.ne.s32.totalorder %s306, %s308
    %p312 = scmp.eq.s32.totalorder %s20, 0
    %p313 = por %p311, %p312
    %p314 = scmp.ne.s32.totalorder %s306, %s308
    %p315 = scmp.eq.s32.totalorder %s25, 1
    %p316 = por %p314, %p315
    %p317 = scmp.ne.s32.totalorder %s308, %s309
    %p318 = scmp.eq.s32.totalorder %s25, 0
    %p319 = por %p317, %p318
    %p320 = scmp.ne.s32.totalorder %s308, %s309
    %p321 = scmp.eq.s32.totalorder %s26, 1
    %p322 = por %p320, %p321
    %p324 = scmp.ne.s32.totalorder %s309, %s323
    %p325 = scmp.eq.s32.totalorder %s26, 0
    %p326 = por %p324, %p325
    %s327 = ssub.s32 %s20, %s27
    %p328 = scmp.eq.s32.totalorder %s327, 0
    %s330 = sadd.s32 %s329, 1
    %s331 = scalar_select %p328, %s329, %s330
    %p334 = pneg %p328
    %p335 = scmp.eq.s32.totalorder %s20, 1
    %p336 = por %p334, %p335
    %p337 = scmp.ne.s32.totalorder %s329, %s332
    %p338 = scmp.eq.s32.totalorder %s20, 0
    %p339 = por %p337, %p338
    %p340 = scmp.ne.s32.totalorder %s329, %s332
    %p341 = scmp.eq.s32.totalorder %s25, 1
    %p342 = por %p340, %p341
    %p343 = scmp.ne.s32.totalorder %s332, %s333
    %p344 = scmp.eq.s32.totalorder %s25, 0
    %p345 = por %p343, %p344
    %p346 = scmp.ne.s32.totalorder %s332, %s333
    %p347 = scmp.eq.s32.totalorder %s26, 1
    %p348 = por %p346, %p347
    %p350 = scmp.ne.s32.totalorder %s333, %s349
    %p351 = scmp.eq.s32.totalorder %s26, 0
    %p352 = por %p350, %p351
    %p353 = scmp.le.s32.totalorder 1, %s20
    %p354 = scmp.lt.s32.totalorder %s20, 3
    %p355 = pnand %p353, %p354
    %p356 = pneg %p355
    // Predicated region
    $region9: #{folding_net_forward.1} parent=5 // pred_check
      _
    $region10: #{folding_net_forward.1} parent=5 // pred_check_branch
      %358 = sbr.rel (%p355) target = $region12
    $region11: #{folding_net_forward.1} parent=5 // pred_region
      %s359 = ssub.s32 %s20, 1
      // Predicated region
      $region13: #{folding_net_forward.1} parent=11 // pred_check
        %p360 = pneg %p67
      $region14: #{folding_net_forward.1} parent=11 // pred_check_branch
        %362 = sbr.rel (%p360) target = $region16
      $region15: #{folding_net_forward.1} parent=11 // pred_region
        _
      $region16: #{folding_net_forward.1} parent=11 // pred_fallthru
        _
      // Predicated region
      $region17: #{folding_net_forward.1} parent=11 // pred_check
        %p363 = pneg %p88
      $region18: #{folding_net_forward.1} parent=11 // pred_check_branch
        %365 = sbr.rel (%p363) target = $region20
      $region19: #{folding_net_forward.1} parent=11 // pred_region
        _
      $region20: #{folding_net_forward.1} parent=11 // pred_fallthru
        _
      // Predicated region
      $region21: #{folding_net_forward.1} parent=11 // pred_check
        %p366 = pneg %p109
      $region22: #{folding_net_forward.1} parent=11 // pred_check_branch
        %368 = sbr.rel (%p366) target = $region24
      $region23: #{folding_net_forward.1} parent=11 // pred_region
        _
      $region24: #{folding_net_forward.1} parent=11 // pred_fallthru
        _
      // Predicated region
      $region25: #{folding_net_forward.1} parent=11 // pred_check
        %p369 = pneg %p130
      $region26: #{folding_net_forward.1} parent=11 // pred_check_branch
        %371 = sbr.rel (%p369) target = $region28
      $region27: #{folding_net_forward.1} parent=11 // pred_region
        _
      $region28: #{folding_net_forward.1} parent=11 // pred_fallthru
        _
      // Predicated region
      $region29: #{folding_net_forward.1} parent=11 // pred_check
        %p372 = pneg %p151
      $region30: #{folding_net_forward.1} parent=11 // pred_check_branch
        %374 = sbr.rel (%p372) target = $region32
      $region31: #{folding_net_forward.1} parent=11 // pred_region
        _
      $region32: #{folding_net_forward.1} parent=11 // pred_fallthru
        _
      // Predicated region
      $region33: #{folding_net_forward.1} parent=11 // pred_check
        %p375 = pneg %p172
      $region34: #{folding_net_forward.1} parent=11 // pred_check_branch
        %377 = sbr.rel (%p375) target = $region36
      $region35: #{folding_net_forward.1} parent=11 // pred_region
        _
      $region36: #{folding_net_forward.1} parent=11 // pred_fallthru
        _
      // Predicated region
      $region37: #{folding_net_forward.1} parent=11 // pred_check
        %p378 = pneg %p193
      $region38: #{folding_net_forward.1} parent=11 // pred_check_branch
        %380 = sbr.rel (%p378) target = $region40
      $region39: #{folding_net_forward.1} parent=11 // pred_region
        _
      $region40: #{folding_net_forward.1} parent=11 // pred_fallthru
        _
      // Predicated region
      $region41: #{folding_net_forward.1} parent=11 // pred_check
        %p381 = pneg %p214
      $region42: #{folding_net_forward.1} parent=11 // pred_check_branch
        %383 = sbr.rel (%p381) target = $region44
      $region43: #{folding_net_forward.1} parent=11 // pred_region
        _
      $region44: #{folding_net_forward.1} parent=11 // pred_fallthru
        _
      // Predicated region
      $region45: #{folding_net_forward.1} parent=11 // pred_check
        %p384 = pneg %p235
      $region46: #{folding_net_forward.1} parent=11 // pred_check_branch
        %386 = sbr.rel (%p384) target = $region48
      $region47: #{folding_net_forward.1} parent=11 // pred_region
        _
      $region48: #{folding_net_forward.1} parent=11 // pred_fallthru
        _
      // Predicated region
      $region49: #{folding_net_forward.1} parent=11 // pred_check
        %p387 = pneg %p256
      $region50: #{folding_net_forward.1} parent=11 // pred_check_branch
        %389 = sbr.rel (%p387) target = $region52
      $region51: #{folding_net_forward.1} parent=11 // pred_region
        _
      $region52: #{folding_net_forward.1} parent=11 // pred_fallthru
        _
      // Predicated region
      $region53: #{folding_net_forward.1} parent=11 // pred_check
        %p390 = pneg %p277
      $region54: #{folding_net_forward.1} parent=11 // pred_check_branch
        %392 = sbr.rel (%p390) target = $region56
      $region55: #{folding_net_forward.1} parent=11 // pred_region
        _
      $region56: #{folding_net_forward.1} parent=11 // pred_fallthru
        _
      // Predicated region
      $region57: #{folding_net_forward.1} parent=11 // pred_check
        %p393 = pneg %p298
      $region58: #{folding_net_forward.1} parent=11 // pred_check_branch
        %395 = sbr.rel (%p393) target = $region60
      $region59: #{folding_net_forward.1} parent=11 // pred_region
        _
      $region60: #{folding_net_forward.1} parent=11 // pred_fallthru
        _
      // Predicated region
      $region61: #{folding_net_forward.1} parent=11 // pred_check
        %p396 = pneg %p319
      $region62: #{folding_net_forward.1} parent=11 // pred_check_branch
        %398 = sbr.rel (%p396) target = $region64
      $region63: #{folding_net_forward.1} parent=11 // pred_region
        _
      $region64: #{folding_net_forward.1} parent=11 // pred_fallthru
        _
    $region12: #{folding_net_forward.1} parent=5 // pred_fallthru
      _
    %p399 = scmp.lt.s32.totalorder %s20, 2
    // Predicated region
    $region65: #{folding_net_forward.1} parent=5 // pred_check
      %p400 = pneg %p399
    $region66: #{folding_net_forward.1} parent=5 // pred_check_branch
      %402 = sbr.rel (%p400) target = $region68
    $region67: #{folding_net_forward.1} parent=5 // pred_region
      // Predicated region
      $region69: #{folding_net_forward.1} parent=67 // pred_check
        %p403 = pneg %p40
      $region70: #{folding_net_forward.1} parent=67 // pred_check_branch
        %405 = sbr.rel (%p403) target = $region72
      $region71: #{folding_net_forward.1} parent=67 // pred_region
        %p406 = scmp.lt.s32.totalorder %s20, 1
        %s407 = scalar_select %p406, %s20, 1
        %s408 = smul.addr %s407, 8
        %s409 = scalar_lea.vmem %s0, %s408
      $region72: #{folding_net_forward.1} parent=67 // pred_fallthru
        _
    $region68: #{folding_net_forward.1} parent=5 // pred_fallthru
      _
    %p410 = scmp.le.s32.totalorder 1, %s20
    %p411 = scmp.lt.s32.totalorder %s20, 3
    %p412 = pnand %p410, %p411
    %p413 = pneg %p412
    // Predicated region
    $region73: #{folding_net_forward.1} parent=5 // pred_check
      _
    $region74: #{folding_net_forward.1} parent=5 // pred_check_branch
      %415 = sbr.rel (%p412) target = $region76
    $region75: #{folding_net_forward.1} parent=5 // pred_region
      %s416 = ssub.s32 %s20, 1
      %p417 = scmp.lt.s32.totalorder %s25, 1
      %s418 = scalar_select %p417, %s25, 1
      %s419 = smul.addr %s418, 8
      %s420 = scalar_lea.vmem %s0, %s419
      %p421 = pneg %p46
      %p422 = pneg %p43
      %p423 = pneg %p67
      %p424 = pneg %p64
      %p425 = pneg %p88
      %p426 = pneg %p85
      %p427 = pneg %p109
      %p428 = pneg %p106
      %p429 = pneg %p130
      %p430 = pneg %p127
      %p431 = pneg %p151
      %p432 = pneg %p148
      %p433 = pneg %p172
      %p434 = pneg %p169
      %p435 = pneg %p193
      %p436 = pneg %p190
      %p437 = pneg %p214
      %p438 = pneg %p211
      %p439 = pneg %p235
      %p440 = pneg %p232
      %p441 = pneg %p256
      %p442 = pneg %p253
      %p443 = pneg %p277
      %p444 = pneg %p274
      %p445 = pneg %p298
      %p446 = pneg %p295
      %p447 = pneg %p319
      %p448 = pneg %p316
      %p449 = pneg %p345
      %p450 = pneg %p342
      %p451 = scmp.lt.s32.totalorder %s25, 1
      %s452 = scalar_select %p451, %s25, 1
      %s453 = smul.addr %s452, 8
      %s454 = scalar_lea.vmem %s14, %s453
      %p455 = scmp.lt.s32.totalorder %s25, 1
      %s456 = scalar_select %p455, %s25, 1
      %s457 = smul.addr %s456, 8
      %s458 = scalar_lea.vmem %s0, %s457
      %p459 = scmp.lt.s32.totalorder %s25, 1
      %s460 = scalar_select %p459, %s25, 1
      %s461 = smul.addr %s460, 8
      %s462 = scalar_lea.vmem %s14, %s461
      %v463 = vld [vmem:[%s458] sm:$0xff]
      %v464 = vld [vmem:[%s1] sm:$0xff]
      %v465 = vld [vmem:[%s1 + $0x8] sm:$0xff]
      %v466 = vld [vmem:[%s1 + $0x10] sm:$0xff]
      %v467 = vld [vmem:[%s1 + $0x18] sm:$0xff]
      %v468 = vld [vmem:[%s2] sm:$0x1]
      %v469 = vld [vmem:[%s3] sm:$0xff]
      %v470 = vld [vmem:[%s3 + $0x8] sm:$0xff]
      %v471 = vld [vmem:[%s3 + $0x10] sm:$0xff]
      %v472 = vld [vmem:[%s3 + $0x18] sm:$0xff]
      %v473 = vld [vmem:[%s4] sm:$0x1]
      %v474 = vld [vmem:[%s5] sm:$0xff]
      %v475 = vld [vmem:[%s5 + $0x8] sm:$0xff]
      %v476 = vld [vmem:[%s5 + $0x10] sm:$0xff]
      %v477 = vld [vmem:[%s5 + $0x18] sm:$0xff]
      %v478 = vld [vmem:[%s6] sm:$0x1]
      %v479 = vld [vmem:[%s7] sm:$0xff]
      %v480 = vld [vmem:[%s7 + $0x8] sm:$0xff]
      %v481 = vld [vmem:[%s7 + $0x10] sm:$0xff]
      %v482 = vld [vmem:[%s7 + $0x18] sm:$0xff]
      %v483 = vld [vmem:[%s8] sm:$0x7]
      %v484 = vld [vmem:[%s9] sm:$0xff]
      %v485 = vld [vmem:[%s9 + $0x8] sm:$0xff]
      %v486 = vld [vmem:[%s10] sm:$0xff]
      %v487 = vld [vmem:[%s10 + $0x8] sm:$0xff]
      %v488 = vld [vmem:[%s10 + $0x10] sm:$0xff]
      %v489 = vld [vmem:[%s10 + $0x18] sm:$0xff]
      %v490 = vld [vmem:[%s11] sm:$0x1]
      %v491 = vld [vmem:[%s12] sm:$0xff]
      %v492 = vld [vmem:[%s12 + $0x8] sm:$0xff]
      %v493 = vld [vmem:[%s12 + $0x10] sm:$0xff]
      %v494 = vld [vmem:[%s12 + $0x18] sm:$0xff]
      %v495 = vld [vmem:[%s13] sm:$0x1]
      %v497 = vlaneseq
      %v498 = vshrl.u32 %v497, 7
      %v499 = vsub.s32 0, %v498
      %v500 = vrot.slane %v468, %v499
      %vm502 = vcmask 261120
      %v504 = vsel %vm502, %v463, 0
      %506 = vmatprep.subr.mxu0 0.0
      %507 = vmatpush1.msra.mxu0 %v464
      %508 = vmatprep.subr.mxu0 0.0
      %509 = vmatpush1.msra.mxu0 %v465
      %510 = vmatprep.subr.mxu0 0.0
      %511 = vmatpush1.msra.mxu0 %v466
      %512 = vmatprep.subr.mxu0 0.0
      %513 = vmatpush1.msra.mxu0 %v467
      %514 = vmatprep.subr.mxu0 0.0
      %515 = vmatpush1.msra.mxu0 0.0
      %516 = vmatprep.subr.mxu0 0.0
      %517 = vmatpush1.msra.mxu0 0.0
      %518 = vmatprep.subr.mxu0 0.0
      %519 = vmatpush1.msra.mxu0 0.0
      %520 = vmatprep.subr.mxu0 0.0
      %521 = vmatpush1.msra.mxu0 0.0
      %522 = vmatprep.subr.mxu0 0.0
      %523 = vmatpush1.msra.mxu0 0.0
      %524 = vmatprep.subr.mxu0 0.0
      %525 = vmatpush1.msra.mxu0 0.0
      %526 = vmatprep.subr.mxu0 0.0
      %527 = vmatpush1.msra.mxu0 0.0
      %528 = vmatprep.subr.mxu0 0.0
      %529 = vmatpush1.msra.mxu0 0.0
      %530 = vmatprep.subr.mxu0 0.0
      %531 = vmatpush1.msra.mxu0 0.0
      %532 = vmatprep.subr.mxu0 0.0
      %533 = vmatpush1.msra.mxu0 0.0
      %534 = vmatprep.subr.mxu0 0.0
      %535 = vmatpush1.msra.mxu0 0.0
      %536 = vmatprep.subr.mxu0 0.0
      %537 = vmatpush1.msra.mxu0 0.0
      %538 = vmatprep.subr.mxu0 0.0
      %539 = vmatpush1.msra.mxu0 0.0
      %540 = vmatprep.subr.mxu0 0.0
      %541 = vmatpush1.msra.mxu0 0.0
      %542 = vmatprep.subr.mxu0 0.0
      %543 = vmatpush1.msra.mxu0 0.0
      %544 = vmatprep.subr.mxu0 0.0
      %545 = vmatpush1.msra.mxu0 0.0
      %546 = vmatprep.subr.mxu0 0.0
      %547 = vmatpush1.msra.mxu0 0.0
      %548 = vmatprep.subr.mxu0 0.0
      %549 = vmatpush1.msra.mxu0 0.0
      %550 = vmatprep.subr.mxu0 0.0
      %551 = vmatpush1.msra.mxu0 0.0
      %552 = vmatprep.subr.mxu0 0.0
      %553 = vmatpush1.msra.mxu0 0.0
      %554 = vmatprep.subr.mxu0 0.0
      %555 = vmatpush1.msra.mxu0 0.0
      %556 = vmatprep.subr.mxu0 0.0
      %557 = vmatpush1.msra.mxu0 0.0
      %558 = vmatprep.subr.mxu0 0.0
      %559 = vmatpush1.msra.mxu0 0.0
      %560 = vmatprep.subr.mxu0 0.0
      %561 = vmatpush1.msra.mxu0 0.0
      %562 = vmatprep.subr.mxu0 0.0
      %563 = vmatpush1.msra.mxu0 0.0
      %564 = vmatprep.subr.mxu0 0.0
      %565 = vmatpush1.msra.mxu0 0.0
      %566 = vmatprep.subr.mxu0 0.0
      %567 = vmatpush1.msra.mxu0 0.0
      %568 = vmatprep.subr.mxu0 0.0
      %569 = vmatpush1.msra.mxu0 0.0
      %570 = vmatprep.mubr.f32.mxu0 0.0
      %571 = vmatmul.mubr.f32.gmra.mrb[0].mxu0 %v504
      %v572 = vpop.f32.mrb[0].mxu0
      %v573 = vadd.f32 %v500, %v572
      %v574 = vpop.f32.mrb[0].mxu0
      %575 = vdwg.mxu0
      %v576 = vmax.f32 %v573, 0.0
      %v578 = vlaneseq
      %v579 = vshrl.u32 %v578, 7
      %v580 = vsub.s32 0, %v579
      %v581 = vrot.slane %v473, %v580
      %v584 = vsel %vm502, %v576, 0
      %586 = vmatprep.subr.mxu0 0.0
      %587 = vmatpush1.msra.mxu0 %v469
      %588 = vmatprep.subr.mxu0 0.0
      %589 = vmatpush1.msra.mxu0 %v470
      %590 = vmatprep.subr.mxu0 0.0
      %591 = vmatpush1.msra.mxu0 %v471
      %592 = vmatprep.subr.mxu0 0.0
      %593 = vmatpush1.msra.mxu0 %v472
      %594 = vmatprep.subr.mxu0 0.0
      %595 = vmatpush1.msra.mxu0 0.0
      %596 = vmatprep.subr.mxu0 0.0
      %597 = vmatpush1.msra.mxu0 0.0
      %598 = vmatprep.subr.mxu0 0.0
      %599 = vmatpush1.msra.mxu0 0.0
      %600 = vmatprep.subr.mxu0 0.0
      %601 = vmatpush1.msra.mxu0 0.0
      %602 = vmatprep.subr.mxu0 0.0
      %603 = vmatpush1.msra.mxu0 0.0
      %604 = vmatprep.subr.mxu0 0.0
      %605 = vmatpush1.msra.mxu0 0.0
      %606 = vmatprep.subr.mxu0 0.0
      %607 = vmatpush1.msra.mxu0 0.0
      %608 = vmatprep.subr.mxu0 0.0
      %609 = vmatpush1.msra.mxu0 0.0
      %610 = vmatprep.subr.mxu0 0.0
      %611 = vmatpush1.msra.mxu0 0.0
      %612 = vmatprep.subr.mxu0 0.0
      %613 = vmatpush1.msra.mxu0 0.0
      %614 = vmatprep.subr.mxu0 0.0
      %615 = vmatpush1.msra.mxu0 0.0
      %616 = vmatprep.subr.mxu0 0.0
      %617 = vmatpush1.msra.mxu0 0.0
      %618 = vmatprep.subr.mxu0 0.0
      %619 = vmatpush1.msra.mxu0 0.0
      %620 = vmatprep.subr.mxu0 0.0
      %621 = vmatpush1.msra.mxu0 0.0
      %622 = vmatprep.subr.mxu0 0.0
      %623 = vmatpush1.msra.mxu0 0.0
      %624 = vmatprep.subr.mxu0 0.0
      %625 = vmatpush1.msra.mxu0 0.0
      %626 = vmatprep.subr.mxu0 0.0
      %627 = vmatpush1.msra.mxu0 0.0
      %628 = vmatprep.subr.mxu0 0.0
      %629 = vmatpush1.msra.mxu0 0.0
      %630 = vmatprep.subr.mxu0 0.0
      %631 = vmatpush1.msra.mxu0 0.0
      %632 = vmatprep.subr.mxu0 0.0
      %633 = vmatpush1.msra.mxu0 0.0
      %634 = vmatprep.subr.mxu0 0.0
      %635 = vmatpush1.msra.mxu0 0.0
      %636 = vmatprep.subr.mxu0 0.0
      %637 = vmatpush1.msra.mxu0 0.0
      %638 = vmatprep.subr.mxu0 0.0
      %639 = vmatpush1.msra.mxu0 0.0
      %640 = vmatprep.subr.mxu0 0.0
      %641 = vmatpush1.msra.mxu0 0.0
      %642 = vmatprep.subr.mxu0 0.0
      %643 = vmatpush1.msra.mxu0 0.0
      %644 = vmatprep.subr.mxu0 0.0
      %645 = vmatpush1.msra.mxu0 0.0
      %646 = vmatprep.subr.mxu0 0.0
      %647 = vmatpush1.msra.mxu0 0.0
      %648 = vmatprep.subr.mxu0 0.0
      %649 = vmatpush1.msra.mxu0 0.0
      %650 = vmatprep.mubr.f32.mxu0 0.0
      %651 = vmatmul.mubr.f32.gmra.mrb[0].mxu0 %v584
      %v652 = vpop.f32.mrb[0].mxu0
      %v653 = vadd.f32 %v581, %v652
      %v654 = vpop.f32.mrb[0].mxu0
      %655 = vdwg.mxu0
      %v656 = vmax.f32 %v653, 0.0
      %v658 = vlaneseq
      %v659 = vshrl.u32 %v658, 7
      %v660 = vsub.s32 0, %v659
      %v661 = vrot.slane %v478, %v660
      %v664 = vsel %vm502, %v656, 0
      %666 = vmatprep.subr.mxu0 0.0
      %667 = vmatpush1.msra.mxu0 %v474
      %668 = vmatprep.subr.mxu0 0.0
      %669 = vmatpush1.msra.mxu0 %v475
      %670 = vmatprep.subr.mxu0 0.0
      %671 = vmatpush1.msra.mxu0 %v476
      %672 = vmatprep.subr.mxu0 0.0
      %673 = vmatpush1.msra.mxu0 %v477
      %674 = vmatprep.subr.mxu0 0.0
      %675 = vmatpush1.msra.mxu0 0.0
      %676 = vmatprep.subr.mxu0 0.0
      %677 = vmatpush1.msra.mxu0 0.0
      %678 = vmatprep.subr.mxu0 0.0
      %679 = vmatpush1.msra.mxu0 0.0
      %680 = vmatprep.subr.mxu0 0.0
      %681 = vmatpush1.msra.mxu0 0.0
      %682 = vmatprep.subr.mxu0 0.0
      %683 = vmatpush1.msra.mxu0 0.0
      %684 = vmatprep.subr.mxu0 0.0
      %685 = vmatpush1.msra.mxu0 0.0
      %686 = vmatprep.subr.mxu0 0.0
      %687 = vmatpush1.msra.mxu0 0.0
      %688 = vmatprep.subr.mxu0 0.0
      %689 = vmatpush1.msra.mxu0 0.0
      %690 = vmatprep.subr.mxu0 0.0
      %691 = vmatpush1.msra.mxu0 0.0
      %692 = vmatprep.subr.mxu0 0.0
      %693 = vmatpush1.msra.mxu0 0.0
      %694 = vmatprep.subr.mxu0 0.0
      %695 = vmatpush1.msra.mxu0 0.0
      %696 = vmatprep.subr.mxu0 0.0
      %697 = vmatpush1.msra.mxu0 0.0
      %698 = vmatprep.subr.mxu0 0.0
      %699 = vmatpush1.msra.mxu0 0.0
      %700 = vmatprep.subr.mxu0 0.0
      %701 = vmatpush1.msra.mxu0 0.0
      %702 = vmatprep.subr.mxu0 0.0
      %703 = vmatpush1.msra.mxu0 0.0
      %704 = vmatprep.subr.mxu0 0.0
      %705 = vmatpush1.msra.mxu0 0.0
      %706 = vmatprep.subr.mxu0 0.0
      %707 = vmatpush1.msra.mxu0 0.0
      %708 = vmatprep.subr.mxu0 0.0
      %709 = vmatpush1.msra.mxu0 0.0
      %710 = vmatprep.subr.mxu0 0.0
      %711 = vmatpush1.msra.mxu0 0.0
      %712 = vmatprep.subr.mxu0 0.0
      %713 = vmatpush1.msra.mxu0 0.0
      %714 = vmatprep.subr.mxu0 0.0
      %715 = vmatpush1.msra.mxu0 0.0
      %716 = vmatprep.subr.mxu0 0.0
      %717 = vmatpush1.msra.mxu0 0.0
      %718 = vmatprep.subr.mxu0 0.0
      %719 = vmatpush1.msra.mxu0 0.0
      %720 = vmatprep.subr.mxu0 0.0
      %721 = vmatpush1.msra.mxu0 0.0
      %722 = vmatprep.subr.mxu0 0.0
      %723 = vmatpush1.msra.mxu0 0.0
      %724 = vmatprep.subr.mxu0 0.0
      %725 = vmatpush1.msra.mxu0 0.0
      %726 = vmatprep.subr.mxu0 0.0
      %727 = vmatpush1.msra.mxu0 0.0
      %728 = vmatprep.subr.mxu0 0.0
      %729 = vmatpush1.msra.mxu0 0.0
      %730 = vmatprep.mubr.f32.mxu0 0.0
      %731 = vmatmul.mubr.f32.gmra.mrb[0].mxu0 %v664
      %v732 = vpop.f32.mrb[0].mxu0
      %v733 = vadd.f32 %v661, %v732
      %v734 = vpop.f32.mrb[0].mxu0
      %735 = vdwg.mxu0
      %736 = vmatprep.subr.mxu0 0.0
      %737 = vmatpush1.msra.mxu0 %v479
      %738 = vmatprep.subr.mxu0 0.0
      %739 = vmatpush1.msra.mxu0 %v480
      %740 = vmatprep.subr.mxu0 0.0
      %741 = vmatpush1.msra.mxu0 %v481
      %742 = vmatprep.subr.mxu0 0.0
      %743 = vmatpush1.msra.mxu0 %v482
      %744 = vmatprep.subr.mxu0 0.0
      %745 = vmatpush1.msra.mxu0 0.0
      %746 = vmatprep.subr.mxu0 0.0
      %747 = vmatpush1.msra.mxu0 0.0
      %748 = vmatprep.subr.mxu0 0.0
      %749 = vmatpush1.msra.mxu0 0.0
      %750 = vmatprep.subr.mxu0 0.0
      %751 = vmatpush1.msra.mxu0 0.0
      %752 = vmatprep.subr.mxu0 0.0
      %753 = vmatpush1.msra.mxu0 0.0
      %754 = vmatprep.subr.mxu0 0.0
      %755 = vmatpush1.msra.mxu0 0.0
      %756 = vmatprep.subr.mxu0 0.0
      %757 = vmatpush1.msra.mxu0 0.0
      %758 = vmatprep.subr.mxu0 0.0
      %759 = vmatpush1.msra.mxu0 0.0
      %760 = vmatprep.subr.mxu0 0.0
      %761 = vmatpush1.msra.mxu0 0.0
      %762 = vmatprep.subr.mxu0 0.0
      %763 = vmatpush1.msra.mxu0 0.0
      %764 = vmatprep.subr.mxu0 0.0
      %765 = vmatpush1.msra.mxu0 0.0
      %766 = vmatprep.subr.mxu0 0.0
      %767 = vmatpush1.msra.mxu0 0.0
      %768 = vmatprep.subr.mxu0 0.0
      %769 = vmatpush1.msra.mxu0 0.0
      %770 = vmatprep.subr.mxu0 0.0
      %771 = vmatpush1.msra.mxu0 0.0
      %772 = vmatprep.subr.mxu0 0.0
      %773 = vmatpush1.msra.mxu0 0.0
      %774 = vmatprep.subr.mxu0 0.0
      %775 = vmatpush1.msra.mxu0 0.0
      %776 = vmatprep.subr.mxu0 0.0
      %777 = vmatpush1.msra.mxu0 0.0
      %778 = vmatprep.subr.mxu0 0.0
      %779 = vmatpush1.msra.mxu0 0.0
      %780 = vmatprep.subr.mxu0 0.0
      %781 = vmatpush1.msra.mxu0 0.0
      %782 = vmatprep.subr.mxu0 0.0
      %783 = vmatpush1.msra.mxu0 0.0
      %784 = vmatprep.subr.mxu0 0.0
      %785 = vmatpush1.msra.mxu0 0.0
      %786 = vmatprep.subr.mxu0 0.0
      %787 = vmatpush1.msra.mxu0 0.0
      %788 = vmatprep.subr.mxu0 0.0
      %789 = vmatpush1.msra.mxu0 0.0
      %790 = vmatprep.subr.mxu0 0.0
      %791 = vmatpush1.msra.mxu0 0.0
      %792 = vmatprep.subr.mxu0 0.0
      %793 = vmatpush1.msra.mxu0 0.0
      %794 = vmatprep.subr.mxu0 0.0
      %795 = vmatpush1.msra.mxu0 0.0
      %796 = vmatprep.subr.mxu0 0.0
      %797 = vmatpush1.msra.mxu0 0.0
      %798 = vmatprep.subr.mxu0 0.0
      %799 = vmatpush1.msra.mxu0 0.0
      %800 = vmatprep.mubr.f32.mxu0 0.0
      %801 = vmatmul.mubr.f32.gmra.mrb[0].mxu0 %v504
      %v802 = vpop.f32.mrb[0].mxu0
      %v803 = vadd.f32 0.0, %v802
      %v804 = vpop.f32.mrb[0].mxu0
      %805 = vdwg.mxu0
      %vm806 = vcmask 23552
      %v808 = vsel %vm806, %v733, 0
      %vm810 = vcmask 1042432
      %v812 = vsel %vm810, %v483, 0
      %814 = vmatprep.subr.mxu0 0.0
      %815 = vmatpush1.msra.mxu0 %v812
      %816 = vmatprep.subr.mxu0 0.0
      %817 = vmatpush1.msra.mxu0 0.0
      %818 = vmatprep.subr.mxu0 0.0
      %819 = vmatpush1.msra.mxu0 0.0
      %820 = vmatprep.subr.mxu0 0.0
      %821 = vmatpush1.msra.mxu0 0.0
      %822 = vmatprep.subr.mxu0 0.0
      %823 = vmatpush1.msra.mxu0 0.0
      %824 = vmatprep.subr.mxu0 0.0
      %825 = vmatpush1.msra.mxu0 0.0
      %826 = vmatprep.subr.mxu0 0.0
      %827 = vmatpush1.msra.mxu0 0.0
      %828 = vmatprep.subr.mxu0 0.0
      %829 = vmatpush1.msra.mxu0 0.0
      %830 = vmatprep.subr.mxu0 0.0
      %831 = vmatpush1.msra.mxu0 0.0
      %832 = vmatprep.subr.mxu0 0.0
      %833 = vmatpush1.msra.mxu0 0.0
      %834 = vmatprep.subr.mxu0 0.0
      %835 = vmatpush1.msra.mxu0 0.0
      %836 = vmatprep.subr.mxu0 0.0
      %837 = vmatpush1.msra.mxu0 0.0
      %838 = vmatprep.subr.mxu0 0.0
      %839 = vmatpush1.msra.mxu0 0.0
      %840 = vmatprep.subr.mxu0 0.0
      %841 = vmatpush1.msra.mxu0 0.0
      %842 = vmatprep.subr.mxu0 0.0
      %843 = vmatpush1.msra.mxu0 0.0
      %844 = vmatprep.subr.mxu0 0.0
      %845 = vmatpush1.msra.mxu0 0.0
      %846 = vmatprep.subr.mxu0 0.0
      %847 = vmatpush1.msra.mxu0 0.0
      %848 = vmatprep.subr.mxu0 0.0
      %849 = vmatpush1.msra.mxu0 0.0
      %850 = vmatprep.subr.mxu0 0.0
      %851 = vmatpush1.msra.mxu0 0.0
      %852 = vmatprep.subr.mxu0 0.0
      %853 = vmatpush1.msra.mxu0 0.0
      %854 = vmatprep.subr.mxu0 0.0
      %855 = vmatpush1.msra.mxu0 0.0
      %856 = vmatprep.subr.mxu0 0.0
      %857 = vmatpush1.msra.mxu0 0.0
      %858 = vmatprep.subr.mxu0 0.0
      %859 = vmatpush1.msra.mxu0 0.0
      %860 = vmatprep.subr.mxu0 0.0
      %861 = vmatpush1.msra.mxu0 0.0
      %862 = vmatprep.subr.mxu0 0.0
      %863 = vmatpush1.msra.mxu0 0.0
      %864 = vmatprep.subr.mxu0 0.0
      %865 = vmatpush1.msra.mxu0 0.0
      %866 = vmatprep.subr.mxu0 0.0
      %867 = vmatpush1.msra.mxu0 0.0
      %868 = vmatprep.subr.mxu0 0.0
      %869 = vmatpush1.msra.mxu0 0.0
      %870 = vmatprep.subr.mxu0 0.0
      %871 = vmatpush1.msra.mxu0 0.0
      %872 = vmatprep.subr.mxu0 0.0
      %873 = vmatpush1.msra.mxu0 0.0
      %874 = vmatprep.subr.mxu0 0.0
      %875 = vmatpush1.msra.mxu0 0.0
      %876 = vmatprep.subr.mxu0 0.0
      %877 = vmatpush1.msra.mxu0 0.0
      %878 = vmatprep.mubr.f32.mxu0 0.0
      %879 = vmatmul.mubr.f32.gmra.mrb[0].mxu0 %v808
      %v880 = vpop.f32.mrb[0].mxu0
      %v881 = vadd.f32 0.0, %v880
      %v882 = vpop.f32.mrb[0].mxu0
      %883 = vdwg.mxu0
      %v884 = vadd.f32 %v803, %v881
      %v885 = vlaneseq
      %v886 = vshrl.u32 %v885, 7
      %v887 = vsub.s32 0, %v886
      %v888 = vrot.slane %v484, %v887
      %v889 = vadd.f32 %v884, %v888
      %v890 = vmax.f32 %v889, 0.0
      %v892 = vlaneseq
      %v893 = vshrl.u32 %v892, 7
      %v894 = vsub.s32 0, %v893
      %v895 = vrot.slane %v490, %v894
      %v898 = vsel %vm502, %v890, 0
      %900 = vmatprep.subr.mxu0 0.0
      %901 = vmatpush1.msra.mxu0 %v486
      %902 = vmatprep.subr.mxu0 0.0
      %903 = vmatpush1.msra.mxu0 %v487
      %904 = vmatprep.subr.mxu0 0.0
      %905 = vmatpush1.msra.mxu0 %v488
      %906 = vmatprep.subr.mxu0 0.0
      %907 = vmatpush1.msra.mxu0 %v489
      %908 = vmatprep.subr.mxu0 0.0
      %909 = vmatpush1.msra.mxu0 0.0
      %910 = vmatprep.subr.mxu0 0.0
      %911 = vmatpush1.msra.mxu0 0.0
      %912 = vmatprep.subr.mxu0 0.0
      %913 = vmatpush1.msra.mxu0 0.0
      %914 = vmatprep.subr.mxu0 0.0
      %915 = vmatpush1.msra.mxu0 0.0
      %916 = vmatprep.subr.mxu0 0.0
      %917 = vmatpush1.msra.mxu0 0.0
      %918 = vmatprep.subr.mxu0 0.0
      %919 = vmatpush1.msra.mxu0 0.0
      %920 = vmatprep.subr.mxu0 0.0
      %921 = vmatpush1.msra.mxu0 0.0
      %922 = vmatprep.subr.mxu0 0.0
      %923 = vmatpush1.msra.mxu0 0.0
      %924 = vmatprep.subr.mxu0 0.0
      %925 = vmatpush1.msra.mxu0 0.0
      %926 = vmatprep.subr.mxu0 0.0
      %927 = vmatpush1.msra.mxu0 0.0
      %928 = vmatprep.subr.mxu0 0.0
      %929 = vmatpush1.msra.mxu0 0.0
      %930 = vmatprep.subr.mxu0 0.0
      %931 = vmatpush1.msra.mxu0 0.0
      %932 = vmatprep.subr.mxu0 0.0
      %933 = vmatpush1.msra.mxu0 0.0
      %934 = vmatprep.subr.mxu0 0.0
      %935 = vmatpush1.msra.mxu0 0.0
      %936 = vmatprep.subr.mxu0 0.0
      %937 = vmatpush1.msra.mxu0 0.0
      %938 = vmatprep.subr.mxu0 0.0
      %939 = vmatpush1.msra.mxu0 0.0
      %940 = vmatprep.subr.mxu0 0.0
      %941 = vmatpush1.msra.mxu0 0.0
      %942 = vmatprep.subr.mxu0 0.0
      %943 = vmatpush1.msra.mxu0 0.0
      %944 = vmatprep.subr.mxu0 0.0
      %945 = vmatpush1.msra.mxu0 0.0
      %946 = vmatprep.subr.mxu0 0.0
      %947 = vmatpush1.msra.mxu0 0.0
      %948 = vmatprep.subr.mxu0 0.0
      %949 = vmatpush1.msra.mxu0 0.0
      %950 = vmatprep.subr.mxu0 0.0
      %951 = vmatpush1.msra.mxu0 0.0
      %952 = vmatprep.subr.mxu0 0.0
      %953 = vmatpush1.msra.mxu0 0.0
      %954 = vmatprep.subr.mxu0 0.0
      %955 = vmatpush1.msra.mxu0 0.0
      %956 = vmatprep.subr.mxu0 0.0
      %957 = vmatpush1.msra.mxu0 0.0
      %958 = vmatprep.subr.mxu0 0.0
      %959 = vmatpush1.msra.mxu0 0.0
      %960 = vmatprep.subr.mxu0 0.0
      %961 = vmatpush1.msra.mxu0 0.0
      %962 = vmatprep.subr.mxu0 0.0
      %963 = vmatpush1.msra.mxu0 0.0
      %964 = vmatprep.mubr.f32.mxu0 0.0
      %965 = vmatmul.mubr.f32.gmra.mrb[0].mxu0 %v898
      %v966 = vpop.f32.mrb[0].mxu0
      %v967 = vadd.f32 %v895, %v966
      %v968 = vpop.f32.mrb[0].mxu0
      %969 = vdwg.mxu0
      %v970 = vmax.f32 %v967, 0.0
      %v972 = vlaneseq
      %v973 = vshrl.u32 %v972, 7
      %v974 = vsub.s32 0, %v973
      %v975 = vrot.slane %v495, %v974
      %v978 = vsel %vm502, %v970, 0
      %980 = vmatprep.subr.mxu0 0.0
      %981 = vmatpush1.msra.mxu0 %v491
      %982 = vmatprep.subr.mxu0 0.0
      %983 = vmatpush1.msra.mxu0 %v492
      %984 = vmatprep.subr.mxu0 0.0
      %985 = vmatpush1.msra.mxu0 %v493
      %986 = vmatprep.subr.mxu0 0.0
      %987 = vmatpush1.msra.mxu0 %v494
      %988 = vmatprep.subr.mxu0 0.0
      %989 = vmatpush1.msra.mxu0 0.0
      %990 = vmatprep.subr.mxu0 0.0
      %991 = vmatpush1.msra.mxu0 0.0
      %992 = vmatprep.subr.mxu0 0.0
      %993 = vmatpush1.msra.mxu0 0.0
      %994 = vmatprep.subr.mxu0 0.0
      %995 = vmatpush1.msra.mxu0 0.0
      %996 = vmatprep.subr.mxu0 0.0
      %997 = vmatpush1.msra.mxu0 0.0
      %998 = vmatprep.subr.mxu0 0.0
      %999 = vmatpush1.msra.mxu0 0.0
      %1000 = vmatprep.subr.mxu0 0.0
      %1001 = vmatpush1.msra.mxu0 0.0
      %1002 = vmatprep.subr.mxu0 0.0
      %1003 = vmatpush1.msra.mxu0 0.0
      %1004 = vmatprep.subr.mxu0 0.0
      %1005 = vmatpush1.msra.mxu0 0.0
      %1006 = vmatprep.subr.mxu0 0.0
      %1007 = vmatpush1.msra.mxu0 0.0
      %1008 = vmatprep.subr.mxu0 0.0
      %1009 = vmatpush1.msra.mxu0 0.0
      %1010 = vmatprep.subr.mxu0 0.0
      %1011 = vmatpush1.msra.mxu0 0.0
      %1012 = vmatprep.subr.mxu0 0.0
      %1013 = vmatpush1.msra.mxu0 0.0
      %1014 = vmatprep.subr.mxu0 0.0
      %1015 = vmatpush1.msra.mxu0 0.0
      %1016 = vmatprep.subr.mxu0 0.0
      %1017 = vmatpush1.msra.mxu0 0.0
      %1018 = vmatprep.subr.mxu0 0.0
      %1019 = vmatpush1.msra.mxu0 0.0
      %1020 = vmatprep.subr.mxu0 0.0
      %1021 = vmatpush1.msra.mxu0 0.0
      %1022 = vmatprep.subr.mxu0 0.0
      %1023 = vmatpush1.msra.mxu0 0.0
      %1024 = vmatprep.subr.mxu0 0.0
      %1025 = vmatpush1.msra.mxu0 0.0
      %1026 = vmatprep.subr.mxu0 0.0
      %1027 = vmatpush1.msra.mxu0 0.0
      %1028 = vmatprep.subr.mxu0 0.0
      %1029 = vmatpush1.msra.mxu0 0.0
      %1030 = vmatprep.subr.mxu0 0.0
      %1031 = vmatpush1.msra.mxu0 0.0
      %1032 = vmatprep.subr.mxu0 0.0
      %1033 = vmatpush1.msra.mxu0 0.0
      %1034 = vmatprep.subr.mxu0 0.0
      %1035 = vmatpush1.msra.mxu0 0.0
      %1036 = vmatprep.subr.mxu0 0.0
      %1037 = vmatpush1.msra.mxu0 0.0
      %1038 = vmatprep.subr.mxu0 0.0
      %1039 = vmatpush1.msra.mxu0 0.0
      %1040 = vmatprep.subr.mxu0 0.0
      %1041 = vmatpush1.msra.mxu0 0.0
      %1042 = vmatprep.subr.mxu0 0.0
      %1043 = vmatpush1.msra.mxu0 0.0
      %1044 = vmatprep.mubr.f32.mxu0 0.0
      %1045 = vmatmul.mubr.f32.gmra.mrb[0].mxu0 %v978
      %v1046 = vpop.f32.mrb[0].mxu0
      %v1047 = vadd.f32 %v975, %v1046
      %v1048 = vpop.f32.mrb[0].mxu0
      %1049 = vdwg.mxu0
      %v1050 = vadd.f32 %v1047, %v733
      %v1051 = vlaneseq
      %v1052 = vshrl.u32 %v1051, 7
      %v1053 = vsub.s32 1, %v1052
      %v1054 = vrot.slane %v484, %v1053
      %v1055 = vadd.f32 %v884, %v1054
      %v1056 = vmax.f32 %v1055, 0.0
      %v1058 = vsel %vm502, %v1056, 0
      %1060 = vmatprep.subr.mxu0 0.0
      %1061 = vmatpush1.msra.mxu0 %v486
      %1062 = vmatprep.subr.mxu0 0.0
      %1063 = vmatpush1.msra.mxu0 %v487
      %1064 = vmatprep.subr.mxu0 0.0
      %1065 = vmatpush1.msra.mxu0 %v488
      %1066 = vmatprep.subr.mxu0 0.0
      %1067 = vmatpush1.msra.mxu0 %v489
      %1068 = vmatprep.subr.mxu0 0.0
      %1069 = vmatpush1.msra.mxu0 0.0
      %1070 = vmatprep.subr.mxu0 0.0
      %1071 = vmatpush1.msra.mxu0 0.0
      %1072 = vmatprep.subr.mxu0 0.0
      %1073 = vmatpush1.msra.mxu0 0.0
      %1074 = vmatprep.subr.mxu0 0.0
      %1075 = vmatpush1.msra.mxu0 0.0
      %1076 = vmatprep.subr.mxu0 0.0
      %1077 = vmatpush1.msra.mxu0 0.0
      %1078 = vmatprep.subr.mxu0 0.0
      %1079 = vmatpush1.msra.mxu0 0.0
      %1080 = vmatprep.subr.mxu0 0.0
      %1081 = vmatpush1.msra.mxu0 0.0
      %1082 = vmatprep.subr.mxu0 0.0
      %1083 = vmatpush1.msra.mxu0 0.0
      %1084 = vmatprep.subr.mxu0 0.0
      %1085 = vmatpush1.msra.mxu0 0.0
      %1086 = vmatprep.subr.mxu0 0.0
      %1087 = vmatpush1.msra.mxu0 0.0
      %1088 = vmatprep.subr.mxu0 0.0
      %1089 = vmatpush1.msra.mxu0 0.0
      %1090 = vmatprep.subr.mxu0 0.0
      %1091 = vmatpush1.msra.mxu0 0.0
      %1092 = vmatprep.subr.mxu0 0.0
      %1093 = vmatpush1.msra.mxu0 0.0
      %1094 = vmatprep.subr.mxu0 0.0
      %1095 = vmatpush1.msra.mxu0 0.0
      %1096 = vmatprep.subr.mxu0 0.0
      %1097 = vmatpush1.msra.mxu0 0.0
      %1098 = vmatprep.subr.mxu0 0.0
      %1099 = vmatpush1.msra.mxu0 0.0
      %1100 = vmatprep.subr.mxu0 0.0
      %1101 = vmatpush1.msra.mxu0 0.0
      %1102 = vmatprep.subr.mxu0 0.0
      %1103 = vmatpush1.msra.mxu0 0.0
      %1104 = vmatprep.subr.mxu0 0.0
      %1105 = vmatpush1.msra.mxu0 0.0
      %1106 = vmatprep.subr.mxu0 0.0
      %1107 = vmatpush1.msra.mxu0 0.0
      %1108 = vmatprep.subr.mxu0 0.0
      %1109 = vmatpush1.msra.mxu0 0.0
      %1110 = vmatprep.subr.mxu0 0.0
      %1111 = vmatpush1.msra.mxu0 0.0
      %1112 = vmatprep.subr.mxu0 0.0
      %1113 = vmatpush1.msra.mxu0 0.0
      %1114 = vmatprep.subr.mxu0 0.0
      %1115 = vmatpush1.msra.mxu0 0.0
      %1116 = vmatprep.subr.mxu0 0.0
      %1117 = vmatpush1.msra.mxu0 0.0
      %1118 = vmatprep.subr.mxu0 0.0
      %1119 = vmatpush1.msra.mxu0 0.0
      %1120 = vmatprep.subr.mxu0 0.0
      %1121 = vmatpush1.msra.mxu0 0.0
      %1122 = vmatprep.subr.mxu0 0.0
      %1123 = vmatpush1.msra.mxu0 0.0
      %1124 = vmatprep.mubr.f32.mxu0 0.0
      %1125 = vmatmul.mubr.f32.gmra.mrb[0].mxu0 %v1058
      %v1126 = vpop.f32.mrb[0].mxu0
      %v1127 = vadd.f32 %v895, %v1126
      %v1128 = vpop.f32.mrb[0].mxu0
      %1129 = vdwg.mxu0
      %v1130 = vmax.f32 %v1127, 0.0
      %v1132 = vsel %vm502, %v1130, 0
      %1134 = vmatprep.subr.mxu0 0.0
      %1135 = vmatpush1.msra.mxu0 %v491
      %1136 = vmatprep.subr.mxu0 0.0
      %1137 = vmatpush1.msra.mxu0 %v492
      %1138 = vmatprep.subr.mxu0 0.0
      %1139 = vmatpush1.msra.mxu0 %v493
      %1140 = vmatprep.subr.mxu0 0.0
      %1141 = vmatpush1.msra.mxu0 %v494
      %1142 = vmatprep.subr.mxu0 0.0
      %1143 = vmatpush1.msra.mxu0 0.0
      %1144 = vmatprep.subr.mxu0 0.0
      %1145 = vmatpush1.msra.mxu0 0.0
      %1146 = vmatprep.subr.mxu0 0.0
      %1147 = vmatpush1.msra.mxu0 0.0
      %1148 = vmatprep.subr.mxu0 0.0
      %1149 = vmatpush1.msra.mxu0 0.0
      %1150 = vmatprep.subr.mxu0 0.0
      %1151 = vmatpush1.msra.mxu0 0.0
      %1152 = vmatprep.subr.mxu0 0.0
      %1153 = vmatpush1.msra.mxu0 0.0
      %1154 = vmatprep.subr.mxu0 0.0
      %1155 = vmatpush1.msra.mxu0 0.0
      %1156 = vmatprep.subr.mxu0 0.0
      %1157 = vmatpush1.msra.mxu0 0.0
      %1158 = vmatprep.subr.mxu0 0.0
      %1159 = vmatpush1.msra.mxu0 0.0
      %1160 = vmatprep.subr.mxu0 0.0
      %1161 = vmatpush1.msra.mxu0 0.0
      %1162 = vmatprep.subr.mxu0 0.0
      %1163 = vmatpush1.msra.mxu0 0.0
      %1164 = vmatprep.subr.mxu0 0.0
      %1165 = vmatpush1.msra.mxu0 0.0
      %1166 = vmatprep.subr.mxu0 0.0
      %1167 = vmatpush1.msra.mxu0 0.0
      %1168 = vmatprep.subr.mxu0 0.0
      %1169 = vmatpush1.msra.mxu0 0.0
      %1170 = vmatprep.subr.mxu0 0.0
      %1171 = vmatpush1.msra.mxu0 0.0
      %1172 = vmatprep.subr.mxu0 0.0
      %1173 = vmatpush1.msra.mxu0 0.0
      %1174 = vmatprep.subr.mxu0 0.0
      %1175 = vmatpush1.msra.mxu0 0.0
      %1176 = vmatprep.subr.mxu0 0.0
      %1177 = vmatpush1.msra.mxu0 0.0
      %1178 = vmatprep.subr.mxu0 0.0
      %1179 = vmatpush1.msra.mxu0 0.0
      %1180 = vmatprep.subr.mxu0 0.0
      %1181 = vmatpush1.msra.mxu0 0.0
      %1182 = vmatprep.subr.mxu0 0.0
      %1183 = vmatpush1.msra.mxu0 0.0
      %1184 = vmatprep.subr.mxu0 0.0
      %1185 = vmatpush1.msra.mxu0 0.0
      %1186 = vmatprep.subr.mxu0 0.0
      %1187 = vmatpush1.msra.mxu0 0.0
      %1188 = vmatprep.subr.mxu0 0.0
      %1189 = vmatpush1.msra.mxu0 0.0
      %1190 = vmatprep.subr.mxu0 0.0
      %1191 = vmatpush1.msra.mxu0 0.0
      %1192 = vmatprep.subr.mxu0 0.0
      %1193 = vmatpush1.msra.mxu0 0.0
      %1194 = vmatprep.subr.mxu0 0.0
      %1195 = vmatpush1.msra.mxu0 0.0
      %1196 = vmatprep.subr.mxu0 0.0
      %1197 = vmatpush1.msra.mxu0 0.0
      %1198 = vmatprep.mubr.f32.mxu0 0.0
      %1199 = vmatmul.mubr.f32.gmra.mrb[0].mxu0 %v1132
      %v1200 = vpop.f32.mrb[0].mxu0
      %v1201 = vadd.f32 %v975, %v1200
      %v1202 = vpop.f32.mrb[0].mxu0
      %1203 = vdwg.mxu0
      %v1204 = vadd.f32 %v1201, %v733
      %v1205 = vlaneseq
      %v1206 = vshrl.u32 %v1205, 7
      %v1207 = vsub.s32 2, %v1206
      %v1208 = vrot.slane %v484, %v1207
      %v1209 = vadd.f32 %v884, %v1208
      %v1210 = vmax.f32 %v1209, 0.0
      %v1212 = vsel %vm502, %v1210, 0
      %1214 = vmatprep.subr.mxu0 0.0
      %1215 = vmatpush1.msra.mxu0 %v486
      %1216 = vmatprep.subr.mxu0 0.0
      %1217 = vmatpush1.msra.mxu0 %v487
      %1218 = vmatprep.subr.mxu0 0.0
      %1219 = vmatpush1.msra.mxu0 %v488
      %1220 = vmatprep.subr.mxu0 0.0
      %1221 = vmatpush1.msra.mxu0 %v489
      %1222 = vmatprep.subr.mxu0 0.0
      %1223 = vmatpush1.msra.mxu0 0.0
      %1224 = vmatprep.subr.mxu0 0.0
      %1225 = vmatpush1.msra.mxu0 0.0
      %1226 = vmatprep.subr.mxu0 0.0
      %1227 = vmatpush1.msra.mxu0 0.0
      %1228 = vmatprep.subr.mxu0 0.0
      %1229 = vmatpush1.msra.mxu0 0.0
      %1230 = vmatprep.subr.mxu0 0.0
      %1231 = vmatpush1.msra.mxu0 0.0
      %1232 = vmatprep.subr.mxu0 0.0
      %1233 = vmatpush1.msra.mxu0 0.0
      %1234 = vmatprep.subr.mxu0 0.0
      %1235 = vmatpush1.msra.mxu0 0.0
      %1236 = vmatprep.subr.mxu0 0.0
      %1237 = vmatpush1.msra.mxu0 0.0
      %1238 = vmatprep.subr.mxu0 0.0
      %1239 = vmatpush1.msra.mxu0 0.0
      %1240 = vmatprep.subr.mxu0 0.0
      %1241 = vmatpush1.msra.mxu0 0.0
      %1242 = vmatprep.subr.mxu0 0.0
      %1243 = vmatpush1.msra.mxu0 0.0
      %1244 = vmatprep.subr.mxu0 0.0
      %1245 = vmatpush1.msra.mxu0 0.0
      %1246 = vmatprep.subr.mxu0 0.0
      %1247 = vmatpush1.msra.mxu0 0.0
      %1248 = vmatprep.subr.mxu0 0.0
      %1249 = vmatpush1.msra.mxu0 0.0
      %1250 = vmatprep.subr.mxu0 0.0
      %1251 = vmatpush1.msra.mxu0 0.0
      %1252 = vmatprep.subr.mxu0 0.0
      %1253 = vmatpush1.msra.mxu0 0.0
      %1254 = vmatprep.subr.mxu0 0.0
      %1255 = vmatpush1.msra.mxu0 0.0
      %1256 = vmatprep.subr.mxu0 0.0
      %1257 = vmatpush1.msra.mxu0 0.0
      %1258 = vmatprep.subr.mxu0 0.0
      %1259 = vmatpush1.msra.mxu0 0.0
      %1260 = vmatprep.subr.mxu0 0.0
      %1261 = vmatpush1.msra.mxu0 0.0
      %1262 = vmatprep.subr.mxu0 0.0
      %1263 = vmatpush1.msra.mxu0 0.0
      %1264 = vmatprep.subr.mxu0 0.0
      %1265 = vmatpush1.msra.mxu0 0.0
      %1266 = vmatprep.subr.mxu0 0.0
      %1267 = vmatpush1.msra.mxu0 0.0
      %1268 = vmatprep.subr.mxu0 0.0
      %1269 = vmatpush1.msra.mxu0 0.0
      %1270 = vmatprep.subr.mxu0 0.0
      %1271 = vmatpush1.msra.mxu0 0.0
      %1272 = vmatprep.subr.mxu0 0.0
      %1273 = vmatpush1.msra.mxu0 0.0
      %1274 = vmatprep.subr.mxu0 0.0
      %1275 = vmatpush1.msra.mxu0 0.0
      %1276 = vmatprep.subr.mxu0 0.0
      %1277 = vmatpush1.msra.mxu0 0.0
      %1278 = vmatprep.mubr.f32.mxu0 0.0
      %1279 = vmatmul.mubr.f32.gmra.mrb[0].mxu0 %v1212
      %v1280 = vpop.f32.mrb[0].mxu0
      %v1281 = vadd.f32 %v895, %v1280
      %v1282 = vpop.f32.mrb[0].mxu0
      %1283 = vdwg.mxu0
      %v1284 = vmax.f32 %v1281, 0.0
      %v1286 = vsel %vm502, %v1284, 0
      %1288 = vmatprep.subr.mxu0 0.0
      %1289 = vmatpush1.msra.mxu0 %v491
      %1290 = vmatprep.subr.mxu0 0.0
      %1291 = vmatpush1.msra.mxu0 %v492
      %1292 = vmatprep.subr.mxu0 0.0
      %1293 = vmatpush1.msra.mxu0 %v493
      %1294 = vmatprep.subr.mxu0 0.0
      %1295 = vmatpush1.msra.mxu0 %v494
      %1296 = vmatprep.subr.mxu0 0.0
      %1297 = vmatpush1.msra.mxu0 0.0
      %1298 = vmatprep.subr.mxu0 0.0
      %1299 = vmatpush1.msra.mxu0 0.0
      %1300 = vmatprep.subr.mxu0 0.0
      %1301 = vmatpush1.msra.mxu0 0.0
      %1302 = vmatprep.subr.mxu0 0.0
      %1303 = vmatpush1.msra.mxu0 0.0
      %1304 = vmatprep.subr.mxu0 0.0
      %1305 = vmatpush1.msra.mxu0 0.0
      %1306 = vmatprep.subr.mxu0 0.0
      %1307 = vmatpush1.msra.mxu0 0.0
      %1308 = vmatprep.subr.mxu0 0.0
      %1309 = vmatpush1.msra.mxu0 0.0
      %1310 = vmatprep.subr.mxu0 0.0
      %1311 = vmatpush1.msra.mxu0 0.0
      %1312 = vmatprep.subr.mxu0 0.0
      %1313 = vmatpush1.msra.mxu0 0.0
      %1314 = vmatprep.subr.mxu0 0.0
      %1315 = vmatpush1.msra.mxu0 0.0
      %1316 = vmatprep.subr.mxu0 0.0
      %1317 = vmatpush1.msra.mxu0 0.0
      %1318 = vmatprep.subr.mxu0 0.0
      %1319 = vmatpush1.msra.mxu0 0.0
      %1320 = vmatprep.subr.mxu0 0.0
      %1321 = vmatpush1.msra.mxu0 0.0
      %1322 = vmatprep.subr.mxu0 0.0
      %1323 = vmatpush1.msra.mxu0 0.0
      %1324 = vmatprep.subr.mxu0 0.0
      %1325 = vmatpush1.msra.mxu0 0.0
      %1326 = vmatprep.subr.mxu0 0.0
      %1327 = vmatpush1.msra.mxu0 0.0
      %1328 = vmatprep.subr.mxu0 0.0
      %1329 = vmatpush1.msra.mxu0 0.0
      %1330 = vmatprep.subr.mxu0 0.0
      %1331 = vmatpush1.msra.mxu0 0.0
      %1332 = vmatprep.subr.mxu0 0.0
      %1333 = vmatpush1.msra.mxu0 0.0
      %1334 = vmatprep.subr.mxu0 0.0
      %1335 = vmatpush1.msra.mxu0 0.0
      %1336 = vmatprep.subr.mxu0 0.0
      %1337 = vmatpush1.msra.mxu0 0.0
      %1338 = vmatprep.subr.mxu0 0.0
      %1339 = vmatpush1.msra.mxu0 0.0
      %1340 = vmatprep.subr.mxu0 0.0
      %1341 = vmatpush1.msra.mxu0 0.0
      %1342 = vmatprep.subr.mxu0 0.0
      %1343 = vmatpush1.msra.mxu0 0.0
      %1344 = vmatprep.subr.mxu0 0.0
      %1345 = vmatpush1.msra.mxu0 0.0
      %1346 = vmatprep.subr.mxu0 0.0
      %1347 = vmatpush1.msra.mxu0 0.0
      %1348 = vmatprep.subr.mxu0 0.0
      %1349 = vmatpush1.msra.mxu0 0.0
      %1350 = vmatprep.subr.mxu0 0.0
      %1351 = vmatpush1.msra.mxu0 0.0
      %1352 = vmatprep.mubr.f32.mxu0 0.0
      %1353 = vmatmul.mubr.f32.gmra.mrb[0].mxu0 %v1286
      %v1354 = vpop.f32.mrb[0].mxu0
      %v1355 = vadd.f32 %v975, %v1354
      %v1356 = vpop.f32.mrb[0].mxu0
      %1357 = vdwg.mxu0
      %v1358 = vadd.f32 %v1355, %v733
      %v1359 = vlaneseq
      %v1360 = vshrl.u32 %v1359, 7
      %v1361 = vsub.s32 3, %v1360
      %v1362 = vrot.slane %v484, %v1361
      %v1363 = vadd.f32 %v884, %v1362
      %v1364 = vmax.f32 %v1363, 0.0
      %v1366 = vsel %vm502, %v1364, 0
      %1368 = vmatprep.subr.mxu0 0.0
      %1369 = vmatpush1.msra.mxu0 %v486
      %1370 = vmatprep.subr.mxu0 0.0
      %1371 = vmatpush1.msra.mxu0 %v487
      %1372 = vmatprep.subr.mxu0 0.0
      %1373 = vmatpush1.msra.mxu0 %v488
      %1374 = vmatprep.subr.mxu0 0.0
      %1375 = vmatpush1.msra.mxu0 %v489
      %1376 = vmatprep.subr.mxu0 0.0
      %1377 = vmatpush1.msra.mxu0 0.0
      %1378 = vmatprep.subr.mxu0 0.0
      %1379 = vmatpush1.msra.mxu0 0.0
      %1380 = vmatprep.subr.mxu0 0.0
      %1381 = vmatpush1.msra.mxu0 0.0
      %1382 = vmatprep.subr.mxu0 0.0
      %1383 = vmatpush1.msra.mxu0 0.0
      %1384 = vmatprep.subr.mxu0 0.0
      %1385 = vmatpush1.msra.mxu0 0.0
      %1386 = vmatprep.subr.mxu0 0.0
      %1387 = vmatpush1.msra.mxu0 0.0
      %1388 = vmatprep.subr.mxu0 0.0
      %1389 = vmatpush1.msra.mxu0 0.0
      %1390 = vmatprep.subr.mxu0 0.0
      %1391 = vmatpush1.msra.mxu0 0.0
      %1392 = vmatprep.subr.mxu0 0.0
      %1393 = vmatpush1.msra.mxu0 0.0
      %1394 = vmatprep.subr.mxu0 0.0
      %1395 = vmatpush1.msra.mxu0 0.0
      %1396 = vmatprep.subr.mxu0 0.0
      %1397 = vmatpush1.msra.mxu0 0.0
      %1398 = vmatprep.subr.mxu0 0.0
      %1399 = vmatpush1.msra.mxu0 0.0
      %1400 = vmatprep.subr.mxu0 0.0
      %1401 = vmatpush1.msra.mxu0 0.0
      %1402 = vmatprep.subr.mxu0 0.0
      %1403 = vmatpush1.msra.mxu0 0.0
      %1404 = vmatprep.subr.mxu0 0.0
      %1405 = vmatpush1.msra.mxu0 0.0
      %1406 = vmatprep.subr.mxu0 0.0
      %1407 = vmatpush1.msra.mxu0 0.0
      %1408 = vmatprep.subr.mxu0 0.0
      %1409 = vmatpush1.msra.mxu0 0.0
      %1410 = vmatprep.subr.mxu0 0.0
      %1411 = vmatpush1.msra.mxu0 0.0
      %1412 = vmatprep.subr.mxu0 0.0
      %1413 = vmatpush1.msra.mxu0 0.0
      %1414 = vmatprep.subr.mxu0 0.0
      %1415 = vmatpush1.msra.mxu0 0.0
      %1416 = vmatprep.subr.mxu0 0.0
      %1417 = vmatpush1.msra.mxu0 0.0
      %1418 = vmatprep.subr.mxu0 0.0
      %1419 = vmatpush1.msra.mxu0 0.0
      %1420 = vmatprep.subr.mxu0 0.0
      %1421 = vmatpush1.msra.mxu0 0.0
      %1422 = vmatprep.subr.mxu0 0.0
      %1423 = vmatpush1.msra.mxu0 0.0
      %1424 = vmatprep.subr.mxu0 0.0
      %1425 = vmatpush1.msra.mxu0 0.0
      %1426 = vmatprep.subr.mxu0 0.0
      %1427 = vmatpush1.msra.mxu0 0.0
      %1428 = vmatprep.subr.mxu0 0.0
      %1429 = vmatpush1.msra.mxu0 0.0
      %1430 = vmatprep.subr.mxu0 0.0
      %1431 = vmatpush1.msra.mxu0 0.0
      %1432 = vmatprep.mubr.f32.mxu0 0.0
      %1433 = vmatmul.mubr.f32.gmra.mrb[0].mxu0 %v1366
      %v1434 = vpop.f32.mrb[0].mxu0
      %v1435 = vadd.f32 %v895, %v1434
      %v1436 = vpop.f32.mrb[0].mxu0
      %1437 = vdwg.mxu0
      %v1438 = vmax.f32 %v1435, 0.0
      %v1440 = vsel %vm502, %v1438, 0
      %1442 = vmatprep.subr.mxu0 0.0
      %1443 = vmatpush1.msra.mxu0 %v491
      %1444 = vmatprep.subr.mxu0 0.0
      %1445 = vmatpush1.msra.mxu0 %v492
      %1446 = vmatprep.subr.mxu0 0.0
      %1447 = vmatpush1.msra.mxu0 %v493
      %1448 = vmatprep.subr.mxu0 0.0
      %1449 = vmatpush1.msra.mxu0 %v494
      %1450 = vmatprep.subr.mxu0 0.0
      %1451 = vmatpush1.msra.mxu0 0.0
      %1452 = vmatprep.subr.mxu0 0.0
      %1453 = vmatpush1.msra.mxu0 0.0
      %1454 = vmatprep.subr.mxu0 0.0
      %1455 = vmatpush1.msra.mxu0 0.0
      %1456 = vmatprep.subr.mxu0 0.0
      %1457 = vmatpush1.msra.mxu0 0.0
      %1458 = vmatprep.subr.mxu0 0.0
      %1459 = vmatpush1.msra.mxu0 0.0
      %1460 = vmatprep.subr.mxu0 0.0
      %1461 = vmatpush1.msra.mxu0 0.0
      %1462 = vmatprep.subr.mxu0 0.0
      %1463 = vmatpush1.msra.mxu0 0.0
      %1464 = vmatprep.subr.mxu0 0.0
      %1465 = vmatpush1.msra.mxu0 0.0
      %1466 = vmatprep.subr.mxu0 0.0
      %1467 = vmatpush1.msra.mxu0 0.0
      %1468 = vmatprep.subr.mxu0 0.0
      %1469 = vmatpush1.msra.mxu0 0.0
      %1470 = vmatprep.subr.mxu0 0.0
      %1471 = vmatpush1.msra.mxu0 0.0
      %1472 = vmatprep.subr.mxu0 0.0
      %1473 = vmatpush1.msra.mxu0 0.0
      %1474 = vmatprep.subr.mxu0 0.0
      %1475 = vmatpush1.msra.mxu0 0.0
      %1476 = vmatprep.subr.mxu0 0.0
      %1477 = vmatpush1.msra.mxu0 0.0
      %1478 = vmatprep.subr.mxu0 0.0
      %1479 = vmatpush1.msra.mxu0 0.0
      %1480 = vmatprep.subr.mxu0 0.0
      %1481 = vmatpush1.msra.mxu0 0.0
      %1482 = vmatprep.subr.mxu0 0.0
      %1483 = vmatpush1.msra.mxu0 0.0
      %1484 = vmatprep.subr.mxu0 0.0
      %1485 = vmatpush1.msra.mxu0 0.0
      %1486 = vmatprep.subr.mxu0 0.0
      %1487 = vmatpush1.msra.mxu0 0.0
      %1488 = vmatprep.subr.mxu0 0.0
      %1489 = vmatpush1.msra.mxu0 0.0
      %1490 = vmatprep.subr.mxu0 0.0
      %1491 = vmatpush1.msra.mxu0 0.0
      %1492 = vmatprep.subr.mxu0 0.0
      %1493 = vmatpush1.msra.mxu0 0.0
      %1494 = vmatprep.subr.mxu0 0.0
      %1495 = vmatpush1.msra.mxu0 0.0
      %1496 = vmatprep.subr.mxu0 0.0
      %1497 = vmatpush1.msra.mxu0 0.0
      %1498 = vmatprep.subr.mxu0 0.0
      %1499 = vmatpush1.msra.mxu0 0.0
      %1500 = vmatprep.subr.mxu0 0.0
      %1501 = vmatpush1.msra.mxu0 0.0
      %1502 = vmatprep.subr.mxu0 0.0
      %1503 = vmatpush1.msra.mxu0 0.0
      %1504 = vmatprep.subr.mxu0 0.0
      %1505 = vmatpush1.msra.mxu0 0.0
      %1506 = vmatprep.mubr.f32.mxu0 0.0
      %1507 = vmatmul.mubr.f32.gmra.mrb[0].mxu0 %v1440
      %v1508 = vpop.f32.mrb[0].mxu0
      %v1509 = vadd.f32 %v975, %v1508
      %v1510 = vpop.f32.mrb[0].mxu0
      %1511 = vdwg.mxu0
      %v1512 = vadd.f32 %v1509, %v733
      %1513 = vrot.lane.b32.xlu0 %v733, 125
      %v1514 = vpop.permute.xlu0 %1513
      %v1515 = vsel %vm806, %v1514, 0
      %1517 = vmatprep.subr.mxu0 0.0
      %1518 = vmatpush1.msra.mxu0 %v812
      %1519 = vmatprep.subr.mxu0 0.0
      %1520 = vmatpush1.msra.mxu0 0.0
      %1521 = vmatprep.subr.mxu0 0.0
      %1522 = vmatpush1.msra.mxu0 0.0
      %1523 = vmatprep.subr.mxu0 0.0
      %1524 = vmatpush1.msra.mxu0 0.0
      %1525 = vmatprep.subr.mxu0 0.0
      %1526 = vmatpush1.msra.mxu0 0.0
      %1527 = vmatprep.subr.mxu0 0.0
      %1528 = vmatpush1.msra.mxu0 0.0
      %1529 = vmatprep.subr.mxu0 0.0
      %1530 = vmatpush1.msra.mxu0 0.0
      %1531 = vmatprep.subr.mxu0 0.0
      %1532 = vmatpush1.msra.mxu0 0.0
      %1533 = vmatprep.subr.mxu0 0.0
      %1534 = vmatpush1.msra.mxu0 0.0
      %1535 = vmatprep.subr.mxu0 0.0
      %1536 = vmatpush1.msra.mxu0 0.0
      %1537 = vmatprep.subr.mxu0 0.0
      %1538 = vmatpush1.msra.mxu0 0.0
      %1539 = vmatprep.subr.mxu0 0.0
      %1540 = vmatpush1.msra.mxu0 0.0
      %1541 = vmatprep.subr.mxu0 0.0
      %1542 = vmatpush1.msra.mxu0 0.0
      %1543 = vmatprep.subr.mxu0 0.0
      %1544 = vmatpush1.msra.mxu0 0.0
      %1545 = vmatprep.subr.mxu0 0.0
      %1546 = vmatpush1.msra.mxu0 0.0
      %1547 = vmatprep.subr.mxu0 0.0
      %1548 = vmatpush1.msra.mxu0 0.0
      %1549 = vmatprep.subr.mxu0 0.0
      %1550 = vmatpush1.msra.mxu0 0.0
      %1551 = vmatprep.subr.mxu0 0.0
      %1552 = vmatpush1.msra.mxu0 0.0
      %1553 = vmatprep.subr.mxu0 0.0
      %1554 = vmatpush1.msra.mxu0 0.0
      %1555 = vmatprep.subr.mxu0 0.0
      %1556 = vmatpush1.msra.mxu0 0.0
      %1557 = vmatprep.subr.mxu0 0.0
      %1558 = vmatpush1.msra.mxu0 0.0
      %1559 = vmatprep.subr.mxu0 0.0
      %1560 = vmatpush1.msra.mxu0 0.0
      %1561 = vmatprep.subr.mxu0 0.0
      %1562 = vmatpush1.msra.mxu0 0.0
      %1563 = vmatprep.subr.mxu0 0.0
      %1564 = vmatpush1.msra.mxu0 0.0
      %1565 = vmatprep.subr.mxu0 0.0
      %1566 = vmatpush1.msra.mxu0 0.0
      %1567 = vmatprep.subr.mxu0 0.0
      %1568 = vmatpush1.msra.mxu0 0.0
      %1569 = vmatprep.subr.mxu0 0.0
      %1570 = vmatpush1.msra.mxu0 0.0
      %1571 = vmatprep.subr.mxu0 0.0
      %1572 = vmatpush1.msra.mxu0 0.0
      %1573 = vmatprep.subr.mxu0 0.0
      %1574 = vmatpush1.msra.mxu0 0.0
      %1575 = vmatprep.subr.mxu0 0.0
      %1576 = vmatpush1.msra.mxu0 0.0
      %1577 = vmatprep.subr.mxu0 0.0
      %1578 = vmatpush1.msra.mxu0 0.0
      %1579 = vmatprep.subr.mxu0 0.0
      %1580 = vmatpush1.msra.mxu0 0.0
      %1581 = vmatprep.mubr.f32.mxu0 0.0
      %1582 = vmatmul.mubr.f32.gmra.mrb[0].mxu0 %v1515
      %v1583 = vpop.f32.mrb[0].mxu0
      %v1584 = vadd.f32 0.0, %v1583
      %v1585 = vpop.f32.mrb[0].mxu0
      %1586 = vdwg.mxu0
      %v1587 = vadd.f32 %v803, %v1584
      %v1588 = vlaneseq
      %v1589 = vshrl.u32 %v1588, 7
      %v1590 = vsub.s32 4, %v1589
      %v1591 = vrot.slane %v484, %v1590
      %v1592 = vadd.f32 %v1587, %v1591
      %v1593 = vmax.f32 %v1592, 0.0
      %v1595 = vsel %vm502, %v1593, 0
      %1597 = vmatprep.subr.mxu0 0.0
      %1598 = vmatpush1.msra.mxu0 %v486
      %1599 = vmatprep.subr.mxu0 0.0
      %1600 = vmatpush1.msra.mxu0 %v487
      %1601 = vmatprep.subr.mxu0 0.0
      %1602 = vmatpush1.msra.mxu0 %v488
      %1603 = vmatprep.subr.mxu0 0.0
      %1604 = vmatpush1.msra.mxu0 %v489
      %1605 = vmatprep.subr.mxu0 0.0
      %1606 = vmatpush1.msra.mxu0 0.0
      %1607 = vmatprep.subr.mxu0 0.0
      %1608 = vmatpush1.msra.mxu0 0.0
      %1609 = vmatprep.subr.mxu0 0.0
      %1610 = vmatpush1.msra.mxu0 0.0
      %1611 = vmatprep.subr.mxu0 0.0
      %1612 = vmatpush1.msra.mxu0 0.0
      %1613 = vmatprep.subr.mxu0 0.0
      %1614 = vmatpush1.msra.mxu0 0.0
      %1615 = vmatprep.subr.mxu0 0.0
      %1616 = vmatpush1.msra.mxu0 0.0
      %1617 = vmatprep.subr.mxu0 0.0
      %1618 = vmatpush1.msra.mxu0 0.0
      %1619 = vmatprep.subr.mxu0 0.0
      %1620 = vmatpush1.msra.mxu0 0.0
      %1621 = vmatprep.subr.mxu0 0.0
      %1622 = vmatpush1.msra.mxu0 0.0
      %1623 = vmatprep.subr.mxu0 0.0
      %1624 = vmatpush1.msra.mxu0 0.0
      %1625 = vmatprep.subr.mxu0 0.0
      %1626 = vmatpush1.msra.mxu0 0.0
      %1627 = vmatprep.subr.mxu0 0.0
      %1628 = vmatpush1.msra.mxu0 0.0
      %1629 = vmatprep.subr.mxu0 0.0
      %1630 = vmatpush1.msra.mxu0 0.0
      %1631 = vmatprep.subr.mxu0 0.0
      %1632 = vmatpush1.msra.mxu0 0.0
      %1633 = vmatprep.subr.mxu0 0.0
      %1634 = vmatpush1.msra.mxu0 0.0
      %1635 = vmatprep.subr.mxu0 0.0
      %1636 = vmatpush1.msra.mxu0 0.0
      %1637 = vmatprep.subr.mxu0 0.0
      %1638 = vmatpush1.msra.mxu0 0.0
      %1639 = vmatprep.subr.mxu0 0.0
      %1640 = vmatpush1.msra.mxu0 0.0
      %1641 = vmatprep.subr.mxu0 0.0
      %1642 = vmatpush1.msra.mxu0 0.0
      %1643 = vmatprep.subr.mxu0 0.0
      %1644 = vmatpush1.msra.mxu0 0.0
      %1645 = vmatprep.subr.mxu0 0.0
      %1646 = vmatpush1.msra.mxu0 0.0
      %1647 = vmatprep.subr.mxu0 0.0
      %1648 = vmatpush1.msra.mxu0 0.0
      %1649 = vmatprep.subr.mxu0 0.0
      %1650 = vmatpush1.msra.mxu0 0.0
      %1651 = vmatprep.subr.mxu0 0.0
      %1652 = vmatpush1.msra.mxu0 0.0
      %1653 = vmatprep.subr.mxu0 0.0
      %1654 = vmatpush1.msra.mxu0 0.0
      %1655 = vmatprep.subr.mxu0 0.0
      %1656 = vmatpush1.msra.mxu0 0.0
      %1657 = vmatprep.subr.mxu0 0.0
      %1658 = vmatpush1.msra.mxu0 0.0
      %1659 = vmatprep.subr.mxu0 0.0
      %1660 = vmatpush1.msra.mxu0 0.0
      %1661 = vmatprep.mubr.f32.mxu0 0.0
      %1662 = vmatmul.mubr.f32.gmra.mrb[0].mxu0 %v1595
      %v1663 = vpop.f32.mrb[0].mxu0
      %v1664 = vadd.f32 %v895, %v1663
      %v1665 = vpop.f32.mrb[0].mxu0
      %1666 = vdwg.mxu0
      %v1667 = vmax.f32 %v1664, 0.0
      %v1669 = vsel %vm502, %v1667, 0
      %1671 = vmatprep.subr.mxu0 0.0
      %1672 = vmatpush1.msra.mxu0 %v491
      %1673 = vmatprep.subr.mxu0 0.0
      %1674 = vmatpush1.msra.mxu0 %v492
      %1675 = vmatprep.subr.mxu0 0.0
      %1676 = vmatpush1.msra.mxu0 %v493
      %1677 = vmatprep.subr.mxu0 0.0
      %1678 = vmatpush1.msra.mxu0 %v494
      %1679 = vmatprep.subr.mxu0 0.0
      %1680 = vmatpush1.msra.mxu0 0.0
      %1681 = vmatprep.subr.mxu0 0.0
      %1682 = vmatpush1.msra.mxu0 0.0
      %1683 = vmatprep.subr.mxu0 0.0
      %1684 = vmatpush1.msra.mxu0 0.0
      %1685 = vmatprep.subr.mxu0 0.0
      %1686 = vmatpush1.msra.mxu0 0.0
      %1687 = vmatprep.subr.mxu0 0.0
      %1688 = vmatpush1.msra.mxu0 0.0
      %1689 = vmatprep.subr.mxu0 0.0
      %1690 = vmatpush1.msra.mxu0 0.0
      %1691 = vmatprep.subr.mxu0 0.0
      %1692 = vmatpush1.msra.mxu0 0.0
      %1693 = vmatprep.subr.mxu0 0.0
      %1694 = vmatpush1.msra.mxu0 0.0
      %1695 = vmatprep.subr.mxu0 0.0
      %1696 = vmatpush1.msra.mxu0 0.0
      %1697 = vmatprep.subr.mxu0 0.0
      %1698 = vmatpush1.msra.mxu0 0.0
      %1699 = vmatprep.subr.mxu0 0.0
      %1700 = vmatpush1.msra.mxu0 0.0
      %1701 = vmatprep.subr.mxu0 0.0
      %1702 = vmatpush1.msra.mxu0 0.0
      %1703 = vmatprep.subr.mxu0 0.0
      %1704 = vmatpush1.msra.mxu0 0.0
      %1705 = vmatprep.subr.mxu0 0.0
      %1706 = vmatpush1.msra.mxu0 0.0
      %1707 = vmatprep.subr.mxu0 0.0
      %1708 = vmatpush1.msra.mxu0 0.0
      %1709 = vmatprep.subr.mxu0 0.0
      %1710 = vmatpush1.msra.mxu0 0.0
      %1711 = vmatprep.subr.mxu0 0.0
      %1712 = vmatpush1.msra.mxu0 0.0
      %1713 = vmatprep.subr.mxu0 0.0
      %1714 = vmatpush1.msra.mxu0 0.0
      %1715 = vmatprep.subr.mxu0 0.0
      %1716 = vmatpush1.msra.mxu0 0.0
      %1717 = vmatprep.subr.mxu0 0.0
      %1718 = vmatpush1.msra.mxu0 0.0
      %1719 = vmatprep.subr.mxu0 0.0
      %1720 = vmatpush1.msra.mxu0 0.0
      %1721 = vmatprep.subr.mxu0 0.0
      %1722 = vmatpush1.msra.mxu0 0.0
      %1723 = vmatprep.subr.mxu0 0.0
      %1724 = vmatpush1.msra.mxu0 0.0
      %1725 = vmatprep.subr.mxu0 0.0
      %1726 = vmatpush1.msra.mxu0 0.0
      %1727 = vmatprep.subr.mxu0 0.0
      %1728 = vmatpush1.msra.mxu0 0.0
      %1729 = vmatprep.subr.mxu0 0.0
      %1730 = vmatpush1.msra.mxu0 0.0
      %1731 = vmatprep.subr.mxu0 0.0
      %1732 = vmatpush1.msra.mxu0 0.0
      %1733 = vmatprep.subr.mxu0 0.0
      %1734 = vmatpush1.msra.mxu0 0.0
      %1735 = vmatprep.mubr.f32.mxu0 0.0
      %1736 = vmatmul.mubr.f32.gmra.mrb[0].mxu0 %v1669
      %v1737 = vpop.f32.mrb[0].mxu0
      %v1738 = vadd.f32 %v975, %v1737
      %v1739 = vpop.f32.mrb[0].mxu0
      %1740 = vdwg.mxu0
      %v1742 = vadd.f32 %v1738, %v1514
      %v1743 = vlaneseq
      %v1744 = vshrl.u32 %v1743, 7
      %v1745 = vsub.s32 5, %v1744
      %v1746 = vrot.slane %v484, %v1745
      %v1747 = vadd.f32 %v1587, %v1746
      %v1748 = vmax.f32 %v1747, 0.0
      %v1750 = vsel %vm502, %v1748, 0
      %1752 = vmatprep.subr.mxu0 0.0
      %1753 = vmatpush1.msra.mxu0 %v486
      %1754 = vmatprep.subr.mxu0 0.0
      %1755 = vmatpush1.msra.mxu0 %v487
      %1756 = vmatprep.subr.mxu0 0.0
      %1757 = vmatpush1.msra.mxu0 %v488
      %1758 = vmatprep.subr.mxu0 0.0
      %1759 = vmatpush1.msra.mxu0 %v489
      %1760 = vmatprep.subr.mxu0 0.0
      %1761 = vmatpush1.msra.mxu0 0.0
      %1762 = vmatprep.subr.mxu0 0.0
      %1763 = vmatpush1.msra.mxu0 0.0
      %1764 = vmatprep.subr.mxu0 0.0
      %1765 = vmatpush1.msra.mxu0 0.0
      %1766 = vmatprep.subr.mxu0 0.0
      %1767 = vmatpush1.msra.mxu0 0.0
      %1768 = vmatprep.subr.mxu0 0.0
      %1769 = vmatpush1.msra.mxu0 0.0
      %1770 = vmatprep.subr.mxu0 0.0
      %1771 = vmatpush1.msra.mxu0 0.0
      %1772 = vmatprep.subr.mxu0 0.0
      %1773 = vmatpush1.msra.mxu0 0.0
      %1774 = vmatprep.subr.mxu0 0.0
      %1775 = vmatpush1.msra.mxu0 0.0
      %1776 = vmatprep.subr.mxu0 0.0
      %1777 = vmatpush1.msra.mxu0 0.0
      %1778 = vmatprep.subr.mxu0 0.0
      %1779 = vmatpush1.msra.mxu0 0.0
      %1780 = vmatprep.subr.mxu0 0.0
      %1781 = vmatpush1.msra.mxu0 0.0
      %1782 = vmatprep.subr.mxu0 0.0
      %1783 = vmatpush1.msra.mxu0 0.0
      %1784 = vmatprep.subr.mxu0 0.0
      %1785 = vmatpush1.msra.mxu0 0.0
      %1786 = vmatprep.subr.mxu0 0.0
      %1787 = vmatpush1.msra.mxu0 0.0
      %1788 = vmatprep.subr.mxu0 0.0
      %1789 = vmatpush1.msra.mxu0 0.0
      %1790 = vmatprep.subr.mxu0 0.0
      %1791 = vmatpush1.msra.mxu0 0.0
      %1792 = vmatprep.subr.mxu0 0.0
      %1793 = vmatpush1.msra.mxu0 0.0
      %1794 = vmatprep.subr.mxu0 0.0
      %1795 = vmatpush1.msra.mxu0 0.0
      %1796 = vmatprep.subr.mxu0 0.0
      %1797 = vmatpush1.msra.mxu0 0.0
      %1798 = vmatprep.subr.mxu0 0.0
      %1799 = vmatpush1.msra.mxu0 0.0
      %1800 = vmatprep.subr.mxu0 0.0
      %1801 = vmatpush1.msra.mxu0 0.0
      %1802 = vmatprep.subr.mxu0 0.0
      %1803 = vmatpush1.msra.mxu0 0.0
      %1804 = vmatprep.subr.mxu0 0.0
      %1805 = vmatpush1.msra.mxu0 0.0
      %1806 = vmatprep.subr.mxu0 0.0
      %1807 = vmatpush1.msra.mxu0 0.0
      %1808 = vmatprep.subr.mxu0 0.0
      %1809 = vmatpush1.msra.mxu0 0.0
      %1810 = vmatprep.subr.mxu0 0.0
      %1811 = vmatpush1.msra.mxu0 0.0
      %1812 = vmatprep.subr.mxu0 0.0
      %1813 = vmatpush1.msra.mxu0 0.0
      %1814 = vmatprep.subr.mxu0 0.0
      %1815 = vmatpush1.msra.mxu0 0.0
      %1816 = vmatprep.mubr.f32.mxu0 0.0
      %1817 = vmatmul.mubr.f32.gmra.mrb[0].mxu0 %v1750
      %v1818 = vpop.f32.mrb[0].mxu0
      %v1819 = vadd.f32 %v895, %v1818
      %v1820 = vpop.f32.mrb[0].mxu0
      %1821 = vdwg.mxu0
      %v1822 = vmax.f32 %v1819, 0.0
      %v1824 = vsel %vm502, %v1822, 0
      %1826 = vmatprep.subr.mxu0 0.0
      %1827 = vmatpush1.msra.mxu0 %v491
      %1828 = vmatprep.subr.mxu0 0.0
      %1829 = vmatpush1.msra.mxu0 %v492
      %1830 = vmatprep.subr.mxu0 0.0
      %1831 = vmatpush1.msra.mxu0 %v493
      %1832 = vmatprep.subr.mxu0 0.0
      %1833 = vmatpush1.msra.mxu0 %v494
      %1834 = vmatprep.subr.mxu0 0.0
      %1835 = vmatpush1.msra.mxu0 0.0
      %1836 = vmatprep.subr.mxu0 0.0
      %1837 = vmatpush1.msra.mxu0 0.0
      %1838 = vmatprep.subr.mxu0 0.0
      %1839 = vmatpush1.msra.mxu0 0.0
      %1840 = vmatprep.subr.mxu0 0.0
      %1841 = vmatpush1.msra.mxu0 0.0
      %1842 = vmatprep.subr.mxu0 0.0
      %1843 = vmatpush1.msra.mxu0 0.0
      %1844 = vmatprep.subr.mxu0 0.0
      %1845 = vmatpush1.msra.mxu0 0.0
      %1846 = vmatprep.subr.mxu0 0.0
      %1847 = vmatpush1.msra.mxu0 0.0
      %1848 = vmatprep.subr.mxu0 0.0
      %1849 = vmatpush1.msra.mxu0 0.0
      %1850 = vmatprep.subr.mxu0 0.0
      %1851 = vmatpush1.msra.mxu0 0.0
      %1852 = vmatprep.subr.mxu0 0.0
      %1853 = vmatpush1.msra.mxu0 0.0
      %1854 = vmatprep.subr.mxu0 0.0
      %1855 = vmatpush1.msra.mxu0 0.0
      %1856 = vmatprep.subr.mxu0 0.0
      %1857 = vmatpush1.msra.mxu0 0.0
      %1858 = vmatprep.subr.mxu0 0.0
      %1859 = vmatpush1.msra.mxu0 0.0
      %1860 = vmatprep.subr.mxu0 0.0
      %1861 = vmatpush1.msra.mxu0 0.0
      %1862 = vmatprep.subr.mxu0 0.0
      %1863 = vmatpush1.msra.mxu0 0.0
      %1864 = vmatprep.subr.mxu0 0.0
      %1865 = vmatpush1.msra.mxu0 0.0
      %1866 = vmatprep.subr.mxu0 0.0
      %1867 = vmatpush1.msra.mxu0 0.0
      %1868 = vmatprep.subr.mxu0 0.0
      %1869 = vmatpush1.msra.mxu0 0.0
      %1870 = vmatprep.subr.mxu0 0.0
      %1871 = vmatpush1.msra.mxu0 0.0
      %1872 = vmatprep.subr.mxu0 0.0
      %1873 = vmatpush1.msra.mxu0 0.0
      %1874 = vmatprep.subr.mxu0 0.0
      %1875 = vmatpush1.msra.mxu0 0.0
      %1876 = vmatprep.subr.mxu0 0.0
      %1877 = vmatpush1.msra.mxu0 0.0
      %1878 = vmatprep.subr.mxu0 0.0
      %1879 = vmatpush1.msra.mxu0 0.0
      %1880 = vmatprep.subr.mxu0 0.0
      %1881 = vmatpush1.msra.mxu0 0.0
      %1882 = vmatprep.subr.mxu0 0.0
      %1883 = vmatpush1.msra.mxu0 0.0
      %1884 = vmatprep.subr.mxu0 0.0
      %1885 = vmatpush1.msra.mxu0 0.0
      %1886 = vmatprep.subr.mxu0 0.0
      %1887 = vmatpush1.msra.mxu0 0.0
      %1888 = vmatprep.subr.mxu0 0.0
      %1889 = vmatpush1.msra.mxu0 0.0
      %1890 = vmatprep.mubr.f32.mxu0 0.0
      %1891 = vmatmul.mubr.f32.gmra.mrb[0].mxu0 %v1824
      %v1892 = vpop.f32.mrb[0].mxu0
      %v1893 = vadd.f32 %v975, %v1892
      %v1894 = vpop.f32.mrb[0].mxu0
      %1895 = vdwg.mxu0
      %v1896 = vadd.f32 %v1893, %v1514
      %v1897 = vlaneseq
      %v1898 = vshrl.u32 %v1897, 7
      %v1899 = vsub.s32 6, %v1898
      %v1900 = vrot.slane %v484, %v1899
      %v1901 = vadd.f32 %v1587, %v1900
      %v1902 = vmax.f32 %v1901, 0.0
      %v1904 = vsel %vm502, %v1902, 0
      %1906 = vmatprep.subr.mxu0 0.0
      %1907 = vmatpush1.msra.mxu0 %v486
      %1908 = vmatprep.subr.mxu0 0.0
      %1909 = vmatpush1.msra.mxu0 %v487
      %1910 = vmatprep.subr.mxu0 0.0
      %1911 = vmatpush1.msra.mxu0 %v488
      %1912 = vmatprep.subr.mxu0 0.0
      %1913 = vmatpush1.msra.mxu0 %v489
      %1914 = vmatprep.subr.mxu0 0.0
      %1915 = vmatpush1.msra.mxu0 0.0
      %1916 = vmatprep.subr.mxu0 0.0
      %1917 = vmatpush1.msra.mxu0 0.0
      %1918 = vmatprep.subr.mxu0 0.0
      %1919 = vmatpush1.msra.mxu0 0.0
      %1920 = vmatprep.subr.mxu0 0.0
      %1921 = vmatpush1.msra.mxu0 0.0
      %1922 = vmatprep.subr.mxu0 0.0
      %1923 = vmatpush1.msra.mxu0 0.0
      %1924 = vmatprep.subr.mxu0 0.0
      %1925 = vmatpush1.msra.mxu0 0.0
      %1926 = vmatprep.subr.mxu0 0.0
      %1927 = vmatpush1.msra.mxu0 0.0
      %1928 = vmatprep.subr.mxu0 0.0
      %1929 = vmatpush1.msra.mxu0 0.0
      %1930 = vmatprep.subr.mxu0 0.0
      %1931 = vmatpush1.msra.mxu0 0.0
      %1932 = vmatprep.subr.mxu0 0.0
      %1933 = vmatpush1.msra.mxu0 0.0
      %1934 = vmatprep.subr.mxu0 0.0
      %1935 = vmatpush1.msra.mxu0 0.0
      %1936 = vmatprep.subr.mxu0 0.0
      %1937 = vmatpush1.msra.mxu0 0.0
      %1938 = vmatprep.subr.mxu0 0.0
      %1939 = vmatpush1.msra.mxu0 0.0
      %1940 = vmatprep.subr.mxu0 0.0
      %1941 = vmatpush1.msra.mxu0 0.0
      %1942 = vmatprep.subr.mxu0 0.0
      %1943 = vmatpush1.msra.mxu0 0.0
      %1944 = vmatprep.subr.mxu0 0.0
      %1945 = vmatpush1.msra.mxu0 0.0
      %1946 = vmatprep.subr.mxu0 0.0
      %1947 = vmatpush1.msra.mxu0 0.0
      %1948 = vmatprep.subr.mxu0 0.0
      %1949 = vmatpush1.msra.mxu0 0.0
      %1950 = vmatprep.subr.mxu0 0.0
      %1951 = vmatpush1.msra.mxu0 0.0
      %1952 = vmatprep.subr.mxu0 0.0
      %1953 = vmatpush1.msra.mxu0 0.0
      %1954 = vmatprep.subr.mxu0 0.0
      %1955 = vmatpush1.msra.mxu0 0.0
      %1956 = vmatprep.subr.mxu0 0.0
      %1957 = vmatpush1.msra.mxu0 0.0
      %1958 = vmatprep.subr.mxu0 0.0
      %1959 = vmatpush1.msra.mxu0 0.0
      %1960 = vmatprep.subr.mxu0 0.0
      %1961 = vmatpush1.msra.mxu0 0.0
      %1962 = vmatprep.subr.mxu0 0.0
      %1963 = vmatpush1.msra.mxu0 0.0
      %1964 = vmatprep.subr.mxu0 0.0
      %1965 = vmatpush1.msra.mxu0 0.0
      %1966 = vmatprep.subr.mxu0 0.0
      %1967 = vmatpush1.msra.mxu0 0.0
      %1968 = vmatprep.subr.mxu0 0.0
      %1969 = vmatpush1.msra.mxu0 0.0
      %1970 = vmatprep.mubr.f32.mxu0 0.0
      %1971 = vmatmul.mubr.f32.gmra.mrb[0].mxu0 %v1904
      %v1972 = vpop.f32.mrb[0].mxu0
      %v1973 = vadd.f32 %v895, %v1972
      %v1974 = vpop.f32.mrb[0].mxu0
      %1975 = vdwg.mxu0
      %v1976 = vmax.f32 %v1973, 0.0
      %v1978 = vsel %vm502, %v1976, 0
      %1980 = vmatprep.subr.mxu0 0.0
      %1981 = vmatpush1.msra.mxu0 %v491
      %1982 = vmatprep.subr.mxu0 0.0
      %1983 = vmatpush1.msra.mxu0 %v492
      %1984 = vmatprep.subr.mxu0 0.0
      %1985 = vmatpush1.msra.mxu0 %v493
      %1986 = vmatprep.subr.mxu0 0.0
      %1987 = vmatpush1.msra.mxu0 %v494
      %1988 = vmatprep.subr.mxu0 0.0
      %1989 = vmatpush1.msra.mxu0 0.0
      %1990 = vmatprep.subr.mxu0 0.0
      %1991 = vmatpush1.msra.mxu0 0.0
      %1992 = vmatprep.subr.mxu0 0.0
      %1993 = vmatpush1.msra.mxu0 0.0
      %1994 = vmatprep.subr.mxu0 0.0
      %1995 = vmatpush1.msra.mxu0 0.0
      %1996 = vmatprep.subr.mxu0 0.0
      %1997 = vmatpush1.msra.mxu0 0.0
      %1998 = vmatprep.subr.mxu0 0.0
      %1999 = vmatpush1.msra.mxu0 0.0
      %2000 = vmatprep.subr.mxu0 0.0
      %2001 = vmatpush1.msra.mxu0 0.0
      %2002 = vmatprep.subr.mxu0 0.0
      %2003 = vmatpush1.msra.mxu0 0.0
      %2004 = vmatprep.subr.mxu0 0.0
      %2005 = vmatpush1.msra.mxu0 0.0
      %2006 = vmatprep.subr.mxu0 0.0
      %2007 = vmatpush1.msra.mxu0 0.0
      %2008 = vmatprep.subr.mxu0 0.0
      %2009 = vmatpush1.msra.mxu0 0.0
      %2010 = vmatprep.subr.mxu0 0.0
      %2011 = vmatpush1.msra.mxu0 0.0
      %2012 = vmatprep.subr.mxu0 0.0
      %2013 = vmatpush1.msra.mxu0 0.0
      %2014 = vmatprep.subr.mxu0 0.0
      %2015 = vmatpush1.msra.mxu0 0.0
      %2016 = vmatprep.subr.mxu0 0.0
      %2017 = vmatpush1.msra.mxu0 0.0
      %2018 = vmatprep.subr.mxu0 0.0
      %2019 = vmatpush1.msra.mxu0 0.0
      %2020 = vmatprep.subr.mxu0 0.0
      %2021 = vmatpush1.msra.mxu0 0.0
      %2022 = vmatprep.subr.mxu0 0.0
      %2023 = vmatpush1.msra.mxu0 0.0
      %2024 = vmatprep.subr.mxu0 0.0
      %2025 = vmatpush1.msra.mxu0 0.0
      %2026 = vmatprep.subr.mxu0 0.0
      %2027 = vmatpush1.msra.mxu0 0.0
      %2028 = vmatprep.subr.mxu0 0.0
      %2029 = vmatpush1.msra.mxu0 0.0
      %2030 = vmatprep.subr.mxu0 0.0
      %2031 = vmatpush1.msra.mxu0 0.0
      %2032 = vmatprep.subr.mxu0 0.0
      %2033 = vmatpush1.msra.mxu0 0.0
      %2034 = vmatprep.subr.mxu0 0.0
      %2035 = vmatpush1.msra.mxu0 0.0
      %2036 = vmatprep.subr.mxu0 0.0
      %2037 = vmatpush1.msra.mxu0 0.0
      %2038 = vmatprep.subr.mxu0 0.0
      %2039 = vmatpush1.msra.mxu0 0.0
      %2040 = vmatprep.subr.mxu0 0.0
      %2041 = vmatpush1.msra.mxu0 0.0
      %2042 = vmatprep.subr.mxu0 0.0
      %2043 = vmatpush1.msra.mxu0 0.0
      %2044 = vmatprep.mubr.f32.mxu0 0.0
      %2045 = vmatmul.mubr.f32.gmra.mrb[0].mxu0 %v1978
      %v2046 = vpop.f32.mrb[0].mxu0
      %v2047 = vadd.f32 %v975, %v2046
      %v2048 = vpop.f32.mrb[0].mxu0
      %2049 = vdwg.mxu0
      %v2050 = vadd.f32 %v2047, %v1514
      %v2051 = vlaneseq
      %v2052 = vshrl.u32 %v2051, 7
      %v2053 = vsub.s32 7, %v2052
      %v2054 = vrot.slane %v484, %v2053
      %v2055 = vadd.f32 %v1587, %v2054
      %v2056 = vmax.f32 %v2055, 0.0
      %v2058 = vsel %vm502, %v2056, 0
      %2060 = vmatprep.subr.mxu0 0.0
      %2061 = vmatpush1.msra.mxu0 %v486
      %2062 = vmatprep.subr.mxu0 0.0
      %2063 = vmatpush1.msra.mxu0 %v487
      %2064 = vmatprep.subr.mxu0 0.0
      %2065 = vmatpush1.msra.mxu0 %v488
      %2066 = vmatprep.subr.mxu0 0.0
      %2067 = vmatpush1.msra.mxu0 %v489
      %2068 = vmatprep.subr.mxu0 0.0
      %2069 = vmatpush1.msra.mxu0 0.0
      %2070 = vmatprep.subr.mxu0 0.0
      %2071 = vmatpush1.msra.mxu0 0.0
      %2072 = vmatprep.subr.mxu0 0.0
      %2073 = vmatpush1.msra.mxu0 0.0
      %2074 = vmatprep.subr.mxu0 0.0
      %2075 = vmatpush1.msra.mxu0 0.0
      %2076 = vmatprep.subr.mxu0 0.0
      %2077 = vmatpush1.msra.mxu0 0.0
      %2078 = vmatprep.subr.mxu0 0.0
      %2079 = vmatpush1.msra.mxu0 0.0
      %2080 = vmatprep.subr.mxu0 0.0
      %2081 = vmatpush1.msra.mxu0 0.0
      %2082 = vmatprep.subr.mxu0 0.0
      %2083 = vmatpush1.msra.mxu0 0.0
      %2084 = vmatprep.subr.mxu0 0.0
      %2085 = vmatpush1.msra.mxu0 0.0
      %2086 = vmatprep.subr.mxu0 0.0
      %2087 = vmatpush1.msra.mxu0 0.0
      %2088 = vmatprep.subr.mxu0 0.0
      %2089 = vmatpush1.msra.mxu0 0.0
      %2090 = vmatprep.subr.mxu0 0.0
      %2091 = vmatpush1.msra.mxu0 0.0
      %2092 = vmatprep.subr.mxu0 0.0
      %2093 = vmatpush1.msra.mxu0 0.0
      %2094 = vmatprep.subr.mxu0 0.0
      %2095 = vmatpush1.msra.mxu0 0.0
      %2096 = vmatprep.subr.mxu0 0.0
      %2097 = vmatpush1.msra.mxu0 0.0
      %2098 = vmatprep.subr.mxu0 0.0
      %2099 = vmatpush1.msra.mxu0 0.0
      %2100 = vmatprep.subr.mxu0 0.0
      %2101 = vmatpush1.msra.mxu0 0.0
      %2102 = vmatprep.subr.mxu0 0.0
      %2103 = vmatpush1.msra.mxu0 0.0
      %2104 = vmatprep.subr.mxu0 0.0
      %2105 = vmatpush1.msra.mxu0 0.0
      %2106 = vmatprep.subr.mxu0 0.0
      %2107 = vmatpush1.msra.mxu0 0.0
      %2108 = vmatprep.subr.mxu0 0.0
      %2109 = vmatpush1.msra.mxu0 0.0
      %2110 = vmatprep.subr.mxu0 0.0
      %2111 = vmatpush1.msra.mxu0 0.0
      %2112 = vmatprep.subr.mxu0 0.0
      %2113 = vmatpush1.msra.mxu0 0.0
      %2114 = vmatprep.subr.mxu0 0.0
      %2115 = vmatpush1.msra.mxu0 0.0
      %2116 = vmatprep.subr.mxu0 0.0
      %2117 = vmatpush1.msra.mxu0 0.0
      %2118 = vmatprep.subr.mxu0 0.0
      %2119 = vmatpush1.msra.mxu0 0.0
      %2120 = vmatprep.subr.mxu0 0.0
      %2121 = vmatpush1.msra.mxu0 0.0
      %2122 = vmatprep.subr.mxu0 0.0
      %2123 = vmatpush1.msra.mxu0 0.0
      %2124 = vmatprep.mubr.f32.mxu0 0.0
      %2125 = vmatmul.mubr.f32.gmra.mrb[0].mxu0 %v2058
      %v2126 = vpop.f32.mrb[0].mxu0
      %v2127 = vadd.f32 %v895, %v2126
      %v2128 = vpop.f32.mrb[0].mxu0
      %2129 = vdwg.mxu0
      %v2130 = vmax.f32 %v2127, 0.0
      %v2132 = vsel %vm502, %v2130, 0
      %2134 = vmatprep.subr.mxu0 0.0
      %2135 = vmatpush1.msra.mxu0 %v491
      %2136 = vmatprep.subr.mxu0 0.0
      %2137 = vmatpush1.msra.mxu0 %v492
      %2138 = vmatprep.subr.mxu0 0.0
      %2139 = vmatpush1.msra.mxu0 %v493
      %2140 = vmatprep.subr.mxu0 0.0
      %2141 = vmatpush1.msra.mxu0 %v494
      %2142 = vmatprep.subr.mxu0 0.0
      %2143 = vmatpush1.msra.mxu0 0.0
      %2144 = vmatprep.subr.mxu0 0.0
      %2145 = vmatpush1.msra.mxu0 0.0
      %2146 = vmatprep.subr.mxu0 0.0
      %2147 = vmatpush1.msra.mxu0 0.0
      %2148 = vmatprep.subr.mxu0 0.0
      %2149 = vmatpush1.msra.mxu0 0.0
      %2150 = vmatprep.subr.mxu0 0.0
      %2151 = vmatpush1.msra.mxu0 0.0
      %2152 = vmatprep.subr.mxu0 0.0
      %2153 = vmatpush1.msra.mxu0 0.0
      %2154 = vmatprep.subr.mxu0 0.0
      %2155 = vmatpush1.msra.mxu0 0.0
      %2156 = vmatprep.subr.mxu0 0.0
      %2157 = vmatpush1.msra.mxu0 0.0
      %2158 = vmatprep.subr.mxu0 0.0
      %2159 = vmatpush1.msra.mxu0 0.0
      %2160 = vmatprep.subr.mxu0 0.0
      %2161 = vmatpush1.msra.mxu0 0.0
      %2162 = vmatprep.subr.mxu0 0.0
      %2163 = vmatpush1.msra.mxu0 0.0
      %2164 = vmatprep.subr.mxu0 0.0
      %2165 = vmatpush1.msra.mxu0 0.0
      %2166 = vmatprep.subr.mxu0 0.0
      %2167 = vmatpush1.msra.mxu0 0.0
      %2168 = vmatprep.subr.mxu0 0.0
      %2169 = vmatpush1.msra.mxu0 0.0
      %2170 = vmatprep.subr.mxu0 0.0
      %2171 = vmatpush1.msra.mxu0 0.0
      %2172 = vmatprep.subr.mxu0 0.0
      %2173 = vmatpush1.msra.mxu0 0.0
      %2174 = vmatprep.subr.mxu0 0.0
      %2175 = vmatpush1.msra.mxu0 0.0
      %2176 = vmatprep.subr.mxu0 0.0
      %2177 = vmatpush1.msra.mxu0 0.0
      %2178 = vmatprep.subr.mxu0 0.0
      %2179 = vmatpush1.msra.mxu0 0.0
      %2180 = vmatprep.subr.mxu0 0.0
      %2181 = vmatpush1.msra.mxu0 0.0
      %2182 = vmatprep.subr.mxu0 0.0
      %2183 = vmatpush1.msra.mxu0 0.0
      %2184 = vmatprep.subr.mxu0 0.0
      %2185 = vmatpush1.msra.mxu0 0.0
      %2186 = vmatprep.subr.mxu0 0.0
      %2187 = vmatpush1.msra.mxu0 0.0
      %2188 = vmatprep.subr.mxu0 0.0
      %2189 = vmatpush1.msra.mxu0 0.0
      %2190 = vmatprep.subr.mxu0 0.0
      %2191 = vmatpush1.msra.mxu0 0.0
      %2192 = vmatprep.subr.mxu0 0.0
      %2193 = vmatpush1.msra.mxu0 0.0
      %2194 = vmatprep.subr.mxu0 0.0
      %2195 = vmatpush1.msra.mxu0 0.0
      %2196 = vmatprep.subr.mxu0 0.0
      %2197 = vmatpush1.msra.mxu0 0.0
      %2198 = vmatprep.mubr.f32.mxu0 0.0
      %2199 = vmatmul.mubr.f32.gmra.mrb[0].mxu0 %v2132
      %v2200 = vpop.f32.mrb[0].mxu0
      %v2201 = vadd.f32 %v975, %v2200
      %v2202 = vpop.f32.mrb[0].mxu0
      %2203 = vdwg.mxu0
      %v2204 = vadd.f32 %v2201, %v1514
      %2205 = vrot.lane.b32.xlu0 %v733, 122
      %v2206 = vpop.permute.xlu0 %2205
      %v2207 = vsel %vm806, %v2206, 0
      %2209 = vmatprep.subr.mxu0 0.0
      %2210 = vmatpush1.msra.mxu0 %v812
      %2211 = vmatprep.subr.mxu0 0.0
      %2212 = vmatpush1.msra.mxu0 0.0
      %2213 = vmatprep.subr.mxu0 0.0
      %2214 = vmatpush1.msra.mxu0 0.0
      %2215 = vmatprep.subr.mxu0 0.0
      %2216 = vmatpush1.msra.mxu0 0.0
      %2217 = vmatprep.subr.mxu0 0.0
      %2218 = vmatpush1.msra.mxu0 0.0
      %2219 = vmatprep.subr.mxu0 0.0
      %2220 = vmatpush1.msra.mxu0 0.0
      %2221 = vmatprep.subr.mxu0 0.0
      %2222 = vmatpush1.msra.mxu0 0.0
      %2223 = vmatprep.subr.mxu0 0.0
      %2224 = vmatpush1.msra.mxu0 0.0
      %2225 = vmatprep.subr.mxu0 0.0
      %2226 = vmatpush1.msra.mxu0 0.0
      %2227 = vmatprep.subr.mxu0 0.0
      %2228 = vmatpush1.msra.mxu0 0.0
      %2229 = vmatprep.subr.mxu0 0.0
      %2230 = vmatpush1.msra.mxu0 0.0
      %2231 = vmatprep.subr.mxu0 0.0
      %2232 = vmatpush1.msra.mxu0 0.0
      %2233 = vmatprep.subr.mxu0 0.0
      %2234 = vmatpush1.msra.mxu0 0.0
      %2235 = vmatprep.subr.mxu0 0.0
      %2236 = vmatpush1.msra.mxu0 0.0
      %2237 = vmatprep.subr.mxu0 0.0
      %2238 = vmatpush1.msra.mxu0 0.0
      %2239 = vmatprep.subr.mxu0 0.0
      %2240 = vmatpush1.msra.mxu0 0.0
      %2241 = vmatprep.subr.mxu0 0.0
      %2242 = vmatpush1.msra.mxu0 0.0
      %2243 = vmatprep.subr.mxu0 0.0
      %2244 = vmatpush1.msra.mxu0 0.0
      %2245 = vmatprep.subr.mxu0 0.0
      %2246 = vmatpush1.msra.mxu0 0.0
      %2247 = vmatprep.subr.mxu0 0.0
      %2248 = vmatpush1.msra.mxu0 0.0
      %2249 = vmatprep.subr.mxu0 0.0
      %2250 = vmatpush1.msra.mxu0 0.0
      %2251 = vmatprep.subr.mxu0 0.0
      %2252 = vmatpush1.msra.mxu0 0.0
      %2253 = vmatprep.subr.mxu0 0.0
      %2254 = vmatpush1.msra.mxu0 0.0
      %2255 = vmatprep.subr.mxu0 0.0
      %2256 = vmatpush1.msra.mxu0 0.0
      %2257 = vmatprep.subr.mxu0 0.0
      %2258 = vmatpush1.msra.mxu0 0.0
      %2259 = vmatprep.subr.mxu0 0.0
      %2260 = vmatpush1.msra.mxu0 0.0
      %2261 = vmatprep.subr.mxu0 0.0
      %2262 = vmatpush1.msra.mxu0 0.0
      %2263 = vmatprep.subr.mxu0 0.0
      %2264 = vmatpush1.msra.mxu0 0.0
      %2265 = vmatprep.subr.mxu0 0.0
      %2266 = vmatpush1.msra.mxu0 0.0
      %2267 = vmatprep.subr.mxu0 0.0
      %2268 = vmatpush1.msra.mxu0 0.0
      %2269 = vmatprep.subr.mxu0 0.0
      %2270 = vmatpush1.msra.mxu0 0.0
      %2271 = vmatprep.subr.mxu0 0.0
      %2272 = vmatpush1.msra.mxu0 0.0
      %2273 = vmatprep.mubr.f32.mxu0 0.0
      %2274 = vmatmul.mubr.f32.gmra.mrb[0].mxu0 %v2207
      %v2275 = vpop.f32.mrb[0].mxu0
      %v2276 = vadd.f32 0.0, %v2275
      %v2277 = vpop.f32.mrb[0].mxu0
      %2278 = vdwg.mxu0
      %v2279 = vadd.f32 %v803, %v2276
      %v2280 = vlaneseq
      %v2281 = vshrl.u32 %v2280, 7
      %v2282 = vsub.s32 0, %v2281
      %v2283 = vrot.slane %v485, %v2282
      %v2284 = vadd.f32 %v2279, %v2283
      %v2285 = vmax.f32 %v2284, 0.0
      %v2287 = vsel %vm502, %v2285, 0
      %2289 = vmatprep.subr.mxu0 0.0
      %2290 = vmatpush1.msra.mxu0 %v486
      %2291 = vmatprep.subr.mxu0 0.0
      %2292 = vmatpush1.msra.mxu0 %v487
      %2293 = vmatprep.subr.mxu0 0.0
      %2294 = vmatpush1.msra.mxu0 %v488
      %2295 = vmatprep.subr.mxu0 0.0
      %2296 = vmatpush1.msra.mxu0 %v489
      %2297 = vmatprep.subr.mxu0 0.0
      %2298 = vmatpush1.msra.mxu0 0.0
      %2299 = vmatprep.subr.mxu0 0.0
      %2300 = vmatpush1.msra.mxu0 0.0
      %2301 = vmatprep.subr.mxu0 0.0
      %2302 = vmatpush1.msra.mxu0 0.0
      %2303 = vmatprep.subr.mxu0 0.0
      %2304 = vmatpush1.msra.mxu0 0.0
      %2305 = vmatprep.subr.mxu0 0.0
      %2306 = vmatpush1.msra.mxu0 0.0
      %2307 = vmatprep.subr.mxu0 0.0
      %2308 = vmatpush1.msra.mxu0 0.0
      %2309 = vmatprep.subr.mxu0 0.0
      %2310 = vmatpush1.msra.mxu0 0.0
      %2311 = vmatprep.subr.mxu0 0.0
      %2312 = vmatpush1.msra.mxu0 0.0
      %2313 = vmatprep.subr.mxu0 0.0
      %2314 = vmatpush1.msra.mxu0 0.0
      %2315 = vmatprep.subr.mxu0 0.0
      %2316 = vmatpush1.msra.mxu0 0.0
      %2317 = vmatprep.subr.mxu0 0.0
      %2318 = vmatpush1.msra.mxu0 0.0
      %2319 = vmatprep.subr.mxu0 0.0
      %2320 = vmatpush1.msra.mxu0 0.0
      %2321 = vmatprep.subr.mxu0 0.0
      %2322 = vmatpush1.msra.mxu0 0.0
      %2323 = vmatprep.subr.mxu0 0.0
      %2324 = vmatpush1.msra.mxu0 0.0
      %2325 = vmatprep.subr.mxu0 0.0
      %2326 = vmatpush1.msra.mxu0 0.0
      %2327 = vmatprep.subr.mxu0 0.0
      %2328 = vmatpush1.msra.mxu0 0.0
      %2329 = vmatprep.subr.mxu0 0.0
      %2330 = vmatpush1.msra.mxu0 0.0
      %2331 = vmatprep.subr.mxu0 0.0
      %2332 = vmatpush1.msra.mxu0 0.0
      %2333 = vmatprep.subr.mxu0 0.0
      %2334 = vmatpush1.msra.mxu0 0.0
      %2335 = vmatprep.subr.mxu0 0.0
      %2336 = vmatpush1.msra.mxu0 0.0
      %2337 = vmatprep.subr.mxu0 0.0
      %2338 = vmatpush1.msra.mxu0 0.0
      %2339 = vmatprep.subr.mxu0 0.0
      %2340 = vmatpush1.msra.mxu0 0.0
      %2341 = vmatprep.subr.mxu0 0.0
      %2342 = vmatpush1.msra.mxu0 0.0
      %2343 = vmatprep.subr.mxu0 0.0
      %2344 = vmatpush1.msra.mxu0 0.0
      %2345 = vmatprep.subr.mxu0 0.0
      %2346 = vmatpush1.msra.mxu0 0.0
      %2347 = vmatprep.subr.mxu0 0.0
      %2348 = vmatpush1.msra.mxu0 0.0
      %2349 = vmatprep.subr.mxu0 0.0
      %2350 = vmatpush1.msra.mxu0 0.0
      %2351 = vmatprep.subr.mxu0 0.0
      %2352 = vmatpush1.msra.mxu0 0.0
      %2353 = vmatprep.mubr.f32.mxu0 0.0
      %2354 = vmatmul.mubr.f32.gmra.mrb[0].mxu0 %v2287
      %v2355 = vpop.f32.mrb[0].mxu0
      %v2356 = vadd.f32 %v895, %v2355
      %v2357 = vpop.f32.mrb[0].mxu0
      %2358 = vdwg.mxu0
      %v2359 = vmax.f32 %v2356, 0.0
      %v2361 = vsel %vm502, %v2359, 0
      %2363 = vmatprep.subr.mxu0 0.0
      %2364 = vmatpush1.msra.mxu0 %v491
      %2365 = vmatprep.subr.mxu0 0.0
      %2366 = vmatpush1.msra.mxu0 %v492
      %2367 = vmatprep.subr.mxu0 0.0
      %2368 = vmatpush1.msra.mxu0 %v493
      %2369 = vmatprep.subr.mxu0 0.0
      %2370 = vmatpush1.msra.mxu0 %v494
      %2371 = vmatprep.subr.mxu0 0.0
      %2372 = vmatpush1.msra.mxu0 0.0
      %2373 = vmatprep.subr.mxu0 0.0
      %2374 = vmatpush1.msra.mxu0 0.0
      %2375 = vmatprep.subr.mxu0 0.0
      %2376 = vmatpush1.msra.mxu0 0.0
      %2377 = vmatprep.subr.mxu0 0.0
      %2378 = vmatpush1.msra.mxu0 0.0
      %2379 = vmatprep.subr.mxu0 0.0
      %2380 = vmatpush1.msra.mxu0 0.0
      %2381 = vmatprep.subr.mxu0 0.0
      %2382 = vmatpush1.msra.mxu0 0.0
      %2383 = vmatprep.subr.mxu0 0.0
      %2384 = vmatpush1.msra.mxu0 0.0
      %2385 = vmatprep.subr.mxu0 0.0
      %2386 = vmatpush1.msra.mxu0 0.0
      %2387 = vmatprep.subr.mxu0 0.0
      %2388 = vmatpush1.msra.mxu0 0.0
      %2389 = vmatprep.subr.mxu0 0.0
      %2390 = vmatpush1.msra.mxu0 0.0
      %2391 = vmatprep.subr.mxu0 0.0
      %2392 = vmatpush1.msra.mxu0 0.0
      %2393 = vmatprep.subr.mxu0 0.0
      %2394 = vmatpush1.msra.mxu0 0.0
      %2395 = vmatprep.subr.mxu0 0.0
      %2396 = vmatpush1.msra.mxu0 0.0
      %2397 = vmatprep.subr.mxu0 0.0
      %2398 = vmatpush1.msra.mxu0 0.0
      %2399 = vmatprep.subr.mxu0 0.0
      %2400 = vmatpush1.msra.mxu0 0.0
      %2401 = vmatprep.subr.mxu0 0.0
      %2402 = vmatpush1.msra.mxu0 0.0
      %2403 = vmatprep.subr.mxu0 0.0
      %2404 = vmatpush1.msra.mxu0 0.0
      %2405 = vmatprep.subr.mxu0 0.0
      %2406 = vmatpush1.msra.mxu0 0.0
      %2407 = vmatprep.subr.mxu0 0.0
      %2408 = vmatpush1.msra.mxu0 0.0
      %2409 = vmatprep.subr.mxu0 0.0
      %2410 = vmatpush1.msra.mxu0 0.0
      %2411 = vmatprep.subr.mxu0 0.0
      %2412 = vmatpush1.msra.mxu0 0.0
      %2413 = vmatprep.subr.mxu0 0.0
      %2414 = vmatpush1.msra.mxu0 0.0
      %2415 = vmatprep.subr.mxu0 0.0
      %2416 = vmatpush1.msra.mxu0 0.0
      %2417 = vmatprep.subr.mxu0 0.0
      %2418 = vmatpush1.msra.mxu0 0.0
      %2419 = vmatprep.subr.mxu0 0.0
      %2420 = vmatpush1.msra.mxu0 0.0
      %2421 = vmatprep.subr.mxu0 0.0
      %2422 = vmatpush1.msra.mxu0 0.0
      %2423 = vmatprep.subr.mxu0 0.0
      %2424 = vmatpush1.msra.mxu0 0.0
      %2425 = vmatprep.subr.mxu0 0.0
      %2426 = vmatpush1.msra.mxu0 0.0
      %2427 = vmatprep.mubr.f32.mxu0 0.0
      %2428 = vmatmul.mubr.f32.gmra.mrb[0].mxu0 %v2361
      %v2429 = vpop.f32.mrb[0].mxu0
      %v2430 = vadd.f32 %v975, %v2429
      %v2431 = vpop.f32.mrb[0].mxu0
      %2432 = vdwg.mxu0
      %v2434 = vadd.f32 %v2430, %v2206
      %v2435 = vlaneseq
      %v2436 = vshrl.u32 %v2435, 7
      %v2437 = vsub.s32 1, %v2436
      %v2438 = vrot.slane %v485, %v2437
      %v2439 = vadd.f32 %v2279, %v2438
      %v2440 = vmax.f32 %v2439, 0.0
      %v2442 = vsel %vm502, %v2440, 0
      %2444 = vmatprep.subr.mxu0 0.0
      %2445 = vmatpush1.msra.mxu0 %v486
      %2446 = vmatprep.subr.mxu0 0.0
      %2447 = vmatpush1.msra.mxu0 %v487
      %2448 = vmatprep.subr.mxu0 0.0
      %2449 = vmatpush1.msra.mxu0 %v488
      %2450 = vmatprep.subr.mxu0 0.0
      %2451 = vmatpush1.msra.mxu0 %v489
      %2452 = vmatprep.subr.mxu0 0.0
      %2453 = vmatpush1.msra.mxu0 0.0
      %2454 = vmatprep.subr.mxu0 0.0
      %2455 = vmatpush1.msra.mxu0 0.0
      %2456 = vmatprep.subr.mxu0 0.0
      %2457 = vmatpush1.msra.mxu0 0.0
      %2458 = vmatprep.subr.mxu0 0.0
      %2459 = vmatpush1.msra.mxu0 0.0
      %2460 = vmatprep.subr.mxu0 0.0
      %2461 = vmatpush1.msra.mxu0 0.0
      %2462 = vmatprep.subr.mxu0 0.0
      %2463 = vmatpush1.msra.mxu0 0.0
      %2464 = vmatprep.subr.mxu0 0.0
      %2465 = vmatpush1.msra.mxu0 0.0
      %2466 = vmatprep.subr.mxu0 0.0
      %2467 = vmatpush1.msra.mxu0 0.0
      %2468 = vmatprep.subr.mxu0 0.0
      %2469 = vmatpush1.msra.mxu0 0.0
      %2470 = vmatprep.subr.mxu0 0.0
      %2471 = vmatpush1.msra.mxu0 0.0
      %2472 = vmatprep.subr.mxu0 0.0
      %2473 = vmatpush1.msra.mxu0 0.0
      %2474 = vmatprep.subr.mxu0 0.0
      %2475 = vmatpush1.msra.mxu0 0.0
      %2476 = vmatprep.subr.mxu0 0.0
      %2477 = vmatpush1.msra.mxu0 0.0
      %2478 = vmatprep.subr.mxu0 0.0
      %2479 = vmatpush1.msra.mxu0 0.0
      %2480 = vmatprep.subr.mxu0 0.0
      %2481 = vmatpush1.msra.mxu0 0.0
      %2482 = vmatprep.subr.mxu0 0.0
      %2483 = vmatpush1.msra.mxu0 0.0
      %2484 = vmatprep.subr.mxu0 0.0
      %2485 = vmatpush1.msra.mxu0 0.0
      %2486 = vmatprep.subr.mxu0 0.0
      %2487 = vmatpush1.msra.mxu0 0.0
      %2488 = vmatprep.subr.mxu0 0.0
      %2489 = vmatpush1.msra.mxu0 0.0
      %2490 = vmatprep.subr.mxu0 0.0
      %2491 = vmatpush1.msra.mxu0 0.0
      %2492 = vmatprep.subr.mxu0 0.0
      %2493 = vmatpush1.msra.mxu0 0.0
      %2494 = vmatprep.subr.mxu0 0.0
      %2495 = vmatpush1.msra.mxu0 0.0
      %2496 = vmatprep.subr.mxu0 0.0
      %2497 = vmatpush1.msra.mxu0 0.0
      %2498 = vmatprep.subr.mxu0 0.0
      %2499 = vmatpush1.msra.mxu0 0.0
      %2500 = vmatprep.subr.mxu0 0.0
      %2501 = vmatpush1.msra.mxu0 0.0
      %2502 = vmatprep.subr.mxu0 0.0
      %2503 = vmatpush1.msra.mxu0 0.0
      %2504 = vmatprep.subr.mxu0 0.0
      %2505 = vmatpush1.msra.mxu0 0.0
      %2506 = vmatprep.subr.mxu0 0.0
      %2507 = vmatpush1.msra.mxu0 0.0
      %2508 = vmatprep.mubr.f32.mxu0 0.0
      %2509 = vmatmul.mubr.f32.gmra.mrb[0].mxu0 %v2442
      %v2510 = vpop.f32.mrb[0].mxu0
      %v2511 = vadd.f32 %v895, %v2510
      %v2512 = vpop.f32.mrb[0].mxu0
      %2513 = vdwg.mxu0
      %v2514 = vmax.f32 %v2511, 0.0
      %v2516 = vsel %vm502, %v2514, 0
      %2518 = vmatprep.subr.mxu0 0.0
      %2519 = vmatpush1.msra.mxu0 %v491
      %2520 = vmatprep.subr.mxu0 0.0
      %2521 = vmatpush1.msra.mxu0 %v492
      %2522 = vmatprep.subr.mxu0 0.0
      %2523 = vmatpush1.msra.mxu0 %v493
      %2524 = vmatprep.subr.mxu0 0.0
      %2525 = vmatpush1.msra.mxu0 %v494
      %2526 = vmatprep.subr.mxu0 0.0
      %2527 = vmatpush1.msra.mxu0 0.0
      %2528 = vmatprep.subr.mxu0 0.0
      %2529 = vmatpush1.msra.mxu0 0.0
      %2530 = vmatprep.subr.mxu0 0.0
      %2531 = vmatpush1.msra.mxu0 0.0
      %2532 = vmatprep.subr.mxu0 0.0
      %2533 = vmatpush1.msra.mxu0 0.0
      %2534 = vmatprep.subr.mxu0 0.0
      %2535 = vmatpush1.msra.mxu0 0.0
      %2536 = vmatprep.subr.mxu0 0.0
      %2537 = vmatpush1.msra.mxu0 0.0
      %2538 = vmatprep.subr.mxu0 0.0
      %2539 = vmatpush1.msra.mxu0 0.0
      %2540 = vmatprep.subr.mxu0 0.0
      %2541 = vmatpush1.msra.mxu0 0.0
      %2542 = vmatprep.subr.mxu0 0.0
      %2543 = vmatpush1.msra.mxu0 0.0
      %2544 = vmatprep.subr.mxu0 0.0
      %2545 = vmatpush1.msra.mxu0 0.0
      %2546 = vmatprep.subr.mxu0 0.0
      %2547 = vmatpush1.msra.mxu0 0.0
      %2548 = vmatprep.subr.mxu0 0.0
      %2549 = vmatpush1.msra.mxu0 0.0
      %2550 = vmatprep.subr.mxu0 0.0
      %2551 = vmatpush1.msra.mxu0 0.0
      %2552 = vmatprep.subr.mxu0 0.0
      %2553 = vmatpush1.msra.mxu0 0.0
      %2554 = vmatprep.subr.mxu0 0.0
      %2555 = vmatpush1.msra.mxu0 0.0
      %2556 = vmatprep.subr.mxu0 0.0
      %2557 = vmatpush1.msra.mxu0 0.0
      %2558 = vmatprep.subr.mxu0 0.0
      %2559 = vmatpush1.msra.mxu0 0.0
      %2560 = vmatprep.subr.mxu0 0.0
      %2561 = vmatpush1.msra.mxu0 0.0
      %2562 = vmatprep.subr.mxu0 0.0
      %2563 = vmatpush1.msra.mxu0 0.0
      %2564 = vmatprep.subr.mxu0 0.0
      %2565 = vmatpush1.msra.mxu0 0.0
      %2566 = vmatprep.subr.mxu0 0.0
      %2567 = vmatpush1.msra.mxu0 0.0
      %2568 = vmatprep.subr.mxu0 0.0
      %2569 = vmatpush1.msra.mxu0 0.0
      %2570 = vmatprep.subr.mxu0 0.0
      %2571 = vmatpush1.msra.mxu0 0.0
      %2572 = vmatprep.subr.mxu0 0.0
      %2573 = vmatpush1.msra.mxu0 0.0
      %2574 = vmatprep.subr.mxu0 0.0
      %2575 = vmatpush1.msra.mxu0 0.0
      %2576 = vmatprep.subr.mxu0 0.0
      %2577 = vmatpush1.msra.mxu0 0.0
      %2578 = vmatprep.subr.mxu0 0.0
      %2579 = vmatpush1.msra.mxu0 0.0
      %2580 = vmatprep.subr.mxu0 0.0
      %2581 = vmatpush1.msra.mxu0 0.0
      %2582 = vmatprep.mubr.f32.mxu0 0.0
      %2583 = vmatmul.mubr.f32.gmra.mrb[0].mxu0 %v2516
      %v2584 = vpop.f32.mrb[0].mxu0
      %v2585 = vadd.f32 %v975, %v2584
      %v2586 = vpop.f32.mrb[0].mxu0
      %2587 = vdwg.mxu0
      %v2588 = vadd.f32 %v2585, %v2206
      %v2589 = vlaneseq
      %v2590 = vshrl.u32 %v2589, 7
      %v2591 = vsub.s32 2, %v2590
      %v2592 = vrot.slane %v485, %v2591
      %v2593 = vadd.f32 %v2279, %v2592
      %v2594 = vmax.f32 %v2593, 0.0
      %v2596 = vsel %vm502, %v2594, 0
      %2598 = vmatprep.subr.mxu0 0.0
      %2599 = vmatpush1.msra.mxu0 %v486
      %2600 = vmatprep.subr.mxu0 0.0
      %2601 = vmatpush1.msra.mxu0 %v487
      %2602 = vmatprep.subr.mxu0 0.0
      %2603 = vmatpush1.msra.mxu0 %v488
      %2604 = vmatprep.subr.mxu0 0.0
      %2605 = vmatpush1.msra.mxu0 %v489
      %2606 = vmatprep.subr.mxu0 0.0
      %2607 = vmatpush1.msra.mxu0 0.0
      %2608 = vmatprep.subr.mxu0 0.0
      %2609 = vmatpush1.msra.mxu0 0.0
      %2610 = vmatprep.subr.mxu0 0.0
      %2611 = vmatpush1.msra.mxu0 0.0
      %2612 = vmatprep.subr.mxu0 0.0
      %2613 = vmatpush1.msra.mxu0 0.0
      %2614 = vmatprep.subr.mxu0 0.0
      %2615 = vmatpush1.msra.mxu0 0.0
      %2616 = vmatprep.subr.mxu0 0.0
      %2617 = vmatpush1.msra.mxu0 0.0
      %2618 = vmatprep.subr.mxu0 0.0
      %2619 = vmatpush1.msra.mxu0 0.0
      %2620 = vmatprep.subr.mxu0 0.0
      %2621 = vmatpush1.msra.mxu0 0.0
      %2622 = vmatprep.subr.mxu0 0.0
      %2623 = vmatpush1.msra.mxu0 0.0
      %2624 = vmatprep.subr.mxu0 0.0
      %2625 = vmatpush1.msra.mxu0 0.0
      %2626 = vmatprep.subr.mxu0 0.0
      %2627 = vmatpush1.msra.mxu0 0.0
      %2628 = vmatprep.subr.mxu0 0.0
      %2629 = vmatpush1.msra.mxu0 0.0
      %2630 = vmatprep.subr.mxu0 0.0
      %2631 = vmatpush1.msra.mxu0 0.0
      %2632 = vmatprep.subr.mxu0 0.0
      %2633 = vmatpush1.msra.mxu0 0.0
      %2634 = vmatprep.subr.mxu0 0.0
      %2635 = vmatpush1.msra.mxu0 0.0
      %2636 = vmatprep.subr.mxu0 0.0
      %2637 = vmatpush1.msra.mxu0 0.0
      %2638 = vmatprep.subr.mxu0 0.0
      %2639 = vmatpush1.msra.mxu0 0.0
      %2640 = vmatprep.subr.mxu0 0.0
      %2641 = vmatpush1.msra.mxu0 0.0
      %2642 = vmatprep.subr.mxu0 0.0
      %2643 = vmatpush1.msra.mxu0 0.0
      %2644 = vmatprep.subr.mxu0 0.0
      %2645 = vmatpush1.msra.mxu0 0.0
      %2646 = vmatprep.subr.mxu0 0.0
      %2647 = vmatpush1.msra.mxu0 0.0
      %2648 = vmatprep.subr.mxu0 0.0
      %2649 = vmatpush1.msra.mxu0 0.0
      %2650 = vmatprep.subr.mxu0 0.0
      %2651 = vmatpush1.msra.mxu0 0.0
      %2652 = vmatprep.subr.mxu0 0.0
      %2653 = vmatpush1.msra.mxu0 0.0
      %2654 = vmatprep.subr.mxu0 0.0
      %2655 = vmatpush1.msra.mxu0 0.0
      %2656 = vmatprep.subr.mxu0 0.0
      %2657 = vmatpush1.msra.mxu0 0.0
      %2658 = vmatprep.subr.mxu0 0.0
      %2659 = vmatpush1.msra.mxu0 0.0
      %2660 = vmatprep.subr.mxu0 0.0
      %2661 = vmatpush1.msra.mxu0 0.0
      %2662 = vmatprep.mubr.f32.mxu0 0.0
      %2663 = vmatmul.mubr.f32.gmra.mrb[0].mxu0 %v2596
      %v2664 = vpop.f32.mrb[0].mxu0
      %v2665 = vadd.f32 %v895, %v2664
      %v2666 = vpop.f32.mrb[0].mxu0
      %2667 = vdwg.mxu0
      %v2668 = vmax.f32 %v2665, 0.0
      %v2670 = vsel %vm502, %v2668, 0
      %2672 = vmatprep.subr.mxu0 0.0
      %2673 = vmatpush1.msra.mxu0 %v491
      %2674 = vmatprep.subr.mxu0 0.0
      %2675 = vmatpush1.msra.mxu0 %v492
      %2676 = vmatprep.subr.mxu0 0.0
      %2677 = vmatpush1.msra.mxu0 %v493
      %2678 = vmatprep.subr.mxu0 0.0
      %2679 = vmatpush1.msra.mxu0 %v494
      %2680 = vmatprep.subr.mxu0 0.0
      %2681 = vmatpush1.msra.mxu0 0.0
      %2682 = vmatprep.subr.mxu0 0.0
      %2683 = vmatpush1.msra.mxu0 0.0
      %2684 = vmatprep.subr.mxu0 0.0
      %2685 = vmatpush1.msra.mxu0 0.0
      %2686 = vmatprep.subr.mxu0 0.0
      %2687 = vmatpush1.msra.mxu0 0.0
      %2688 = vmatprep.subr.mxu0 0.0
      %2689 = vmatpush1.msra.mxu0 0.0
      %2690 = vmatprep.subr.mxu0 0.0
      %2691 = vmatpush1.msra.mxu0 0.0
      %2692 = vmatprep.subr.mxu0 0.0
      %2693 = vmatpush1.msra.mxu0 0.0
      %2694 = vmatprep.subr.mxu0 0.0
      %2695 = vmatpush1.msra.mxu0 0.0
      %2696 = vmatprep.subr.mxu0 0.0
      %2697 = vmatpush1.msra.mxu0 0.0
      %2698 = vmatprep.subr.mxu0 0.0
      %2699 = vmatpush1.msra.mxu0 0.0
      %2700 = vmatprep.subr.mxu0 0.0
      %2701 = vmatpush1.msra.mxu0 0.0
      %2702 = vmatprep.subr.mxu0 0.0
      %2703 = vmatpush1.msra.mxu0 0.0
      %2704 = vmatprep.subr.mxu0 0.0
      %2705 = vmatpush1.msra.mxu0 0.0
      %2706 = vmatprep.subr.mxu0 0.0
      %2707 = vmatpush1.msra.mxu0 0.0
      %2708 = vmatprep.subr.mxu0 0.0
      %2709 = vmatpush1.msra.mxu0 0.0
      %2710 = vmatprep.subr.mxu0 0.0
      %2711 = vmatpush1.msra.mxu0 0.0
      %2712 = vmatprep.subr.mxu0 0.0
      %2713 = vmatpush1.msra.mxu0 0.0
      %2714 = vmatprep.subr.mxu0 0.0
      %2715 = vmatpush1.msra.mxu0 0.0
      %2716 = vmatprep.subr.mxu0 0.0
      %2717 = vmatpush1.msra.mxu0 0.0
      %2718 = vmatprep.subr.mxu0 0.0
      %2719 = vmatpush1.msra.mxu0 0.0
      %2720 = vmatprep.subr.mxu0 0.0
      %2721 = vmatpush1.msra.mxu0 0.0
      %2722 = vmatprep.subr.mxu0 0.0
      %2723 = vmatpush1.msra.mxu0 0.0
      %2724 = vmatprep.subr.mxu0 0.0
      %2725 = vmatpush1.msra.mxu0 0.0
      %2726 = vmatprep.subr.mxu0 0.0
      %2727 = vmatpush1.msra.mxu0 0.0
      %2728 = vmatprep.subr.mxu0 0.0
      %2729 = vmatpush1.msra.mxu0 0.0
      %2730 = vmatprep.subr.mxu0 0.0
      %2731 = vmatpush1.msra.mxu0 0.0
      %2732 = vmatprep.subr.mxu0 0.0
      %2733 = vmatpush1.msra.mxu0 0.0
      %2734 = vmatprep.subr.mxu0 0.0
      %2735 = vmatpush1.msra.mxu0 0.0
      %2736 = vmatprep.mubr.f32.mxu0 0.0
      %2737 = vmatmul.mubr.f32.gmra.mrb[0].mxu0 %v2670
      %v2738 = vpop.f32.mrb[0].mxu0
      %v2739 = vadd.f32 %v975, %v2738
      %v2740 = vpop.f32.mrb[0].mxu0
      %2741 = vdwg.mxu0
      %v2742 = vadd.f32 %v2739, %v2206
      %v2743 = vlaneseq
      %v2744 = vshrl.u32 %v2743, 7
      %v2745 = vsub.s32 3, %v2744
      %v2746 = vrot.slane %v485, %v2745
      %v2747 = vadd.f32 %v2279, %v2746
      %v2748 = vmax.f32 %v2747, 0.0
      %v2750 = vsel %vm502, %v2748, 0
      %2752 = vmatprep.subr.mxu0 0.0
      %2753 = vmatpush1.msra.mxu0 %v486
      %2754 = vmatprep.subr.mxu0 0.0
      %2755 = vmatpush1.msra.mxu0 %v487
      %2756 = vmatprep.subr.mxu0 0.0
      %2757 = vmatpush1.msra.mxu0 %v488
      %2758 = vmatprep.subr.mxu0 0.0
      %2759 = vmatpush1.msra.mxu0 %v489
      %2760 = vmatprep.subr.mxu0 0.0
      %2761 = vmatpush1.msra.mxu0 0.0
      %2762 = vmatprep.subr.mxu0 0.0
      %2763 = vmatpush1.msra.mxu0 0.0
      %2764 = vmatprep.subr.mxu0 0.0
      %2765 = vmatpush1.msra.mxu0 0.0
      %2766 = vmatprep.subr.mxu0 0.0
      %2767 = vmatpush1.msra.mxu0 0.0
      %2768 = vmatprep.subr.mxu0 0.0
      %2769 = vmatpush1.msra.mxu0 0.0
      %2770 = vmatprep.subr.mxu0 0.0
      %2771 = vmatpush1.msra.mxu0 0.0
      %2772 = vmatprep.subr.mxu0 0.0
      %2773 = vmatpush1.msra.mxu0 0.0
      %2774 = vmatprep.subr.mxu0 0.0
      %2775 = vmatpush1.msra.mxu0 0.0
      %2776 = vmatprep.subr.mxu0 0.0
      %2777 = vmatpush1.msra.mxu0 0.0
      %2778 = vmatprep.subr.mxu0 0.0
      %2779 = vmatpush1.msra.mxu0 0.0
      %2780 = vmatprep.subr.mxu0 0.0
      %2781 = vmatpush1.msra.mxu0 0.0
      %2782 = vmatprep.subr.mxu0 0.0
      %2783 = vmatpush1.msra.mxu0 0.0
      %2784 = vmatprep.subr.mxu0 0.0
      %2785 = vmatpush1.msra.mxu0 0.0
      %2786 = vmatprep.subr.mxu0 0.0
      %2787 = vmatpush1.msra.mxu0 0.0
      %2788 = vmatprep.subr.mxu0 0.0
      %2789 = vmatpush1.msra.mxu0 0.0
      %2790 = vmatprep.subr.mxu0 0.0
      %2791 = vmatpush1.msra.mxu0 0.0
      %2792 = vmatprep.subr.mxu0 0.0
      %2793 = vmatpush1.msra.mxu0 0.0
      %2794 = vmatprep.subr.mxu0 0.0
      %2795 = vmatpush1.msra.mxu0 0.0
      %2796 = vmatprep.subr.mxu0 0.0
      %2797 = vmatpush1.msra.mxu0 0.0
      %2798 = vmatprep.subr.mxu0 0.0
      %2799 = vmatpush1.msra.mxu0 0.0
      %2800 = vmatprep.subr.mxu0 0.0
      %2801 = vmatpush1.msra.mxu0 0.0
      %2802 = vmatprep.subr.mxu0 0.0
      %2803 = vmatpush1.msra.mxu0 0.0
      %2804 = vmatprep.subr.mxu0 0.0
      %2805 = vmatpush1.msra.mxu0 0.0
      %2806 = vmatprep.subr.mxu0 0.0
      %2807 = vmatpush1.msra.mxu0 0.0
      %2808 = vmatprep.subr.mxu0 0.0
      %2809 = vmatpush1.msra.mxu0 0.0
      %2810 = vmatprep.subr.mxu0 0.0
      %2811 = vmatpush1.msra.mxu0 0.0
      %2812 = vmatprep.subr.mxu0 0.0
      %2813 = vmatpush1.msra.mxu0 0.0
      %2814 = vmatprep.subr.mxu0 0.0
      %2815 = vmatpush1.msra.mxu0 0.0
      %2816 = vmatprep.mubr.f32.mxu0 0.0
      %2817 = vmatmul.mubr.f32.gmra.mrb[0].mxu0 %v2750
      %v2818 = vpop.f32.mrb[0].mxu0
      %v2819 = vadd.f32 %v895, %v2818
      %v2820 = vpop.f32.mrb[0].mxu0
      %2821 = vdwg.mxu0
      %v2822 = vmax.f32 %v2819, 0.0
      %v2824 = vsel %vm502, %v2822, 0
      %2826 = vmatprep.subr.mxu0 0.0
      %2827 = vmatpush1.msra.mxu0 %v491
      %2828 = vmatprep.subr.mxu0 0.0
      %2829 = vmatpush1.msra.mxu0 %v492
      %2830 = vmatprep.subr.mxu0 0.0
      %2831 = vmatpush1.msra.mxu0 %v493
      %2832 = vmatprep.subr.mxu0 0.0
      %2833 = vmatpush1.msra.mxu0 %v494
      %2834 = vmatprep.subr.mxu0 0.0
      %2835 = vmatpush1.msra.mxu0 0.0
      %2836 = vmatprep.subr.mxu0 0.0
      %2837 = vmatpush1.msra.mxu0 0.0
      %2838 = vmatprep.subr.mxu0 0.0
      %2839 = vmatpush1.msra.mxu0 0.0
      %2840 = vmatprep.subr.mxu0 0.0
      %2841 = vmatpush1.msra.mxu0 0.0
      %2842 = vmatprep.subr.mxu0 0.0
      %2843 = vmatpush1.msra.mxu0 0.0
      %2844 = vmatprep.subr.mxu0 0.0
      %2845 = vmatpush1.msra.mxu0 0.0
      %2846 = vmatprep.subr.mxu0 0.0
      %2847 = vmatpush1.msra.mxu0 0.0
      %2848 = vmatprep.subr.mxu0 0.0
      %2849 = vmatpush1.msra.mxu0 0.0
      %2850 = vmatprep.subr.mxu0 0.0
      %2851 = vmatpush1.msra.mxu0 0.0
      %2852 = vmatprep.subr.mxu0 0.0
      %2853 = vmatpush1.msra.mxu0 0.0
      %2854 = vmatprep.subr.mxu0 0.0
      %2855 = vmatpush1.msra.mxu0 0.0
      %2856 = vmatprep.subr.mxu0 0.0
      %2857 = vmatpush1.msra.mxu0 0.0
      %2858 = vmatprep.subr.mxu0 0.0
      %2859 = vmatpush1.msra.mxu0 0.0
      %2860 = vmatprep.subr.mxu0 0.0
      %2861 = vmatpush1.msra.mxu0 0.0
      %2862 = vmatprep.subr.mxu0 0.0
      %2863 = vmatpush1.msra.mxu0 0.0
      %2864 = vmatprep.subr.mxu0 0.0
      %2865 = vmatpush1.msra.mxu0 0.0
      %2866 = vmatprep.subr.mxu0 0.0
      %2867 = vmatpush1.msra.mxu0 0.0
      %2868 = vmatprep.subr.mxu0 0.0
      %2869 = vmatpush1.msra.mxu0 0.0
      %2870 = vmatprep.subr.mxu0 0.0
      %2871 = vmatpush1.msra.mxu0 0.0
      %2872 = vmatprep.subr.mxu0 0.0
      %2873 = vmatpush1.msra.mxu0 0.0
      %2874 = vmatprep.subr.mxu0 0.0
      %2875 = vmatpush1.msra.mxu0 0.0
      %2876 = vmatprep.subr.mxu0 0.0
      %2877 = vmatpush1.msra.mxu0 0.0
      %2878 = vmatprep.subr.mxu0 0.0
      %2879 = vmatpush1.msra.mxu0 0.0
      %2880 = vmatprep.subr.mxu0 0.0
      %2881 = vmatpush1.msra.mxu0 0.0
      %2882 = vmatprep.subr.mxu0 0.0
      %2883 = vmatpush1.msra.mxu0 0.0
      %2884 = vmatprep.subr.mxu0 0.0
      %2885 = vmatpush1.msra.mxu0 0.0
      %2886 = vmatprep.subr.mxu0 0.0
      %2887 = vmatpush1.msra.mxu0 0.0
      %2888 = vmatprep.subr.mxu0 0.0
      %2889 = vmatpush1.msra.mxu0 0.0
      %2890 = vmatprep.mubr.f32.mxu0 0.0
      %2891 = vmatmul.mubr.f32.gmra.mrb[0].mxu0 %v2824
      %v2892 = vpop.f32.mrb[0].mxu0
      %v2893 = vadd.f32 %v975, %v2892
      %v2894 = vpop.f32.mrb[0].mxu0
      %2895 = vdwg.mxu0
      %v2896 = vadd.f32 %v2893, %v2206
      %2897 = vrot.lane.b32.xlu0 %v733, 119
      %v2898 = vpop.permute.xlu0 %2897
      %v2899 = vsel %vm806, %v2898, 0
      %2901 = vmatprep.subr.mxu0 0.0
      %2902 = vmatpush1.msra.mxu0 %v812
      %2903 = vmatprep.subr.mxu0 0.0
      %2904 = vmatpush1.msra.mxu0 0.0
      %2905 = vmatprep.subr.mxu0 0.0
      %2906 = vmatpush1.msra.mxu0 0.0
      %2907 = vmatprep.subr.mxu0 0.0
      %2908 = vmatpush1.msra.mxu0 0.0
      %2909 = vmatprep.subr.mxu0 0.0
      %2910 = vmatpush1.msra.mxu0 0.0
      %2911 = vmatprep.subr.mxu0 0.0
      %2912 = vmatpush1.msra.mxu0 0.0
      %2913 = vmatprep.subr.mxu0 0.0
      %2914 = vmatpush1.msra.mxu0 0.0
      %2915 = vmatprep.subr.mxu0 0.0
      %2916 = vmatpush1.msra.mxu0 0.0
      %2917 = vmatprep.subr.mxu0 0.0
      %2918 = vmatpush1.msra.mxu0 0.0
      %2919 = vmatprep.subr.mxu0 0.0
      %2920 = vmatpush1.msra.mxu0 0.0
      %2921 = vmatprep.subr.mxu0 0.0
      %2922 = vmatpush1.msra.mxu0 0.0
      %2923 = vmatprep.subr.mxu0 0.0
      %2924 = vmatpush1.msra.mxu0 0.0
      %2925 = vmatprep.subr.mxu0 0.0
      %2926 = vmatpush1.msra.mxu0 0.0
      %2927 = vmatprep.subr.mxu0 0.0
      %2928 = vmatpush1.msra.mxu0 0.0
      %2929 = vmatprep.subr.mxu0 0.0
      %2930 = vmatpush1.msra.mxu0 0.0
      %2931 = vmatprep.subr.mxu0 0.0
      %2932 = vmatpush1.msra.mxu0 0.0
      %2933 = vmatprep.subr.mxu0 0.0
      %2934 = vmatpush1.msra.mxu0 0.0
      %2935 = vmatprep.subr.mxu0 0.0
      %2936 = vmatpush1.msra.mxu0 0.0
      %2937 = vmatprep.subr.mxu0 0.0
      %2938 = vmatpush1.msra.mxu0 0.0
      %2939 = vmatprep.subr.mxu0 0.0
      %2940 = vmatpush1.msra.mxu0 0.0
      %2941 = vmatprep.subr.mxu0 0.0
      %2942 = vmatpush1.msra.mxu0 0.0
      %2943 = vmatprep.subr.mxu0 0.0
      %2944 = vmatpush1.msra.mxu0 0.0
      %2945 = vmatprep.subr.mxu0 0.0
      %2946 = vmatpush1.msra.mxu0 0.0
      %2947 = vmatprep.subr.mxu0 0.0
      %2948 = vmatpush1.msra.mxu0 0.0
      %2949 = vmatprep.subr.mxu0 0.0
      %2950 = vmatpush1.msra.mxu0 0.0
      %2951 = vmatprep.subr.mxu0 0.0
      %2952 = vmatpush1.msra.mxu0 0.0
      %2953 = vmatprep.subr.mxu0 0.0
      %2954 = vmatpush1.msra.mxu0 0.0
      %2955 = vmatprep.subr.mxu0 0.0
      %2956 = vmatpush1.msra.mxu0 0.0
      %2957 = vmatprep.subr.mxu0 0.0
      %2958 = vmatpush1.msra.mxu0 0.0
      %2959 = vmatprep.subr.mxu0 0.0
      %2960 = vmatpush1.msra.mxu0 0.0
      %2961 = vmatprep.subr.mxu0 0.0
      %2962 = vmatpush1.msra.mxu0 0.0
      %2963 = vmatprep.subr.mxu0 0.0
      %2964 = vmatpush1.msra.mxu0 0.0
      %2965 = vmatprep.mubr.f32.mxu0 0.0
      %2966 = vmatmul.mubr.f32.gmra.mrb[0].mxu0 %v2899
      %v2967 = vpop.f32.mrb[0].mxu0
      %v2968 = vadd.f32 0.0, %v2967
      %v2969 = vpop.f32.mrb[0].mxu0
      %2970 = vdwg.mxu0
      %v2971 = vadd.f32 %v803, %v2968
      %v2972 = vlaneseq
      %v2973 = vshrl.u32 %v2972, 7
      %v2974 = vsub.s32 4, %v2973
      %v2975 = vrot.slane %v485, %v2974
      %v2976 = vadd.f32 %v2971, %v2975
      %v2977 = vmax.f32 %v2976, 0.0
      %v2979 = vsel %vm502, %v2977, 0
      %2981 = vmatprep.subr.mxu0 0.0
      %2982 = vmatpush1.msra.mxu0 %v486
      %2983 = vmatprep.subr.mxu0 0.0
      %2984 = vmatpush1.msra.mxu0 %v487
      %2985 = vmatprep.subr.mxu0 0.0
      %2986 = vmatpush1.msra.mxu0 %v488
      %2987 = vmatprep.subr.mxu0 0.0
      %2988 = vmatpush1.msra.mxu0 %v489
      %2989 = vmatprep.subr.mxu0 0.0
      %2990 = vmatpush1.msra.mxu0 0.0
      %2991 = vmatprep.subr.mxu0 0.0
      %2992 = vmatpush1.msra.mxu0 0.0
      %2993 = vmatprep.subr.mxu0 0.0
      %2994 = vmatpush1.msra.mxu0 0.0
      %2995 = vmatprep.subr.mxu0 0.0
      %2996 = vmatpush1.msra.mxu0 0.0
      %2997 = vmatprep.subr.mxu0 0.0
      %2998 = vmatpush1.msra.mxu0 0.0
      %2999 = vmatprep.subr.mxu0 0.0
      %3000 = vmatpush1.msra.mxu0 0.0
      %3001 = vmatprep.subr.mxu0 0.0
      %3002 = vmatpush1.msra.mxu0 0.0
      %3003 = vmatprep.subr.mxu0 0.0
      %3004 = vmatpush1.msra.mxu0 0.0
      %3005 = vmatprep.subr.mxu0 0.0
      %3006 = vmatpush1.msra.mxu0 0.0
      %3007 = vmatprep.subr.mxu0 0.0
      %3008 = vmatpush1.msra.mxu0 0.0
      %3009 = vmatprep.subr.mxu0 0.0
      %3010 = vmatpush1.msra.mxu0 0.0
      %3011 = vmatprep.subr.mxu0 0.0
      %3012 = vmatpush1.msra.mxu0 0.0
      %3013 = vmatprep.subr.mxu0 0.0
      %3014 = vmatpush1.msra.mxu0 0.0
      %3015 = vmatprep.subr.mxu0 0.0
      %3016 = vmatpush1.msra.mxu0 0.0
      %3017 = vmatprep.subr.mxu0 0.0
      %3018 = vmatpush1.msra.mxu0 0.0
      %3019 = vmatprep.subr.mxu0 0.0
      %3020 = vmatpush1.msra.mxu0 0.0
      %3021 = vmatprep.subr.mxu0 0.0
      %3022 = vmatpush1.msra.mxu0 0.0
      %3023 = vmatprep.subr.mxu0 0.0
      %3024 = vmatpush1.msra.mxu0 0.0
      %3025 = vmatprep.subr.mxu0 0.0
      %3026 = vmatpush1.msra.mxu0 0.0
      %3027 = vmatprep.subr.mxu0 0.0
      %3028 = vmatpush1.msra.mxu0 0.0
      %3029 = vmatprep.subr.mxu0 0.0
      %3030 = vmatpush1.msra.mxu0 0.0
      %3031 = vmatprep.subr.mxu0 0.0
      %3032 = vmatpush1.msra.mxu0 0.0
      %3033 = vmatprep.subr.mxu0 0.0
      %3034 = vmatpush1.msra.mxu0 0.0
      %3035 = vmatprep.subr.mxu0 0.0
      %3036 = vmatpush1.msra.mxu0 0.0
      %3037 = vmatprep.subr.mxu0 0.0
      %3038 = vmatpush1.msra.mxu0 0.0
      %3039 = vmatprep.subr.mxu0 0.0
      %3040 = vmatpush1.msra.mxu0 0.0
      %3041 = vmatprep.subr.mxu0 0.0
      %3042 = vmatpush1.msra.mxu0 0.0
      %3043 = vmatprep.subr.mxu0 0.0
      %3044 = vmatpush1.msra.mxu0 0.0
      %3045 = vmatprep.mubr.f32.mxu0 0.0
      %3046 = vmatmul.mubr.f32.gmra.mrb[0].mxu0 %v2979
      %v3047 = vpop.f32.mrb[0].mxu0
      %v3048 = vadd.f32 %v895, %v3047
      %v3049 = vpop.f32.mrb[0].mxu0
      %3050 = vdwg.mxu0
      %v3051 = vmax.f32 %v3048, 0.0
      %v3053 = vsel %vm502, %v3051, 0
      %3055 = vmatprep.subr.mxu0 0.0
      %3056 = vmatpush1.msra.mxu0 %v491
      %3057 = vmatprep.subr.mxu0 0.0
      %3058 = vmatpush1.msra.mxu0 %v492
      %3059 = vmatprep.subr.mxu0 0.0
      %3060 = vmatpush1.msra.mxu0 %v493
      %3061 = vmatprep.subr.mxu0 0.0
      %3062 = vmatpush1.msra.mxu0 %v494
      %3063 = vmatprep.subr.mxu0 0.0
      %3064 = vmatpush1.msra.mxu0 0.0
      %3065 = vmatprep.subr.mxu0 0.0
      %3066 = vmatpush1.msra.mxu0 0.0
      %3067 = vmatprep.subr.mxu0 0.0
      %3068 = vmatpush1.msra.mxu0 0.0
      %3069 = vmatprep.subr.mxu0 0.0
      %3070 = vmatpush1.msra.mxu0 0.0
      %3071 = vmatprep.subr.mxu0 0.0
      %3072 = vmatpush1.msra.mxu0 0.0
      %3073 = vmatprep.subr.mxu0 0.0
      %3074 = vmatpush1.msra.mxu0 0.0
      %3075 = vmatprep.subr.mxu0 0.0
      %3076 = vmatpush1.msra.mxu0 0.0
      %3077 = vmatprep.subr.mxu0 0.0
      %3078 = vmatpush1.msra.mxu0 0.0
      %3079 = vmatprep.subr.mxu0 0.0
      %3080 = vmatpush1.msra.mxu0 0.0
      %3081 = vmatprep.subr.mxu0 0.0
      %3082 = vmatpush1.msra.mxu0 0.0
      %3083 = vmatprep.subr.mxu0 0.0
      %3084 = vmatpush1.msra.mxu0 0.0
      %3085 = vmatprep.subr.mxu0 0.0
      %3086 = vmatpush1.msra.mxu0 0.0
      %3087 = vmatprep.subr.mxu0 0.0
      %3088 = vmatpush1.msra.mxu0 0.0
      %3089 = vmatprep.subr.mxu0 0.0
      %3090 = vmatpush1.msra.mxu0 0.0
      %3091 = vmatprep.subr.mxu0 0.0
      %3092 = vmatpush1.msra.mxu0 0.0
      %3093 = vmatprep.subr.mxu0 0.0
      %3094 = vmatpush1.msra.mxu0 0.0
      %3095 = vmatprep.subr.mxu0 0.0
      %3096 = vmatpush1.msra.mxu0 0.0
      %3097 = vmatprep.subr.mxu0 0.0
      %3098 = vmatpush1.msra.mxu0 0.0
      %3099 = vmatprep.subr.mxu0 0.0
      %3100 = vmatpush1.msra.mxu0 0.0
      %3101 = vmatprep.subr.mxu0 0.0
      %3102 = vmatpush1.msra.mxu0 0.0
      %3103 = vmatprep.subr.mxu0 0.0
      %3104 = vmatpush1.msra.mxu0 0.0
      %3105 = vmatprep.subr.mxu0 0.0
      %3106 = vmatpush1.msra.mxu0 0.0
      %3107 = vmatprep.subr.mxu0 0.0
      %3108 = vmatpush1.msra.mxu0 0.0
      %3109 = vmatprep.subr.mxu0 0.0
      %3110 = vmatpush1.msra.mxu0 0.0
      %3111 = vmatprep.subr.mxu0 0.0
      %3112 = vmatpush1.msra.mxu0 0.0
      %3113 = vmatprep.subr.mxu0 0.0
      %3114 = vmatpush1.msra.mxu0 0.0
      %3115 = vmatprep.subr.mxu0 0.0
      %3116 = vmatpush1.msra.mxu0 0.0
      %3117 = vmatprep.subr.mxu0 0.0
      %3118 = vmatpush1.msra.mxu0 0.0
      %3119 = vmatprep.mubr.f32.mxu0 0.0
      %3120 = vmatmul.mubr.f32.gmra.mrb[0].mxu0 %v3053
      %v3121 = vpop.f32.mrb[0].mxu0
      %v3122 = vadd.f32 %v975, %v3121
      %v3123 = vpop.f32.mrb[0].mxu0
      %3124 = vdwg.mxu0
      %v3126 = vadd.f32 %v3122, %v2898
      %v3127 = vlaneseq
      %v3128 = vshrl.u32 %v3127, 7
      %v3129 = vsub.s32 5, %v3128
      %v3130 = vrot.slane %v485, %v3129
      %v3131 = vadd.f32 %v2971, %v3130
      %v3132 = vmax.f32 %v3131, 0.0
      %v3134 = vsel %vm502, %v3132, 0
      %3136 = vmatprep.subr.mxu0 0.0
      %3137 = vmatpush1.msra.mxu0 %v486
      %3138 = vmatprep.subr.mxu0 0.0
      %3139 = vmatpush1.msra.mxu0 %v487
      %3140 = vmatprep.subr.mxu0 0.0
      %3141 = vmatpush1.msra.mxu0 %v488
      %3142 = vmatprep.subr.mxu0 0.0
      %3143 = vmatpush1.msra.mxu0 %v489
      %3144 = vmatprep.subr.mxu0 0.0
      %3145 = vmatpush1.msra.mxu0 0.0
      %3146 = vmatprep.subr.mxu0 0.0
      %3147 = vmatpush1.msra.mxu0 0.0
      %3148 = vmatprep.subr.mxu0 0.0
      %3149 = vmatpush1.msra.mxu0 0.0
      %3150 = vmatprep.subr.mxu0 0.0
      %3151 = vmatpush1.msra.mxu0 0.0
      %3152 = vmatprep.subr.mxu0 0.0
      %3153 = vmatpush1.msra.mxu0 0.0
      %3154 = vmatprep.subr.mxu0 0.0
      %3155 = vmatpush1.msra.mxu0 0.0
      %3156 = vmatprep.subr.mxu0 0.0
      %3157 = vmatpush1.msra.mxu0 0.0
      %3158 = vmatprep.subr.mxu0 0.0
      %3159 = vmatpush1.msra.mxu0 0.0
      %3160 = vmatprep.subr.mxu0 0.0
      %3161 = vmatpush1.msra.mxu0 0.0
      %3162 = vmatprep.subr.mxu0 0.0
      %3163 = vmatpush1.msra.mxu0 0.0
      %3164 = vmatprep.subr.mxu0 0.0
      %3165 = vmatpush1.msra.mxu0 0.0
      %3166 = vmatprep.subr.mxu0 0.0
      %3167 = vmatpush1.msra.mxu0 0.0
      %3168 = vmatprep.subr.mxu0 0.0
      %3169 = vmatpush1.msra.mxu0 0.0
      %3170 = vmatprep.subr.mxu0 0.0
      %3171 = vmatpush1.msra.mxu0 0.0
      %3172 = vmatprep.subr.mxu0 0.0
      %3173 = vmatpush1.msra.mxu0 0.0
      %3174 = vmatprep.subr.mxu0 0.0
      %3175 = vmatpush1.msra.mxu0 0.0
      %3176 = vmatprep.subr.mxu0 0.0
      %3177 = vmatpush1.msra.mxu0 0.0
      %3178 = vmatprep.subr.mxu0 0.0
      %3179 = vmatpush1.msra.mxu0 0.0
      %3180 = vmatprep.subr.mxu0 0.0
      %3181 = vmatpush1.msra.mxu0 0.0
      %3182 = vmatprep.subr.mxu0 0.0
      %3183 = vmatpush1.msra.mxu0 0.0
      %3184 = vmatprep.subr.mxu0 0.0
      %3185 = vmatpush1.msra.mxu0 0.0
      %3186 = vmatprep.subr.mxu0 0.0
      %3187 = vmatpush1.msra.mxu0 0.0
      %3188 = vmatprep.subr.mxu0 0.0
      %3189 = vmatpush1.msra.mxu0 0.0
      %3190 = vmatprep.subr.mxu0 0.0
      %3191 = vmatpush1.msra.mxu0 0.0
      %3192 = vmatprep.subr.mxu0 0.0
      %3193 = vmatpush1.msra.mxu0 0.0
      %3194 = vmatprep.subr.mxu0 0.0
      %3195 = vmatpush1.msra.mxu0 0.0
      %3196 = vmatprep.subr.mxu0 0.0
      %3197 = vmatpush1.msra.mxu0 0.0
      %3198 = vmatprep.subr.mxu0 0.0
      %3199 = vmatpush1.msra.mxu0 0.0
      %3200 = vmatprep.mubr.f32.mxu0 0.0
      %3201 = vmatmul.mubr.f32.gmra.mrb[0].mxu0 %v3134
      %v3202 = vpop.f32.mrb[0].mxu0
      %v3203 = vadd.f32 %v895, %v3202
      %v3204 = vpop.f32.mrb[0].mxu0
      %3205 = vdwg.mxu0
      %v3206 = vmax.f32 %v3203, 0.0
      %v3208 = vsel %vm502, %v3206, 0
      %3210 = vmatprep.subr.mxu0 0.0
      %3211 = vmatpush1.msra.mxu0 %v491
      %3212 = vmatprep.subr.mxu0 0.0
      %3213 = vmatpush1.msra.mxu0 %v492
      %3214 = vmatprep.subr.mxu0 0.0
      %3215 = vmatpush1.msra.mxu0 %v493
      %3216 = vmatprep.subr.mxu0 0.0
      %3217 = vmatpush1.msra.mxu0 %v494
      %3218 = vmatprep.subr.mxu0 0.0
      %3219 = vmatpush1.msra.mxu0 0.0
      %3220 = vmatprep.subr.mxu0 0.0
      %3221 = vmatpush1.msra.mxu0 0.0
      %3222 = vmatprep.subr.mxu0 0.0
      %3223 = vmatpush1.msra.mxu0 0.0
      %3224 = vmatprep.subr.mxu0 0.0
      %3225 = vmatpush1.msra.mxu0 0.0
      %3226 = vmatprep.subr.mxu0 0.0
      %3227 = vmatpush1.msra.mxu0 0.0
      %3228 = vmatprep.subr.mxu0 0.0
      %3229 = vmatpush1.msra.mxu0 0.0
      %3230 = vmatprep.subr.mxu0 0.0
      %3231 = vmatpush1.msra.mxu0 0.0
      %3232 = vmatprep.subr.mxu0 0.0
      %3233 = vmatpush1.msra.mxu0 0.0
      %3234 = vmatprep.subr.mxu0 0.0
      %3235 = vmatpush1.msra.mxu0 0.0
      %3236 = vmatprep.subr.mxu0 0.0
      %3237 = vmatpush1.msra.mxu0 0.0
      %3238 = vmatprep.subr.mxu0 0.0
      %3239 = vmatpush1.msra.mxu0 0.0
      %3240 = vmatprep.subr.mxu0 0.0
      %3241 = vmatpush1.msra.mxu0 0.0
      %3242 = vmatprep.subr.mxu0 0.0
      %3243 = vmatpush1.msra.mxu0 0.0
      %3244 = vmatprep.subr.mxu0 0.0
      %3245 = vmatpush1.msra.mxu0 0.0
      %3246 = vmatprep.subr.mxu0 0.0
      %3247 = vmatpush1.msra.mxu0 0.0
      %3248 = vmatprep.subr.mxu0 0.0
      %3249 = vmatpush1.msra.mxu0 0.0
      %3250 = vmatprep.subr.mxu0 0.0
      %3251 = vmatpush1.msra.mxu0 0.0
      %3252 = vmatprep.subr.mxu0 0.0
      %3253 = vmatpush1.msra.mxu0 0.0
      %3254 = vmatprep.subr.mxu0 0.0
      %3255 = vmatpush1.msra.mxu0 0.0
      %3256 = vmatprep.subr.mxu0 0.0
      %3257 = vmatpush1.msra.mxu0 0.0
      %3258 = vmatprep.subr.mxu0 0.0
      %3259 = vmatpush1.msra.mxu0 0.0
      %3260 = vmatprep.subr.mxu0 0.0
      %3261 = vmatpush1.msra.mxu0 0.0
      %3262 = vmatprep.subr.mxu0 0.0
      %3263 = vmatpush1.msra.mxu0 0.0
      %3264 = vmatprep.subr.mxu0 0.0
      %3265 = vmatpush1.msra.mxu0 0.0
      %3266 = vmatprep.subr.mxu0 0.0
      %3267 = vmatpush1.msra.mxu0 0.0
      %3268 = vmatprep.subr.mxu0 0.0
      %3269 = vmatpush1.msra.mxu0 0.0
      %3270 = vmatprep.subr.mxu0 0.0
      %3271 = vmatpush1.msra.mxu0 0.0
      %3272 = vmatprep.subr.mxu0 0.0
      %3273 = vmatpush1.msra.mxu0 0.0
      %3274 = vmatprep.mubr.f32.mxu0 0.0
      %3275 = vmatmul.mubr.f32.gmra.mrb[0].mxu0 %v3208
      %v3276 = vpop.f32.mrb[0].mxu0
      %v3277 = vadd.f32 %v975, %v3276
      %v3278 = vpop.f32.mrb[0].mxu0
      %3279 = vdwg.mxu0
      %v3280 = vadd.f32 %v3277, %v2898
      %v3281 = vlaneseq
      %v3282 = vshrl.u32 %v3281, 7
      %v3283 = vsub.s32 6, %v3282
      %v3284 = vrot.slane %v485, %v3283
      %v3285 = vadd.f32 %v2971, %v3284
      %v3286 = vmax.f32 %v3285, 0.0
      %v3288 = vsel %vm502, %v3286, 0
      %3290 = vmatprep.subr.mxu0 0.0
      %3291 = vmatpush1.msra.mxu0 %v486
      %3292 = vmatprep.subr.mxu0 0.0
      %3293 = vmatpush1.msra.mxu0 %v487
      %3294 = vmatprep.subr.mxu0 0.0
      %3295 = vmatpush1.msra.mxu0 %v488
      %3296 = vmatprep.subr.mxu0 0.0
      %3297 = vmatpush1.msra.mxu0 %v489
      %3298 = vmatprep.subr.mxu0 0.0
      %3299 = vmatpush1.msra.mxu0 0.0
      %3300 = vmatprep.subr.mxu0 0.0
      %3301 = vmatpush1.msra.mxu0 0.0
      %3302 = vmatprep.subr.mxu0 0.0
      %3303 = vmatpush1.msra.mxu0 0.0
      %3304 = vmatprep.subr.mxu0 0.0
      %3305 = vmatpush1.msra.mxu0 0.0
      %3306 = vmatprep.subr.mxu0 0.0
      %3307 = vmatpush1.msra.mxu0 0.0
      %3308 = vmatprep.subr.mxu0 0.0
      %3309 = vmatpush1.msra.mxu0 0.0
      %3310 = vmatprep.subr.mxu0 0.0
      %3311 = vmatpush1.msra.mxu0 0.0
      %3312 = vmatprep.subr.mxu0 0.0
      %3313 = vmatpush1.msra.mxu0 0.0
      %3314 = vmatprep.subr.mxu0 0.0
      %3315 = vmatpush1.msra.mxu0 0.0
      %3316 = vmatprep.subr.mxu0 0.0
      %3317 = vmatpush1.msra.mxu0 0.0
      %3318 = vmatprep.subr.mxu0 0.0
      %3319 = vmatpush1.msra.mxu0 0.0
      %3320 = vmatprep.subr.mxu0 0.0
      %3321 = vmatpush1.msra.mxu0 0.0
      %3322 = vmatprep.subr.mxu0 0.0
      %3323 = vmatpush1.msra.mxu0 0.0
      %3324 = vmatprep.subr.mxu0 0.0
      %3325 = vmatpush1.msra.mxu0 0.0
      %3326 = vmatprep.subr.mxu0 0.0
      %3327 = vmatpush1.msra.mxu0 0.0
      %3328 = vmatprep.subr.mxu0 0.0
      %3329 = vmatpush1.msra.mxu0 0.0
      %3330 = vmatprep.subr.mxu0 0.0
      %3331 = vmatpush1.msra.mxu0 0.0
      %3332 = vmatprep.subr.mxu0 0.0
      %3333 = vmatpush1.msra.mxu0 0.0
      %3334 = vmatprep.subr.mxu0 0.0
      %3335 = vmatpush1.msra.mxu0 0.0
      %3336 = vmatprep.subr.mxu0 0.0
      %3337 = vmatpush1.msra.mxu0 0.0
      %3338 = vmatprep.subr.mxu0 0.0
      %3339 = vmatpush1.msra.mxu0 0.0
      %3340 = vmatprep.subr.mxu0 0.0
      %3341 = vmatpush1.msra.mxu0 0.0
      %3342 = vmatprep.subr.mxu0 0.0
      %3343 = vmatpush1.msra.mxu0 0.0
      %3344 = vmatprep.subr.mxu0 0.0
      %3345 = vmatpush1.msra.mxu0 0.0
      %3346 = vmatprep.subr.mxu0 0.0
      %3347 = vmatpush1.msra.mxu0 0.0
      %3348 = vmatprep.subr.mxu0 0.0
      %3349 = vmatpush1.msra.mxu0 0.0
      %3350 = vmatprep.subr.mxu0 0.0
      %3351 = vmatpush1.msra.mxu0 0.0
      %3352 = vmatprep.subr.mxu0 0.0
      %3353 = vmatpush1.msra.mxu0 0.0
      %3354 = vmatprep.mubr.f32.mxu0 0.0
      %3355 = vmatmul.mubr.f32.gmra.mrb[0].mxu0 %v3288
      %v3356 = vpop.f32.mrb[0].mxu0
      %v3357 = vadd.f32 %v895, %v3356
      %v3358 = vpop.f32.mrb[0].mxu0
      %3359 = vdwg.mxu0
      %v3360 = vmax.f32 %v3357, 0.0
      %v3362 = vsel %vm502, %v3360, 0
      %3364 = vmatprep.subr.mxu0 0.0
      %3365 = vmatpush1.msra.mxu0 %v491
      %3366 = vmatprep.subr.mxu0 0.0
      %3367 = vmatpush1.msra.mxu0 %v492
      %3368 = vmatprep.subr.mxu0 0.0
      %3369 = vmatpush1.msra.mxu0 %v493
      %3370 = vmatprep.subr.mxu0 0.0
      %3371 = vmatpush1.msra.mxu0 %v494
      %3372 = vmatprep.subr.mxu0 0.0
      %3373 = vmatpush1.msra.mxu0 0.0
      %3374 = vmatprep.subr.mxu0 0.0
      %3375 = vmatpush1.msra.mxu0 0.0
      %3376 = vmatprep.subr.mxu0 0.0
      %3377 = vmatpush1.msra.mxu0 0.0
      %3378 = vmatprep.subr.mxu0 0.0
      %3379 = vmatpush1.msra.mxu0 0.0
      %3380 = vmatprep.subr.mxu0 0.0
      %3381 = vmatpush1.msra.mxu0 0.0
      %3382 = vmatprep.subr.mxu0 0.0
      %3383 = vmatpush1.msra.mxu0 0.0
      %3384 = vmatprep.subr.mxu0 0.0
      %3385 = vmatpush1.msra.mxu0 0.0
      %3386 = vmatprep.subr.mxu0 0.0
      %3387 = vmatpush1.msra.mxu0 0.0
      %3388 = vmatprep.subr.mxu0 0.0
      %3389 = vmatpush1.msra.mxu0 0.0
      %3390 = vmatprep.subr.mxu0 0.0
      %3391 = vmatpush1.msra.mxu0 0.0
      %3392 = vmatprep.subr.mxu0 0.0
      %3393 = vmatpush1.msra.mxu0 0.0
      %3394 = vmatprep.subr.mxu0 0.0
      %3395 = vmatpush1.msra.mxu0 0.0
      %3396 = vmatprep.subr.mxu0 0.0
      %3397 = vmatpush1.msra.mxu0 0.0
      %3398 = vmatprep.subr.mxu0 0.0
      %3399 = vmatpush1.msra.mxu0 0.0
      %3400 = vmatprep.subr.mxu0 0.0
      %3401 = vmatpush1.msra.mxu0 0.0
      %3402 = vmatprep.subr.mxu0 0.0
      %3403 = vmatpush1.msra.mxu0 0.0
      %3404 = vmatprep.subr.mxu0 0.0
      %3405 = vmatpush1.msra.mxu0 0.0
      %3406 = vmatprep.subr.mxu0 0.0
      %3407 = vmatpush1.msra.mxu0 0.0
      %3408 = vmatprep.subr.mxu0 0.0
      %3409 = vmatpush1.msra.mxu0 0.0
      %3410 = vmatprep.subr.mxu0 0.0
      %3411 = vmatpush1.msra.mxu0 0.0
      %3412 = vmatprep.subr.mxu0 0.0
      %3413 = vmatpush1.msra.mxu0 0.0
      %3414 = vmatprep.subr.mxu0 0.0
      %3415 = vmatpush1.msra.mxu0 0.0
      %3416 = vmatprep.subr.mxu0 0.0
      %3417 = vmatpush1.msra.mxu0 0.0
      %3418 = vmatprep.subr.mxu0 0.0
      %3419 = vmatpush1.msra.mxu0 0.0
      %3420 = vmatprep.subr.mxu0 0.0
      %3421 = vmatpush1.msra.mxu0 0.0
      %3422 = vmatprep.subr.mxu0 0.0
      %3423 = vmatpush1.msra.mxu0 0.0
      %3424 = vmatprep.subr.mxu0 0.0
      %3425 = vmatpush1.msra.mxu0 0.0
      %3426 = vmatprep.subr.mxu0 0.0
      %3427 = vmatpush1.msra.mxu0 0.0
      %3428 = vmatprep.mubr.f32.mxu0 0.0
      %3429 = vmatmul.mubr.f32.gmra.mrb[0].mxu0 %v3362
      %v3430 = vpop.f32.mrb[0].mxu0
      %v3431 = vadd.f32 %v975, %v3430
      %v3432 = vpop.f32.mrb[0].mxu0
      %3433 = vdwg.mxu0
      %v3434 = vadd.f32 %v3431, %v2898
      %v3435 = vlaneseq
      %v3436 = vshrl.u32 %v3435, 7
      %v3437 = vsub.s32 7, %v3436
      %v3438 = vrot.slane %v485, %v3437
      %v3439 = vadd.f32 %v2971, %v3438
      %v3440 = vmax.f32 %v3439, 0.0
      %v3442 = vsel %vm502, %v3440, 0
      %3444 = vmatprep.subr.mxu0 0.0
      %3445 = vmatpush1.msra.mxu0 %v486
      %3446 = vmatprep.subr.mxu0 0.0
      %3447 = vmatpush1.msra.mxu0 %v487
      %3448 = vmatprep.subr.mxu0 0.0
      %3449 = vmatpush1.msra.mxu0 %v488
      %3450 = vmatprep.subr.mxu0 0.0
      %3451 = vmatpush1.msra.mxu0 %v489
      %3452 = vmatprep.subr.mxu0 0.0
      %3453 = vmatpush1.msra.mxu0 0.0
      %3454 = vmatprep.subr.mxu0 0.0
      %3455 = vmatpush1.msra.mxu0 0.0
      %3456 = vmatprep.subr.mxu0 0.0
      %3457 = vmatpush1.msra.mxu0 0.0
      %3458 = vmatprep.subr.mxu0 0.0
      %3459 = vmatpush1.msra.mxu0 0.0
      %3460 = vmatprep.subr.mxu0 0.0
      %3461 = vmatpush1.msra.mxu0 0.0
      %3462 = vmatprep.subr.mxu0 0.0
      %3463 = vmatpush1.msra.mxu0 0.0
      %3464 = vmatprep.subr.mxu0 0.0
      %3465 = vmatpush1.msra.mxu0 0.0
      %3466 = vmatprep.subr.mxu0 0.0
      %3467 = vmatpush1.msra.mxu0 0.0
      %3468 = vmatprep.subr.mxu0 0.0
      %3469 = vmatpush1.msra.mxu0 0.0
      %3470 = vmatprep.subr.mxu0 0.0
      %3471 = vmatpush1.msra.mxu0 0.0
      %3472 = vmatprep.subr.mxu0 0.0
      %3473 = vmatpush1.msra.mxu0 0.0
      %3474 = vmatprep.subr.mxu0 0.0
      %3475 = vmatpush1.msra.mxu0 0.0
      %3476 = vmatprep.subr.mxu0 0.0
      %3477 = vmatpush1.msra.mxu0 0.0
      %3478 = vmatprep.subr.mxu0 0.0
      %3479 = vmatpush1.msra.mxu0 0.0
      %3480 = vmatprep.subr.mxu0 0.0
      %3481 = vmatpush1.msra.mxu0 0.0
      %3482 = vmatprep.subr.mxu0 0.0
      %3483 = vmatpush1.msra.mxu0 0.0
      %3484 = vmatprep.subr.mxu0 0.0
      %3485 = vmatpush1.msra.mxu0 0.0
      %3486 = vmatprep.subr.mxu0 0.0
      %3487 = vmatpush1.msra.mxu0 0.0
      %3488 = vmatprep.subr.mxu0 0.0
      %3489 = vmatpush1.msra.mxu0 0.0
      %3490 = vmatprep.subr.mxu0 0.0
      %3491 = vmatpush1.msra.mxu0 0.0
      %3492 = vmatprep.subr.mxu0 0.0
      %3493 = vmatpush1.msra.mxu0 0.0
      %3494 = vmatprep.subr.mxu0 0.0
      %3495 = vmatpush1.msra.mxu0 0.0
      %3496 = vmatprep.subr.mxu0 0.0
      %3497 = vmatpush1.msra.mxu0 0.0
      %3498 = vmatprep.subr.mxu0 0.0
      %3499 = vmatpush1.msra.mxu0 0.0
      %3500 = vmatprep.subr.mxu0 0.0
      %3501 = vmatpush1.msra.mxu0 0.0
      %3502 = vmatprep.subr.mxu0 0.0
      %3503 = vmatpush1.msra.mxu0 0.0
      %3504 = vmatprep.subr.mxu0 0.0
      %3505 = vmatpush1.msra.mxu0 0.0
      %3506 = vmatprep.subr.mxu0 0.0
      %3507 = vmatpush1.msra.mxu0 0.0
      %3508 = vmatprep.mubr.f32.mxu0 0.0
      %3509 = vmatmul.mubr.f32.gmra.mrb[0].mxu0 %v3442
      %v3510 = vpop.f32.mrb[0].mxu0
      %v3511 = vadd.f32 %v895, %v3510
      %v3512 = vpop.f32.mrb[0].mxu0
      %3513 = vdwg.mxu0
      %v3514 = vmax.f32 %v3511, 0.0
      %v3516 = vsel %vm502, %v3514, 0
      %3518 = vmatprep.subr.mxu0 0.0
      %3519 = vmatpush1.msra.mxu0 %v491
      %3520 = vmatprep.subr.mxu0 0.0
      %3521 = vmatpush1.msra.mxu0 %v492
      %3522 = vmatprep.subr.mxu0 0.0
      %3523 = vmatpush1.msra.mxu0 %v493
      %3524 = vmatprep.subr.mxu0 0.0
      %3525 = vmatpush1.msra.mxu0 %v494
      %3526 = vmatprep.subr.mxu0 0.0
      %3527 = vmatpush1.msra.mxu0 0.0
      %3528 = vmatprep.subr.mxu0 0.0
      %3529 = vmatpush1.msra.mxu0 0.0
      %3530 = vmatprep.subr.mxu0 0.0
      %3531 = vmatpush1.msra.mxu0 0.0
      %3532 = vmatprep.subr.mxu0 0.0
      %3533 = vmatpush1.msra.mxu0 0.0
      %3534 = vmatprep.subr.mxu0 0.0
      %3535 = vmatpush1.msra.mxu0 0.0
      %3536 = vmatprep.subr.mxu0 0.0
      %3537 = vmatpush1.msra.mxu0 0.0
      %3538 = vmatprep.subr.mxu0 0.0
      %3539 = vmatpush1.msra.mxu0 0.0
      %3540 = vmatprep.subr.mxu0 0.0
      %3541 = vmatpush1.msra.mxu0 0.0
      %3542 = vmatprep.subr.mxu0 0.0
      %3543 = vmatpush1.msra.mxu0 0.0
      %3544 = vmatprep.subr.mxu0 0.0
      %3545 = vmatpush1.msra.mxu0 0.0
      %3546 = vmatprep.subr.mxu0 0.0
      %3547 = vmatpush1.msra.mxu0 0.0
      %3548 = vmatprep.subr.mxu0 0.0
      %3549 = vmatpush1.msra.mxu0 0.0
      %3550 = vmatprep.subr.mxu0 0.0
      %3551 = vmatpush1.msra.mxu0 0.0
      %3552 = vmatprep.subr.mxu0 0.0
      %3553 = vmatpush1.msra.mxu0 0.0
      %3554 = vmatprep.subr.mxu0 0.0
      %3555 = vmatpush1.msra.mxu0 0.0
      %3556 = vmatprep.subr.mxu0 0.0
      %3557 = vmatpush1.msra.mxu0 0.0
      %3558 = vmatprep.subr.mxu0 0.0
      %3559 = vmatpush1.msra.mxu0 0.0
      %3560 = vmatprep.subr.mxu0 0.0
      %3561 = vmatpush1.msra.mxu0 0.0
      %3562 = vmatprep.subr.mxu0 0.0
      %3563 = vmatpush1.msra.mxu0 0.0
      %3564 = vmatprep.subr.mxu0 0.0
      %3565 = vmatpush1.msra.mxu0 0.0
      %3566 = vmatprep.subr.mxu0 0.0
      %3567 = vmatpush1.msra.mxu0 0.0
      %3568 = vmatprep.subr.mxu0 0.0
      %3569 = vmatpush1.msra.mxu0 0.0
      %3570 = vmatprep.subr.mxu0 0.0
      %3571 = vmatpush1.msra.mxu0 0.0
      %3572 = vmatprep.subr.mxu0 0.0
      %3573 = vmatpush1.msra.mxu0 0.0
      %3574 = vmatprep.subr.mxu0 0.0
      %3575 = vmatpush1.msra.mxu0 0.0
      %3576 = vmatprep.subr.mxu0 0.0
      %3577 = vmatpush1.msra.mxu0 0.0
      %3578 = vmatprep.subr.mxu0 0.0
      %3579 = vmatpush1.msra.mxu0 0.0
      %3580 = vmatprep.subr.mxu0 0.0
      %3581 = vmatpush1.msra.mxu0 0.0
      %3582 = vmatprep.mubr.f32.mxu0 0.0
      %3583 = vmatmul.mubr.f32.gmra.mrb[0].mxu0 %v3516
      %v3584 = vpop.f32.mrb[0].mxu0
      %v3585 = vadd.f32 %v975, %v3584
      %v3586 = vpop.f32.mrb[0].mxu0
      %3587 = vdwg.mxu0
      %v3588 = vadd.f32 %v3585, %v2898
      %3590 = vrot.lane.b32.xlu0 %v1050, 12
      %v3591 = vpop.permute.xlu0 %3590
      %3594 = vrot.lane.b32.xlu0 %v1204, 15
      %v3595 = vpop.permute.xlu0 %3594
      %3598 = vrot.lane.b32.xlu0 %v1358, 18
      %v3599 = vpop.permute.xlu0 %3598
      %3602 = vrot.lane.b32.xlu0 %v1512, 21
      %v3603 = vpop.permute.xlu0 %3602
      %3606 = vrot.lane.b32.xlu0 %v1742, 24
      %v3607 = vpop.permute.xlu0 %3606
      %3610 = vrot.lane.b32.xlu0 %v1896, 27
      %v3611 = vpop.permute.xlu0 %3610
      %3614 = vrot.lane.b32.xlu0 %v2050, 30
      %v3615 = vpop.permute.xlu0 %3614
      %3618 = vrot.lane.b32.xlu0 %v2204, 33
      %v3619 = vpop.permute.xlu0 %3618
      %3622 = vrot.lane.b32.xlu0 %v2434, 36
      %v3623 = vpop.permute.xlu0 %3622
      %3626 = vrot.lane.b32.xlu0 %v2588, 39
      %v3627 = vpop.permute.xlu0 %3626
      %3630 = vrot.lane.b32.xlu0 %v2742, 42
      %v3631 = vpop.permute.xlu0 %3630
      %3634 = vrot.lane.b32.xlu0 %v2896, 45
      %v3635 = vpop.permute.xlu0 %3634
      %3638 = vrot.lane.b32.xlu0 %v3126, 48
      %v3639 = vpop.permute.xlu0 %3638
      %3642 = vrot.lane.b32.xlu0 %v3280, 51
      %v3643 = vpop.permute.xlu0 %3642
      %3646 = vrot.lane.b32.xlu0 %v3434, 54
      %v3647 = vpop.permute.xlu0 %3646
      %vm3649 = vcmask 97280
      %v3650 = vsel %vm3649, %v733, %v3591
      %vm3651 = vcmask 121856
      %v3652 = vsel %vm3651, %v3650, %v3595
      %vm3653 = vcmask 146432
      %v3654 = vsel %vm3653, %v3652, %v3599
      %vm3655 = vcmask 171008
      %v3656 = vsel %vm3655, %v3654, %v3603
      %vm3657 = vcmask 195584
      %v3658 = vsel %vm3657, %v3656, %v3607
      %vm3659 = vcmask 220160
      %v3660 = vsel %vm3659, %v3658, %v3611
      %vm3661 = vcmask 244736
      %v3662 = vsel %vm3661, %v3660, %v3615
      %vm3663 = vcmask 269312
      %v3664 = vsel %vm3663, %v3662, %v3619
      %vm3665 = vcmask 293888
      %v3666 = vsel %vm3665, %v3664, %v3623
      %vm3667 = vcmask 318464
      %v3668 = vsel %vm3667, %v3666, %v3627
      %vm3669 = vcmask 343040
      %v3670 = vsel %vm3669, %v3668, %v3631
      %vm3671 = vcmask 367616
      %v3672 = vsel %vm3671, %v3670, %v3635
      %vm3673 = vcmask 392192
      %v3674 = vsel %vm3673, %v3672, %v3639
      %vm3675 = vcmask 416768
      %v3676 = vsel %vm3675, %v3674, %v3643
      %vm3677 = vcmask 441344
      %v3678 = vsel %vm3677, %v3676, %v3647
      %3680 = vrot.lane.b32.xlu0 %v3588, 57
      %v3681 = vpop.permute.xlu0 %3680
      %vm3683 = vcmask 465920
      %v3684 = vsel %vm3683, %v3678, %v3681
      %vm3685 = vcmask 490496
      %3686 = vst.msk [vmem:[%s462] sm:$0xff] %vm3685, %v3684
      %p3687 = scmp.lt.s32.totalorder %s25, 1
      %s3688 = scalar_select %p3687, %s25, 1
      %s3689 = smul.addr %s3688, 8
      %s3690 = scalar_lea.vmem %s14, %s3689
      // Predicated region
      $region77: #{folding_net_forward.1} parent=75 // pred_check
        %p3691 = pneg %p342
      $region78: #{folding_net_forward.1} parent=75 // pred_check_branch
        %3693 = sbr.rel (%p3691) target = $region80
      $region79: #{folding_net_forward.1} parent=75 // pred_region
        _
      $region80: #{folding_net_forward.1} parent=75 // pred_fallthru
        _
    $region76: #{folding_net_forward.1} parent=5 // pred_fallthru
      _
    %p3694 = scmp.le.s32.totalorder 2, %s20
    // Predicated region
    $region81: #{folding_net_forward.1} parent=5 // pred_check
      %p3695 = pneg %p3694
    $region82: #{folding_net_forward.1} parent=5 // pred_check_branch
      %3697 = sbr.rel (%p3695) target = $region84
    $region83: #{folding_net_forward.1} parent=5 // pred_region
      %s3698 = ssub.s32 %s20, 2
      // Predicated region
      $region85: #{folding_net_forward.1} parent=83 // pred_check
        %p3699 = pneg %p348
      $region86: #{folding_net_forward.1} parent=83 // pred_check_branch
        %3701 = sbr.rel (%p3699) target = $region88
      $region87: #{folding_net_forward.1} parent=83 // pred_region
        %p3702 = scmp.lt.s32.totalorder %s26, 1
        %s3703 = scalar_select %p3702, %s26, 1
        %s3704 = smul.addr %s3703, 8
        %s3705 = scalar_lea.vmem %s14, %s3704
      $region88: #{folding_net_forward.1} parent=83 // pred_fallthru
        _
    $region84: #{folding_net_forward.1} parent=5 // pred_fallthru
      _
  $region6: #{folding_net_forward.1} parent=0 // loop_footer
    %s24 = sadd.s32 1, %s20
  $region7: #{folding_net_forward.1} parent=0 // loop_footer_branch
    %19 = sbr.rel target = $region3
  $region8: #{folding_net_forward.1} parent=0 // loop_exit
    _

</llo_original>
